<compile_context>
chip_gen: v6e
topology: v6e:2x2x1
jax: 0.10.0
libtpu: 0.0.40
codegen_flags: <defaults>
</compile_context>

<pallas_src>
import math
import functools

import jax
import jax.numpy as jnp
from jax.experimental import pallas as pl
from jax.experimental.pallas import tpu as pltpu


def _layer_norm(x, gamma, beta, eps=1e-5):
    mean = jnp.mean(x, axis=-1, keepdims=True)
    var = jnp.mean((x - mean) ** 2, axis=-1, keepdims=True)
    return (x - mean) * jax.lax.rsqrt(var + eps) * gamma + beta


# ------------------------- kernel 1: fused QKV projection -------------------
def qkv_proj_kernel(x_ref, w_ref, b_ref, q_ref, k_ref, v_ref):
    # x: (tile_m, d) f32 | w: (d, 3d) bf16 | b: (1, 3d) f32 -> q/k/v (tile_m, d) bf16
    acc = jnp.dot(x_ref[...].astype(jnp.bfloat16), w_ref[...],
                  preferred_element_type=jnp.float32) + b_ref[...]
    acc = acc.astype(q_ref.dtype)
    d = q_ref.shape[-1]
    # Static lane-axis slices at multiples of d (d is a multiple of 128).
    q_ref[...] = acc[:, :d]
    k_ref[...] = acc[:, d:2 * d]
    v_ref[...] = acc[:, 2 * d:]


# ------- kernel 2: online-softmax attention + W_O + FFN + 2x LayerNorm -------
def attn_ffn_kernel(x_ref, q_ref, k_ref, v_ref,
                    wo_ref, bo_ref, w1_ref, b1_ref, w2_ref, b2_ref,
                    g1_ref, be1_ref, g2_ref, be2_ref,
                    out_ref, m_sc, l_sc, acc_sc, qh_sc,
                    *, num_heads, head_split):
    H = num_heads
    d = q_ref.shape[-1]
    dk = d // H
    kv_step = pl.program_id(2)

    def split_heads(t):
        # lane-dense (rows, d) -> head-major (H, rows, dk); pure in-VMEM layout
        # work (no per-head matmuls).  Two equivalent lowerings.
        if head_split == "reshape":
            return jnp.transpose(t.reshape(t.shape[0], H, dk), (1, 0, 2))
        return jnp.stack([t[:, h * dk:(h + 1) * dk] for h in range(H)], axis=0)

    @pl.when(kv_step == 0)
    def _():
        m_sc[...] = jnp.full(m_sc.shape, -jnp.inf, m_sc.dtype)
        l_sc[...] = jnp.zeros(l_sc.shape, l_sc.dtype)
        acc_sc[...] = jnp.zeros(acc_sc.shape, acc_sc.dtype)
        # Q head split done once per query tile (q does not change along kv).
        qh_sc[...] = split_heads(q_ref[0])

    k_h = split_heads(k_ref[0])          # (H, tkv, dk) bf16
    v_h = split_heads(v_ref[0])          # (H, tkv, dk) bf16

    # scores for this K/V tile: (H, tq, tkv).  1/sqrt(dk) is pre-folded into
    # W_Q, so no scaling of the largest intermediate here.
    s = jax.lax.dot_general(qh_sc[...], k_h, (((2,), (2,)), ((0,), (0,))),
                            preferred_element_type=jnp.float32)

    # online softmax with f32 statistics (VMEM bounded independent of n).
    # TODO(synk): on v6e/v7x the exp/probs could run in bf16 (keep f32 on v5e).
    m_prev = m_sc[...]
    m_new = jnp.maximum(m_prev, jnp.max(s, axis=-1, keepdims=True))
    alpha = jnp.exp(m_prev - m_new)
    p = jnp.exp(s - m_new)
    l_sc[...] = alpha * l_sc[...] + jnp.sum(p, axis=-1, keepdims=True)
    acc_sc[...] = alpha * acc_sc[...] + jax.lax.dot_general(
        p.astype(jnp.bfloat16), v_h, (((2,), (1,)), ((0,), (0,))),
        preferred_element_type=jnp.float32)
    m_sc[...] = m_new

    @pl.when(kv_step == pl.num_programs(2) - 1)
    def _():
        # merge heads (H, tq, dk) -> (tq, d), then ONE full-depth (K = d) W_O
        # matmul: fills the MXU and removes the per-head sum.
        o = acc_sc[...] * pl.reciprocal(l_sc[...], approx=False)
        if head_split == "reshape":
            o_m = jnp.transpose(o, (1, 0, 2)).reshape(o.shape[1], H * dk)
        else:
            o_m = jnp.concatenate([o[h] for h in range(H)], axis=-1)
        attn = jnp.dot(o_m.astype(jnp.bfloat16), wo_ref[...],
                       preferred_element_type=jnp.float32) + bo_ref[...]

        x = x_ref[0]                                            # (tq, d) f32
        x1 = _layer_norm(x + attn, g1_ref[...], be1_ref[...])

        h = jnp.dot(x1.astype(jnp.bfloat16), w1_ref[...],
                    preferred_element_type=jnp.float32) + b1_ref[...]
        h = jnp.maximum(h, 0.0)
        ffn = jnp.dot(h.astype(jnp.bfloat16), w2_ref[...],
                      preferred_element_type=jnp.float32) + b2_ref[...]

        out_ref[0] = _layer_norm(x1 + ffn, g2_ref[...],
                                 be2_ref[...]).astype(out_ref.dtype)


def _vmem_limit(bytes_needed):
    """Request what the kernel needs (plus margin), capped at 3/4 of this
    generation's physical VMEM so the compiler keeps scratch/spill headroom
    (48 MiB on v7x, 96 MiB on v5e/v6e)."""
    try:
        phys = pltpu.get_tpu_info().vmem_capacity_bytes
    except Exception:
        phys = 64 << 20
    cap = (phys * 3) // 4
    return int(max(16 << 20, min(cap, bytes_needed + (4 << 20))))


def encoder_layer(x, params, num_heads, *, tile_m=256, tile_q=128, tile_kv=128,
                  out_dtype=jnp.float32):
    """Forward pass of the PyTorch EncoderLayer using two Pallas TPU kernels."""
    B, n, d = x.shape
    d_ff = params["w1"].shape[1]
    assert d % num_heads == 0
    dk = d // num_heads
    assert d % 128 == 0, "lane-dense layout assumes d_model is a multiple of 128"
    rows = B * n

    tile_m = min(tile_m, rows)
    tile_q = min(tile_q, n)
    tile_kv = min(tile_kv, n)
    assert rows % tile_m == 0 and tile_m % 8 == 0
    assert n % tile_q == 0 and tile_q % 8 == 0
    assert n % tile_kv == 0 and tile_kv % 8 == 0

    bf16 = jnp.bfloat16
    scale = 1.0 / math.sqrt(dk)
    # Fused QKV weight, stored (in, out).  The softmax scale is folded into
    # W_Q / b_Q here (free) instead of scaling the (H, tq, tkv) score tensor.
    w_qkv = jnp.concatenate([params["wq"] * scale, params["wk"], params["wv"]],
                            axis=1).astype(bf16)                       # (d, 3d)
    b_qkv = jnp.concatenate([params["bq"] * scale, params["bk"], params["bv"]],
                            axis=1)                                    # (1, 3d)
    x_flat = x.reshape(rows, d)       # contiguous reshape: no HBM pass
    wo = params["wo"].astype(bf16)
    w1 = params["w1"].astype(bf16)
    w2 = params["w2"].astype(bf16)

    def run(single_buffer, head_split):
        def spec(shape, imap, resident=False):
            # Constant-index blocks stay VMEM-resident; single-buffer them so
            # resident weights are not duplicated by default double-buffering.
            if resident and single_buffer:
                return pl.BlockSpec(shape, imap, pipeline_mode=pl.Buffered(1))
            return pl.BlockSpec(shape, imap)

        # ------------------ kernel 1: fused QKV projection ------------------
        qkv_vmem = (2 * tile_m * d * 4 + d * 3 * d * 2 + 3 * d * 4
                    + 2 * 3 * tile_m * d * 2 + tile_m * 3 * d * 4)
        q, k, v = pl.pallas_call(
            qkv_proj_kernel,
            out_shape=[jax.ShapeDtypeStruct((rows, d), bf16)] * 3,
            grid_spec=pltpu.PrefetchScalarGridSpec(
                num_scalar_prefetch=0,
                grid=(rows // tile_m,),
                in_specs=[
                    spec((tile_m, d), lambda i: (i, 0)),
                    spec((d, 3 * d), lambda i: (0, 0), resident=True),
                    spec((1, 3 * d), lambda i: (0, 0), resident=True),
                ],
                out_specs=[spec((tile_m, d), lambda i: (i, 0))] * 3,
            ),
            compiler_params=pltpu.CompilerParams(
                dimension_semantics=("parallel",),
                vmem_limit_bytes=_vmem_limit(qkv_vmem),
            ),
        )(x_flat, w_qkv, b_qkv)

        # Contiguous reshapes only -- no wrapper-side transposes / HBM passes.
        q = q.reshape(B, n, d)
        k = k.reshape(B, n, d)
        v = v.reshape(B, n, d)

        # ---- kernel 2: online-softmax attention + W_O + LN1 + FFN + LN2 ----
        attn_vmem = (
            2 * tile_q * d * (4 + 2 + 4)                 # x, q, out tiles (x2 buf)
            + 2 * 2 * tile_kv * d * 2                    # streaming K/V tiles
            + (d * d + 2 * d * d_ff) * 2 * 2             # wo, w1, w2
            + (4 * d + d_ff) * 4 * 2                     # biases / LN params
            + 2 * num_heads * tile_q * tile_kv * 4       # scores + probs
            + num_heads * tile_q * (dk + 2) * 4          # m/l/acc scratch
            + num_heads * tile_q * dk * 2                # q head-split scratch
            + 2 * num_heads * tile_kv * dk * 2           # k/v head-split copies
            + tile_q * d_ff * 4                          # ffn hidden
            + 4 * tile_q * d * 4)                        # misc f32 temporaries

        kernel = functools.partial(attn_ffn_kernel, num_heads=num_heads,
                                   head_split=head_split)
        # TODO(synk): for large d/d_ff, add a K-tiled FFN (extra "arbitrary"
        # grid axis over d_ff) instead of keeping W1/W2 fully resident.
        out = pl.pallas_call(
            kernel,
            out_shape=jax.ShapeDtypeStruct((B, n, d), out_dtype),
            grid_spec=pltpu.PrefetchScalarGridSpec(
                num_scalar_prefetch=0,
                grid=(B, n // tile_q, n // tile_kv),
                in_specs=[
                    spec((1, tile_q, d), lambda b, i, s: (b, i, 0)),        # x
                    spec((1, tile_q, d), lambda b, i, s: (b, i, 0)),        # q
                    spec((1, tile_kv, d), lambda b, i, s: (b, s, 0)),       # k
                    spec((1, tile_kv, d), lambda b, i, s: (b, s, 0)),       # v
                    spec((d, d), lambda b, i, s: (0, 0), resident=True),    # wo
                    spec((1, d), lambda b, i, s: (0, 0), resident=True),    # bo
                    spec((d, d_ff), lambda b, i, s: (0, 0), resident=True), # w1
                    spec((1, d_ff), lambda b, i, s: (0, 0), resident=True), # b1
                    spec((d_ff, d), lambda b, i, s: (0, 0), resident=True), # w2
                    spec((1, d), lambda b, i, s: (0, 0), resident=True),    # b2
                    spec((1, d), lambda b, i, s: (0, 0), resident=True),    # g1
                    spec((1, d), lambda b, i, s: (0, 0), resident=True),    # be1
                    spec((1, d), lambda b, i, s: (0, 0), resident=True),    # g2
                    spec((1, d), lambda b, i, s: (0, 0), resident=True),    # be2
                ],
                out_specs=pl.BlockSpec((1, tile_q, d), lambda b, i, s: (b, i, 0)),
                scratch_shapes=[
                    pltpu.VMEM((num_heads, tile_q, 1), jnp.float32),    # m
                    pltpu.VMEM((num_heads, tile_q, 1), jnp.float32),    # l
                    pltpu.VMEM((num_heads, tile_q, dk), jnp.float32),   # acc
                    pltpu.VMEM((num_heads, tile_q, dk), bf16),          # q heads
                ],
            ),
            compiler_params=pltpu.CompilerParams(
                dimension_semantics=("parallel", "parallel", "arbitrary"),
                vmem_limit_bytes=_vmem_limit(attn_vmem),
            ),
        )(x, q, k, v, wo, params["bo"], w1, params["b1"], w2, params["b2"],
          params["g1"], params["be1"], params["g2"], params["be2"])
        return out

    # pl.Buffered(1) (single-buffered resident weights) and the in-kernel
    # reshape/transpose head split are the features most sensitive to the
    # installed Pallas/Mosaic version.  Fall back through mathematically
    # identical configurations so the kernel always compiles and runs.
    attempts = ((True, "reshape"), (False, "reshape"),
                (True, "slice"), (False, "slice"))
    err = None
    for single_buffer, head_split in attempts:
        try:
            return run(single_buffer, head_split)
        except Exception as e:  # retry with a safer configuration
            err = e
    raise err


# ----------------------------- pure-JAX reference ----------------------------
def reference_encoder_layer(x, params, num_heads):
    B, n, d = x.shape
    dk = d // num_heads

    def ln(v, g, b, eps=1e-5):
        m = v.mean(-1, keepdims=True)
        var = ((v - m) ** 2).mean(-1, keepdims=True)
        return (v - m) / jnp.sqrt(var + eps) * g + b

    q = x @ params["wq"] + params["bq"]
    k = x @ params["wk"] + params["bk"]
    v = x @ params["wv"] + params["bv"]
    q = q.reshape(B, n, num_heads, dk).transpose(0, 2, 1, 3)
    k = k.reshape(B, n, num_heads, dk).transpose(0, 2, 1, 3)
    v = v.reshape(B, n, num_heads, dk).transpose(0, 2, 1, 3)
    s = jnp.einsum("bhqd,bhkd->bhqk", q, k) / math.sqrt(dk)
    p = jax.nn.softmax(s, axis=-1)
    o = jnp.einsum("bhqk,bhkd->bhqd", p, v).transpose(0, 2, 1, 3).reshape(B, n, d)
    attn = o @ params["wo"] + params["bo"]
    x1 = ln(x + attn, params["g1"], params["be1"])
    h = jax.nn.relu(x1 @ params["w1"] + params["b1"])
    ffn = h @ params["w2"] + params["b2"]
    return ln(x1 + ffn, params["g2"], params["be2"])


def init_params(key, d_model, d_ff):
    keys = jax.random.split(key, 12)
    s = 0.02
    return {
        "wq": jax.random.normal(keys[0], (d_model, d_model), jnp.float32) * s,
        "bq": jax.random.normal(keys[1], (1, d_model), jnp.float32) * s,
        "wk": jax.random.normal(keys[2], (d_model, d_model), jnp.float32) * s,
        "bk": jax.random.normal(keys[3], (1, d_model), jnp.float32) * s,
        "wv": jax.random.normal(keys[4], (d_model, d_model), jnp.float32) * s,
        "bv": jax.random.normal(keys[5], (1, d_model), jnp.float32) * s,
        "wo": jax.random.normal(keys[6], (d_model, d_model), jnp.float32) * s,
        "bo": jax.random.normal(keys[7], (1, d_model), jnp.float32) * s,
        "w1": jax.random.normal(keys[8], (d_model, d_ff), jnp.float32) * s,
        "b1": jax.random.normal(keys[9], (1, d_ff), jnp.float32) * s,
        "w2": jax.random.normal(keys[10], (d_ff, d_model), jnp.float32) * s,
        "b2": jax.random.normal(keys[11], (1, d_model), jnp.float32) * s,
        "g1": jnp.ones((1, d_model), jnp.float32),
        "be1": jnp.zeros((1, d_model), jnp.float32),
        "g2": jnp.ones((1, d_model), jnp.float32),
        "be2": jnp.zeros((1, d_model), jnp.float32),
    }


if __name__ == "__main__":
    # Small but lane-friendly shapes (d_model multiple of 128, n multiple of 8).
    # Chosen so kernel 1 runs a 4-step grid and kernel 2 a (2, 2, 2) = 8-step
    # grid, deep enough for the BlockSpec pipeline to warm up.
    B, n, d_model, num_heads, d_ff = 2, 256, 128, 4, 512

    key = jax.random.PRNGKey(0)
    kx, kp = jax.random.split(key)
    x = jax.random.normal(kx, (B, n, d_model), jnp.float32)
    params = init_params(kp, d_model, d_ff)

    out = encoder_layer(x, params, num_heads, tile_m=128, tile_q=128, tile_kv=128)
    out = jax.block_until_ready(out)

    ref = reference_encoder_layer(x, params, num_heads)
    assert out.shape == (B, n, d_model)
    # bf16 MXU operands (f32 accumulation) vs. an all-f32 reference ->
    # documented ~1e-2-level tolerance contract.
    assert jnp.allclose(out, ref, rtol=2e-2, atol=2e-2), "mismatch vs reference"

    print("KERNEL_OK")
</pallas_src>

<mosaic_0001>
module attributes {stable_mosaic.version = 11 : i64} {
  func.func @qkv_proj_kernel(%arg0: i32, %arg1: memref<128x128xf32, #tpu.memory_space<vmem>>, %arg2: memref<128x384xbf16, #tpu.memory_space<vmem>>, %arg3: memref<1x384xf32, #tpu.memory_space<vmem>>, %arg4: memref<128x128xbf16, #tpu.memory_space<vmem>>, %arg5: memref<128x128xbf16, #tpu.memory_space<vmem>>, %arg6: memref<128x128xbf16, #tpu.memory_space<vmem>>) attributes {dimension_semantics = [#tpu.dimension_semantics<parallel>], iteration_bounds = array<i64: 4>, scalar_prefetch = 0 : i64, scratch_operands = 0 : i64, tpu.core_type = #tpu.core_type<tc>, window_params = [{transform_indices = @transform_0, window_bounds = array<i64: 128, 128>}, {pipeline_mode = #tpu.pipeline_mode<synchronous>, transform_indices = @transform_1, window_bounds = array<i64: 128, 384>}, {pipeline_mode = #tpu.pipeline_mode<synchronous>, transform_indices = @transform_2, window_bounds = array<i64: 1, 384>}, {transform_indices = @transform_3, window_bounds = array<i64: 128, 128>}, {transform_indices = @transform_4, window_bounds = array<i64: 128, 128>}, {transform_indices = @transform_5, window_bounds = array<i64: 128, 128>}]} {
    %c0 = arith.constant 0 : index
    %c0_0 = arith.constant 0 : index
    %0 = vector.load %arg1[%c0, %c0_0] : memref<128x128xf32, #tpu.memory_space<vmem>>, vector<128x128xf32>
    %1 = arith.truncf %0 : vector<128x128xf32> to vector<128x128xbf16>
    %c0_1 = arith.constant 0 : index
    %c0_2 = arith.constant 0 : index
    %2 = vector.load %arg2[%c0_1, %c0_2] : memref<128x384xbf16, #tpu.memory_space<vmem>>, vector<128x384xbf16>
    %cst = arith.constant dense<0.000000e+00> : vector<128x384xf32>
    %3 = tpu.matmul %1, %2, %cst {dimension_numbers = #tpu.dot_dimension_numbers<[1], [0], [0], [1], [0, 0, 1, 1], [], []>} : vector<128x128xbf16>, vector<128x384xbf16>, vector<128x384xf32> -> vector<128x384xf32>
    %c0_3 = arith.constant 0 : index
    %c0_4 = arith.constant 0 : index
    %4 = vector.load %arg3[%c0_3, %c0_4] : memref<1x384xf32, #tpu.memory_space<vmem>>, vector<1x384xf32>
    %5 = vector.broadcast %4 : vector<1x384xf32> to vector<128x384xf32>
    %6 = arith.addf %3, %5 : vector<128x384xf32>
    %7 = arith.truncf %6 : vector<128x384xf32> to vector<128x384xbf16>
    %8 = vector.extract_strided_slice %7 {offsets = [0, 0], sizes = [128, 128], strides = [1, 1]} : vector<128x384xbf16> to vector<128x128xbf16>
    %c0_5 = arith.constant 0 : index
    %c0_6 = arith.constant 0 : index
    %9 = vector.load %arg4[%c0_5, %c0_6] : memref<128x128xbf16, #tpu.memory_space<vmem>>, vector<128x128xbf16>
    tpu.vector_store %arg4[%c0_5, %c0_6], %8 {strides = array<i32>} : memref<128x128xbf16, #tpu.memory_space<vmem>>, vector<128x128xbf16>,
    %10 = vector.extract_strided_slice %7 {offsets = [0, 128], sizes = [128, 128], strides = [1, 1]} : vector<128x384xbf16> to vector<128x128xbf16>
    %c0_7 = arith.constant 0 : index
    %c0_8 = arith.constant 0 : index
    %11 = vector.load %arg5[%c0_7, %c0_8] : memref<128x128xbf16, #tpu.memory_space<vmem>>, vector<128x128xbf16>
    tpu.vector_store %arg5[%c0_7, %c0_8], %10 {strides = array<i32>} : memref<128x128xbf16, #tpu.memory_space<vmem>>, vector<128x128xbf16>,
    %12 = vector.extract_strided_slice %7 {offsets = [0, 256], sizes = [128, 128], strides = [1, 1]} : vector<128x384xbf16> to vector<128x128xbf16>
    %c0_9 = arith.constant 0 : index
    %c0_10 = arith.constant 0 : index
    %13 = vector.load %arg6[%c0_9, %c0_10] : memref<128x128xbf16, #tpu.memory_space<vmem>>, vector<128x128xbf16>
    tpu.vector_store %arg6[%c0_9, %c0_10], %12 {strides = array<i32>} : memref<128x128xbf16, #tpu.memory_space<vmem>>, vector<128x128xbf16>,
    return
  }
  func.func @transform_0(%arg0: i32) -> (i32, i32) {
    %c0_i32 = arith.constant 0 : i32
    %c0_i32_0 = arith.constant 0 : i32
    return %arg0, %c0_i32 : i32, i32
  }
  func.func @transform_1(%arg0: i32) -> (i32, i32) {
    %c0_i32 = arith.constant 0 : i32
    %c0_i32_0 = arith.constant 0 : i32
    %c0_i32_1 = arith.constant 0 : i32
    return %c0_i32, %c0_i32_0 : i32, i32
  }
  func.func @transform_2(%arg0: i32) -> (i32, i32) {
    %c0_i32 = arith.constant 0 : i32
    %c0_i32_0 = arith.constant 0 : i32
    %c0_i32_1 = arith.constant 0 : i32
    return %c0_i32, %c0_i32_0 : i32, i32
  }
  func.func @transform_3(%arg0: i32) -> (i32, i32) {
    %c0_i32 = arith.constant 0 : i32
    %c0_i32_0 = arith.constant 0 : i32
    return %arg0, %c0_i32 : i32, i32
  }
  func.func @transform_4(%arg0: i32) -> (i32, i32) {
    %c0_i32 = arith.constant 0 : i32
    %c0_i32_0 = arith.constant 0 : i32
    return %arg0, %c0_i32 : i32, i32
  }
  func.func @transform_5(%arg0: i32) -> (i32, i32) {
    %c0_i32 = arith.constant 0 : i32
    %c0_i32_0 = arith.constant 0 : i32
    return %arg0, %c0_i32 : i32, i32
  }
}

module attributes {stable_mosaic.version = 11 : i64} {
  func.func @qkv_proj_kernel(%arg0: i32, %arg1: memref<128x128xf32, #tpu.memory_space<vmem>>, %arg2: memref<128x384xbf16, #tpu.memory_space<vmem>>, %arg3: memref<1x384xf32, #tpu.memory_space<vmem>>, %arg4: memref<128x128xbf16, #tpu.memory_space<vmem>>, %arg5: memref<128x128xbf16, #tpu.memory_space<vmem>>, %arg6: memref<128x128xbf16, #tpu.memory_space<vmem>>) attributes {dimension_semantics = [#tpu.dimension_semantics<parallel>], iteration_bounds = array<i64: 4>, scalar_prefetch = 0 : i64, scratch_operands = 0 : i64, tpu.core_type = #tpu.core_type<tc>, window_params = [{transform_indices = @transform_0, window_bounds = array<i64: 128, 128>}, {pipeline_mode = #tpu.pipeline_mode<synchronous>, transform_indices = @transform_1, window_bounds = array<i64: 128, 384>}, {pipeline_mode = #tpu.pipeline_mode<synchronous>, transform_indices = @transform_2, window_bounds = array<i64: 1, 384>}, {transform_indices = @transform_3, window_bounds = array<i64: 128, 128>}, {transform_indices = @transform_4, window_bounds = array<i64: 128, 128>}, {transform_indices = @transform_5, window_bounds = array<i64: 128, 128>}]} {
    %c0 = arith.constant 0 : index
    %c0_0 = arith.constant 0 : index
    %0 = vector.load %arg1[%c0, %c0_0] : memref<128x128xf32, #tpu.memory_space<vmem>>, vector<128x128xf32>
    %1 = arith.truncf %0 : vector<128x128xf32> to vector<128x128xbf16>
    %c0_1 = arith.constant 0 : index
    %c0_2 = arith.constant 0 : index
    %2 = vector.load %arg2[%c0_1, %c0_2] : memref<128x384xbf16, #tpu.memory_space<vmem>>, vector<128x384xbf16>
    %cst = arith.constant dense<0.000000e+00> : vector<128x384xf32>
    %3 = tpu.matmul %1, %2, %cst {dimension_numbers = #tpu.dot_dimension_numbers<[1], [0], [0], [1], [0, 0, 1, 1], [], []>} : vector<128x128xbf16>, vector<128x384xbf16>, vector<128x384xf32> -> vector<128x384xf32>
    %c0_3 = arith.constant 0 : index
    %c0_4 = arith.constant 0 : index
    %4 = vector.load %arg3[%c0_3, %c0_4] : memref<1x384xf32, #tpu.memory_space<vmem>>, vector<1x384xf32>
    %5 = vector.broadcast %4 : vector<1x384xf32> to vector<128x384xf32>
    %6 = arith.addf %3, %5 : vector<128x384xf32>
    %7 = arith.truncf %6 : vector<128x384xf32> to vector<128x384xbf16>
    %8 = vector.extract_strided_slice %7 {offsets = [0, 0], sizes = [128, 128], strides = [1, 1]} : vector<128x384xbf16> to vector<128x128xbf16>
    %c0_5 = arith.constant 0 : index
    %c0_6 = arith.constant 0 : index
    %9 = vector.load %arg4[%c0_5, %c0_6] : memref<128x128xbf16, #tpu.memory_space<vmem>>, vector<128x128xbf16>
    tpu.vector_store %arg4[%c0_5, %c0_6], %8 {strides = array<i32>} : memref<128x128xbf16, #tpu.memory_space<vmem>>, vector<128x128xbf16>,
    %10 = vector.extract_strided_slice %7 {offsets = [0, 128], sizes = [128, 128], strides = [1, 1]} : vector<128x384xbf16> to vector<128x128xbf16>
    %c0_7 = arith.constant 0 : index
    %c0_8 = arith.constant 0 : index
    %11 = vector.load %arg5[%c0_7, %c0_8] : memref<128x128xbf16, #tpu.memory_space<vmem>>, vector<128x128xbf16>
    tpu.vector_store %arg5[%c0_7, %c0_8], %10 {strides = array<i32>} : memref<128x128xbf16, #tpu.memory_space<vmem>>, vector<128x128xbf16>,
    %12 = vector.extract_strided_slice %7 {offsets = [0, 256], sizes = [128, 128], strides = [1, 1]} : vector<128x384xbf16> to vector<128x128xbf16>
    %c0_9 = arith.constant 0 : index
    %c0_10 = arith.constant 0 : index
    %13 = vector.load %arg6[%c0_9, %c0_10] : memref<128x128xbf16, #tpu.memory_space<vmem>>, vector<128x128xbf16>
    tpu.vector_store %arg6[%c0_9, %c0_10], %12 {strides = array<i32>} : memref<128x128xbf16, #tpu.memory_space<vmem>>, vector<128x128xbf16>,
    return
  }
  func.func @transform_0(%arg0: i32) -> (i32, i32) {
    %c0_i32 = arith.constant 0 : i32
    %c0_i32_0 = arith.constant 0 : i32
    return %arg0, %c0_i32 : i32, i32
  }
  func.func @transform_1(%arg0: i32) -> (i32, i32) {
    %c0_i32 = arith.constant 0 : i32
    %c0_i32_0 = arith.constant 0 : i32
    %c0_i32_1 = arith.constant 0 : i32
    return %c0_i32, %c0_i32_0 : i32, i32
  }
  func.func @transform_2(%arg0: i32) -> (i32, i32) {
    %c0_i32 = arith.constant 0 : i32
    %c0_i32_0 = arith.constant 0 : i32
    %c0_i32_1 = arith.constant 0 : i32
    return %c0_i32, %c0_i32_0 : i32, i32
  }
  func.func @transform_3(%arg0: i32) -> (i32, i32) {
    %c0_i32 = arith.constant 0 : i32
    %c0_i32_0 = arith.constant 0 : i32
    return %arg0, %c0_i32 : i32, i32
  }
  func.func @transform_4(%arg0: i32) -> (i32, i32) {
    %c0_i32 = arith.constant 0 : i32
    %c0_i32_0 = arith.constant 0 : i32
    return %arg0, %c0_i32 : i32, i32
  }
  func.func @transform_5(%arg0: i32) -> (i32, i32) {
    %c0_i32 = arith.constant 0 : i32
    %c0_i32_0 = arith.constant 0 : i32
    return %arg0, %c0_i32 : i32, i32
  }
}

module attributes {stable_mosaic.version = 11 : i64} {
  func.func @qkv_proj_kernel(%arg0: i32, %arg1: memref<128x128xf32, #tpu.memory_space<vmem>>, %arg2: memref<128x384xbf16, #tpu.memory_space<vmem>>, %arg3: memref<1x384xf32, #tpu.memory_space<vmem>>, %arg4: memref<128x128xbf16, #tpu.memory_space<vmem>>, %arg5: memref<128x128xbf16, #tpu.memory_space<vmem>>, %arg6: memref<128x128xbf16, #tpu.memory_space<vmem>>) attributes {dimension_semantics = [#tpu.dimension_semantics<parallel>], iteration_bounds = array<i64: 4>, scalar_prefetch = 0 : i64, scratch_operands = 0 : i64, tpu.core_type = #tpu.core_type<tc>, window_params = [{transform_indices = @transform_0, window_bounds = array<i64: 128, 128>}, {pipeline_mode = #tpu.pipeline_mode<synchronous>, transform_indices = @transform_1, window_bounds = array<i64: 128, 384>}, {pipeline_mode = #tpu.pipeline_mode<synchronous>, transform_indices = @transform_2, window_bounds = array<i64: 1, 384>}, {transform_indices = @transform_3, window_bounds = array<i64: 128, 128>}, {transform_indices = @transform_4, window_bounds = array<i64: 128, 128>}, {transform_indices = @transform_5, window_bounds = array<i64: 128, 128>}]} {
    %c0 = arith.constant 0 : index
    %c0_0 = arith.constant 0 : index
    %0 = vector.load %arg1[%c0, %c0_0] : memref<128x128xf32, #tpu.memory_space<vmem>>, vector<128x128xf32>
    %1 = arith.truncf %0 : vector<128x128xf32> to vector<128x128xbf16>
    %c0_1 = arith.constant 0 : index
    %c0_2 = arith.constant 0 : index
    %2 = vector.load %arg2[%c0_1, %c0_2] : memref<128x384xbf16, #tpu.memory_space<vmem>>, vector<128x384xbf16>
    %cst = arith.constant dense<0.000000e+00> : vector<128x384xf32>
    %3 = tpu.matmul %1, %2, %cst {dimension_numbers = #tpu.dot_dimension_numbers<[1], [0], [0], [1], [0, 0, 1, 1], [], []>} : vector<128x128xbf16>, vector<128x384xbf16>, vector<128x384xf32> -> vector<128x384xf32>
    %c0_3 = arith.constant 0 : index
    %c0_4 = arith.constant 0 : index
    %4 = vector.load %arg3[%c0_3, %c0_4] : memref<1x384xf32, #tpu.memory_space<vmem>>, vector<1x384xf32>
    %5 = vector.broadcast %4 : vector<1x384xf32> to vector<128x384xf32>
    %6 = arith.addf %3, %5 : vector<128x384xf32>
    %7 = arith.truncf %6 : vector<128x384xf32> to vector<128x384xbf16>
    %8 = vector.extract_strided_slice %7 {offsets = [0, 0], sizes = [128, 128], strides = [1, 1]} : vector<128x384xbf16> to vector<128x128xbf16>
    %c0_5 = arith.constant 0 : index
    %c0_6 = arith.constant 0 : index
    %9 = vector.load %arg4[%c0_5, %c0_6] : memref<128x128xbf16, #tpu.memory_space<vmem>>, vector<128x128xbf16>
    tpu.vector_store %arg4[%c0_5, %c0_6], %8 {strides = array<i32>} : memref<128x128xbf16, #tpu.memory_space<vmem>>, vector<128x128xbf16>,
    %10 = vector.extract_strided_slice %7 {offsets = [0, 128], sizes = [128, 128], strides = [1, 1]} : vector<128x384xbf16> to vector<128x128xbf16>
    %c0_7 = arith.constant 0 : index
    %c0_8 = arith.constant 0 : index
    %11 = vector.load %arg5[%c0_7, %c0_8] : memref<128x128xbf16, #tpu.memory_space<vmem>>, vector<128x128xbf16>
    tpu.vector_store %arg5[%c0_7, %c0_8], %10 {strides = array<i32>} : memref<128x128xbf16, #tpu.memory_space<vmem>>, vector<128x128xbf16>,
    %12 = vector.extract_strided_slice %7 {offsets = [0, 256], sizes = [128, 128], strides = [1, 1]} : vector<128x384xbf16> to vector<128x128xbf16>
    %c0_9 = arith.constant 0 : index
    %c0_10 = arith.constant 0 : index
    %13 = vector.load %arg6[%c0_9, %c0_10] : memref<128x128xbf16, #tpu.memory_space<vmem>>, vector<128x128xbf16>
    tpu.vector_store %arg6[%c0_9, %c0_10], %12 {strides = array<i32>} : memref<128x128xbf16, #tpu.memory_space<vmem>>, vector<128x128xbf16>,
    return
  }
  func.func @transform_0(%arg0: i32) -> (i32, i32) {
    %c0_i32 = arith.constant 0 : i32
    %c0_i32_0 = arith.constant 0 : i32
    return %arg0, %c0_i32 : i32, i32
  }
  func.func @transform_1(%arg0: i32) -> (i32, i32) {
    %c0_i32 = arith.constant 0 : i32
    %c0_i32_0 = arith.constant 0 : i32
    %c0_i32_1 = arith.constant 0 : i32
    return %c0_i32, %c0_i32_0 : i32, i32
  }
  func.func @transform_2(%arg0: i32) -> (i32, i32) {
    %c0_i32 = arith.constant 0 : i32
    %c0_i32_0 = arith.constant 0 : i32
    %c0_i32_1 = arith.constant 0 : i32
    return %c0_i32, %c0_i32_0 : i32, i32
  }
  func.func @transform_3(%arg0: i32) -> (i32, i32) {
    %c0_i32 = arith.constant 0 : i32
    %c0_i32_0 = arith.constant 0 : i32
    return %arg0, %c0_i32 : i32, i32
  }
  func.func @transform_4(%arg0: i32) -> (i32, i32) {
    %c0_i32 = arith.constant 0 : i32
    %c0_i32_0 = arith.constant 0 : i32
    return %arg0, %c0_i32 : i32, i32
  }
  func.func @transform_5(%arg0: i32) -> (i32, i32) {
    %c0_i32 = arith.constant 0 : i32
    %c0_i32_0 = arith.constant 0 : i32
    return %arg0, %c0_i32 : i32, i32
  }
}

module attributes {stable_mosaic.version = 11 : i64} {
  func.func @qkv_proj_kernel(%arg0: i32, %arg1: memref<128x128xf32, #tpu.memory_space<vmem>>, %arg2: memref<128x384xbf16, #tpu.memory_space<vmem>>, %arg3: memref<1x384xf32, #tpu.memory_space<vmem>>, %arg4: memref<128x128xbf16, #tpu.memory_space<vmem>>, %arg5: memref<128x128xbf16, #tpu.memory_space<vmem>>, %arg6: memref<128x128xbf16, #tpu.memory_space<vmem>>) attributes {dimension_semantics = [#tpu.dimension_semantics<parallel>], iteration_bounds = array<i64: 4>, scalar_prefetch = 0 : i64, scratch_operands = 0 : i64, tpu.core_type = #tpu.core_type<tc>, window_params = [{transform_indices = @transform_0, window_bounds = array<i64: 128, 128>}, {pipeline_mode = #tpu.pipeline_mode<synchronous>, transform_indices = @transform_1, window_bounds = array<i64: 128, 384>}, {pipeline_mode = #tpu.pipeline_mode<synchronous>, transform_indices = @transform_2, window_bounds = array<i64: 1, 384>}, {transform_indices = @transform_3, window_bounds = array<i64: 128, 128>}, {transform_indices = @transform_4, window_bounds = array<i64: 128, 128>}, {transform_indices = @transform_5, window_bounds = array<i64: 128, 128>}]} {
    %c0 = arith.constant 0 : index
    %c0_0 = arith.constant 0 : index
    %0 = vector.load %arg1[%c0, %c0_0] : memref<128x128xf32, #tpu.memory_space<vmem>>, vector<128x128xf32>
    %1 = arith.truncf %0 : vector<128x128xf32> to vector<128x128xbf16>
    %c0_1 = arith.constant 0 : index
    %c0_2 = arith.constant 0 : index
    %2 = vector.load %arg2[%c0_1, %c0_2] : memref<128x384xbf16, #tpu.memory_space<vmem>>, vector<128x384xbf16>
    %cst = arith.constant dense<0.000000e+00> : vector<128x384xf32>
    %3 = tpu.matmul %1, %2, %cst {dimension_numbers = #tpu.dot_dimension_numbers<[1], [0], [0], [1], [0, 0, 1, 1], [], []>} : vector<128x128xbf16>, vector<128x384xbf16>, vector<128x384xf32> -> vector<128x384xf32>
    %c0_3 = arith.constant 0 : index
    %c0_4 = arith.constant 0 : index
    %4 = vector.load %arg3[%c0_3, %c0_4] : memref<1x384xf32, #tpu.memory_space<vmem>>, vector<1x384xf32>
    %5 = vector.broadcast %4 : vector<1x384xf32> to vector<128x384xf32>
    %6 = arith.addf %3, %5 : vector<128x384xf32>
    %7 = arith.truncf %6 : vector<128x384xf32> to vector<128x384xbf16>
    %8 = vector.extract_strided_slice %7 {offsets = [0, 0], sizes = [128, 128], strides = [1, 1]} : vector<128x384xbf16> to vector<128x128xbf16>
    %c0_5 = arith.constant 0 : index
    %c0_6 = arith.constant 0 : index
    %9 = vector.load %arg4[%c0_5, %c0_6] : memref<128x128xbf16, #tpu.memory_space<vmem>>, vector<128x128xbf16>
    tpu.vector_store %arg4[%c0_5, %c0_6], %8 {strides = array<i32>} : memref<128x128xbf16, #tpu.memory_space<vmem>>, vector<128x128xbf16>,
    %10 = vector.extract_strided_slice %7 {offsets = [0, 128], sizes = [128, 128], strides = [1, 1]} : vector<128x384xbf16> to vector<128x128xbf16>
    %c0_7 = arith.constant 0 : index
    %c0_8 = arith.constant 0 : index
    %11 = vector.load %arg5[%c0_7, %c0_8] : memref<128x128xbf16, #tpu.memory_space<vmem>>, vector<128x128xbf16>
    tpu.vector_store %arg5[%c0_7, %c0_8], %10 {strides = array<i32>} : memref<128x128xbf16, #tpu.memory_space<vmem>>, vector<128x128xbf16>,
    %12 = vector.extract_strided_slice %7 {offsets = [0, 256], sizes = [128, 128], strides = [1, 1]} : vector<128x384xbf16> to vector<128x128xbf16>
    %c0_9 = arith.constant 0 : index
    %c0_10 = arith.constant 0 : index
    %13 = vector.load %arg6[%c0_9, %c0_10] : memref<128x128xbf16, #tpu.memory_space<vmem>>, vector<128x128xbf16>
    tpu.vector_store %arg6[%c0_9, %c0_10], %12 {strides = array<i32>} : memref<128x128xbf16, #tpu.memory_space<vmem>>, vector<128x128xbf16>,
    return
  }
  func.func @transform_0(%arg0: i32) -> (i32, i32) {
    %c0_i32 = arith.constant 0 : i32
    %c0_i32_0 = arith.constant 0 : i32
    return %arg0, %c0_i32 : i32, i32
  }
  func.func @transform_1(%arg0: i32) -> (i32, i32) {
    %c0_i32 = arith.constant 0 : i32
    %c0_i32_0 = arith.constant 0 : i32
    %c0_i32_1 = arith.constant 0 : i32
    return %c0_i32, %c0_i32_0 : i32, i32
  }
  func.func @transform_2(%arg0: i32) -> (i32, i32) {
    %c0_i32 = arith.constant 0 : i32
    %c0_i32_0 = arith.constant 0 : i32
    %c0_i32_1 = arith.constant 0 : i32
    return %c0_i32, %c0_i32_0 : i32, i32
  }
  func.func @transform_3(%arg0: i32) -> (i32, i32) {
    %c0_i32 = arith.constant 0 : i32
    %c0_i32_0 = arith.constant 0 : i32
    return %arg0, %c0_i32 : i32, i32
  }
  func.func @transform_4(%arg0: i32) -> (i32, i32) {
    %c0_i32 = arith.constant 0 : i32
    %c0_i32_0 = arith.constant 0 : i32
    return %arg0, %c0_i32 : i32, i32
  }
  func.func @transform_5(%arg0: i32) -> (i32, i32) {
    %c0_i32 = arith.constant 0 : i32
    %c0_i32_0 = arith.constant 0 : i32
    return %arg0, %c0_i32 : i32, i32
  }
}

</mosaic_0001>

<llo_original>
// kernel: tpu_custom_call.1
$region0: #{tpu_custom_call.1}
  #allocation0 [shape = 'u32[]', space=smem, size = 0x4, offset = 0x4, fixed_abs, tag = 'smem constant byte address 0x4 - core index']
  #allocation1 [shape = 'u32[144,128]{1,0:T(1,128)}', space=vmem, size = 0x12000, scoped, tag = 'internal scratch']
  %s0 = inlined_call_operand.hbm [shape: f32[512,128], index: 0, kind: input, shape index: {}]
  %s1 = inlined_call_operand.hbm [shape: bf16[128,384], index: 1, kind: input, shape index: {}]
  %s2 = inlined_call_operand.vmem [shape: f32[1,384], index: 2, kind: input, shape index: {}]
  %s3 = inlined_call_operand.hbm [shape: bf16[512,128], index: 3, kind: output, shape index: {0}]
  %s4 = inlined_call_operand.hbm [shape: bf16[512,128], index: 4, kind: output, shape index: {1}]
  %s5 = inlined_call_operand.hbm [shape: bf16[512,128], index: 5, kind: output, shape index: {2}]
  %6 = xla_tuple %s3, %s4, %s5
  %s7 = sld [smem:[#allocation0]]
  $region69: #{tpu_custom_call.1} parent=0
    _
  %s9 = ssub.s32 1, %s7
  %s10 = scalar_select 0, %s9, %s7
  $region1: #{tpu_custom_call.1} parent=0
    #allocation2 [shape = 'u8[131072]{0}', space=vmem, size = 0x20000, scoped, tag = 'input window, operand 0']
    #allocation3 [shape = 's32[2]{0}', space=sflag, size = 0x8, scoped, tag = 'scoped memory for tpu_custom_call.1']
    #allocation4 [shape = 's32[2]{0}', space=sflag, size = 0x8, scoped, tag = 'scoped memory for tpu_custom_call.1']
    #allocation5 [shape = 'u8[98304]{0}', space=vmem, size = 0x18000, scoped, tag = 'input window, operand 1, single buffered']
    #allocation6 [shape = 's32[1]{0}', space=sflag, size = 0x4, scoped, tag = 'scoped memory for tpu_custom_call.1']
    #allocation7 [shape = 'u8[65536]{0}', space=vmem, size = 0x10000, scoped, tag = 'output window, operand 0']
    #allocation8 [shape = 'u8[65536]{0}', space=vmem, size = 0x10000, scoped, tag = 'output window, operand 1']
    #allocation9 [shape = 's32[2]{0}', space=sflag, size = 0x8, scoped, tag = 'scoped memory for tpu_custom_call.1']
    #allocation10 [shape = 'u8[65536]{0}', space=vmem, size = 0x10000, scoped, tag = 'output window, operand 2']
    %11 = vsyncpa [#allocation3], 0
    %s12 = scalar_lea.sflag [#allocation3], 1
    %13 = vsyncpa %s12, 0
    %14 = vsyncpa [#allocation6], 0
    %15 = vsyncpa [#allocation4], 0
    %s16 = scalar_lea.sflag [#allocation4], 1
    %17 = vsyncpa %s16, 0
    %18 = vsyncpa [#allocation9], 0
    %s19 = scalar_lea.sflag [#allocation9], 1
    %20 = vsyncpa %s19, 0
    loop: start=0, step=1, limit=6
    $region2: #{tpu_custom_call.1} parent=1 // loop_pre_header
      _
    $region3: #{tpu_custom_call.1} parent=1 // loop_header
      %s22 = sphi 0, %s26
      %p23 = scmp.ge.s32.totalorder %s22, 6
      %s32 = sphi 0, %s34
      %s35 = sphi 0, %s32
      %s36 = sphi 0, %s35
      %s52 = sphi 0, %s36
      %s56 = sphi 0, %s56
      %s58 = sphi 0, %s56
      %s59 = sphi 0, %s58
      %s73 = sphi 0, %s59
      %s77 = sphi 0, %s77
      %s79 = sphi 0, %s77
      %s80 = sphi 0, %s79
      %s94 = sphi 0, %s80
      %s100 = sphi 0, %s102
      %s103 = sphi 0, %s100
      %s104 = sphi 0, %s103
      %s120 = sphi 0, %s104
      %s126 = sphi 0, %s128
      %s129 = sphi 0, %s126
      %s130 = sphi 0, %s129
      %s146 = sphi 0, %s130
      %s152 = sphi 0, %s154
      %s155 = sphi 0, %s152
      %s156 = sphi 0, %s155
      %s172 = sphi 0, %s156
    $region4: #{tpu_custom_call.1} parent=1 // loop_header_branch
      %25 = sbr.rel (%p23) target = $region8
    $region5: #{tpu_custom_call.1} parent=1 // loop_body
      %s27 = ssub.s32 %s22, 1
      %s28 = ssub.s32 %s22, 2
      %s29 = sadd.s32 %s22, 1
      %s30 = ssub.s32 %s22, %s29
      %p31 = scmp.eq.s32.totalorder %s30, 0
      %s33 = sadd.s32 %s32, 1
      %s34 = scalar_select %p31, %s32, %s33
      %p37 = pneg %p31
      %p38 = scmp.eq.s32.totalorder %s22, 3
      %p39 = por %p37, %p38
      %p40 = scmp.ne.s32.totalorder %s32, %s35
      %p41 = scmp.eq.s32.totalorder %s22, 0
      %p42 = por %p40, %p41
      %p43 = scmp.ne.s32.totalorder %s32, %s35
      %p44 = scmp.eq.s32.totalorder %s27, 3
      %p45 = por %p43, %p44
      %p46 = scmp.ne.s32.totalorder %s35, %s36
      %p47 = scmp.eq.s32.totalorder %s27, 0
      %p48 = por %p46, %p47
      %p49 = scmp.ne.s32.totalorder %s35, %s36
      %p50 = scmp.eq.s32.totalorder %s28, 3
      %p51 = por %p49, %p50
      %p53 = scmp.ne.s32.totalorder %s36, %s52
      %p54 = scmp.eq.s32.totalorder %s28, 0
      %p55 = por %p53, %p54
      %s57 = sadd.s32 %s56, 1
      %p60 = scmp.eq.s32.totalorder %s22, 3
      %p61 = scmp.ne.s32.totalorder %s56, %s58
      %p62 = scmp.eq.s32.totalorder %s22, 0
      %p63 = por %p61, %p62
      %p64 = scmp.ne.s32.totalorder %s56, %s58
      %p65 = scmp.eq.s32.totalorder %s27, 3
      %p66 = por %p64, %p65
      %p67 = scmp.ne.s32.totalorder %s58, %s59
      %p68 = scmp.eq.s32.totalorder %s27, 0
      %p69 = por %p67, %p68
      %p70 = scmp.ne.s32.totalorder %s58, %s59
      %p71 = scmp.eq.s32.totalorder %s28, 3
      %p72 = por %p70, %p71
      %p74 = scmp.ne.s32.totalorder %s59, %s73
      %p75 = scmp.eq.s32.totalorder %s28, 0
      %p76 = por %p74, %p75
      %s78 = sadd.s32 %s77, 1
      %p81 = scmp.eq.s32.totalorder %s22, 3
      %p82 = scmp.ne.s32.totalorder %s77, %s79
      %p83 = scmp.eq.s32.totalorder %s22, 0
      %p84 = por %p82, %p83
      %p85 = scmp.ne.s32.totalorder %s77, %s79
      %p86 = scmp.eq.s32.totalorder %s27, 3
      %p87 = por %p85, %p86
      %p88 = scmp.ne.s32.totalorder %s79, %s80
      %p89 = scmp.eq.s32.totalorder %s27, 0
      %p90 = por %p88, %p89
      %p91 = scmp.ne.s32.totalorder %s79, %s80
      %p92 = scmp.eq.s32.totalorder %s28, 3
      %p93 = por %p91, %p92
      %p95 = scmp.ne.s32.totalorder %s80, %s94
      %p96 = scmp.eq.s32.totalorder %s28, 0
      %p97 = por %p95, %p96
      %s98 = ssub.s32 %s22, %s29
      %p99 = scmp.eq.s32.totalorder %s98, 0
      %s101 = sadd.s32 %s100, 1
      %s102 = scalar_select %p99, %s100, %s101
      %p105 = pneg %p99
      %p106 = scmp.eq.s32.totalorder %s22, 3
      %p107 = por %p105, %p106
      %p108 = scmp.ne.s32.totalorder %s100, %s103
      %p109 = scmp.eq.s32.totalorder %s22, 0
      %p110 = por %p108, %p109
      %p111 = scmp.ne.s32.totalorder %s100, %s103
      %p112 = scmp.eq.s32.totalorder %s27, 3
      %p113 = por %p111, %p112
      %p114 = scmp.ne.s32.totalorder %s103, %s104
      %p115 = scmp.eq.s32.totalorder %s27, 0
      %p116 = por %p114, %p115
      %p117 = scmp.ne.s32.totalorder %s103, %s104
      %p118 = scmp.eq.s32.totalorder %s28, 3
      %p119 = por %p117, %p118
      %p121 = scmp.ne.s32.totalorder %s104, %s120
      %p122 = scmp.eq.s32.totalorder %s28, 0
      %p123 = por %p121, %p122
      %s124 = ssub.s32 %s22, %s29
      %p125 = scmp.eq.s32.totalorder %s124, 0
      %s127 = sadd.s32 %s126, 1
      %s128 = scalar_select %p125, %s126, %s127
      %p131 = pneg %p125
      %p132 = scmp.eq.s32.totalorder %s22, 3
      %p133 = por %p131, %p132
      %p134 = scmp.ne.s32.totalorder %s126, %s129
      %p135 = scmp.eq.s32.totalorder %s22, 0
      %p136 = por %p134, %p135
      %p137 = scmp.ne.s32.totalorder %s126, %s129
      %p138 = scmp.eq.s32.totalorder %s27, 3
      %p139 = por %p137, %p138
      %p140 = scmp.ne.s32.totalorder %s129, %s130
      %p141 = scmp.eq.s32.totalorder %s27, 0
      %p142 = por %p140, %p141
      %p143 = scmp.ne.s32.totalorder %s129, %s130
      %p144 = scmp.eq.s32.totalorder %s28, 3
      %p145 = por %p143, %p144
      %p147 = scmp.ne.s32.totalorder %s130, %s146
      %p148 = scmp.eq.s32.totalorder %s28, 0
      %p149 = por %p147, %p148
      %s150 = ssub.s32 %s22, %s29
      %p151 = scmp.eq.s32.totalorder %s150, 0
      %s153 = sadd.s32 %s152, 1
      %s154 = scalar_select %p151, %s152, %s153
      %p157 = pneg %p151
      %p158 = scmp.eq.s32.totalorder %s22, 3
      %p159 = por %p157, %p158
      %p160 = scmp.ne.s32.totalorder %s152, %s155
      %p161 = scmp.eq.s32.totalorder %s22, 0
      %p162 = por %p160, %p161
      %p163 = scmp.ne.s32.totalorder %s152, %s155
      %p164 = scmp.eq.s32.totalorder %s27, 3
      %p165 = por %p163, %p164
      %p166 = scmp.ne.s32.totalorder %s155, %s156
      %p167 = scmp.eq.s32.totalorder %s27, 0
      %p168 = por %p166, %p167
      %p169 = scmp.ne.s32.totalorder %s155, %s156
      %p170 = scmp.eq.s32.totalorder %s28, 3
      %p171 = por %p169, %p170
      %p173 = scmp.ne.s32.totalorder %s156, %s172
      %p174 = scmp.eq.s32.totalorder %s28, 0
      %p175 = por %p173, %p174
      %p176 = scmp.le.s32.totalorder 1, %s22
      %p177 = scmp.lt.s32.totalorder %s22, 5
      %p178 = pnand %p176, %p177
      %p179 = pneg %p178
      // Predicated region
      $region9: #{tpu_custom_call.1} parent=5 // pred_check
        _
      $region10: #{tpu_custom_call.1} parent=5 // pred_check_branch
        %181 = sbr.rel (%p178) target = $region12
      $region11: #{tpu_custom_call.1} parent=5 // pred_region
        %s182 = ssub.s32 %s22, 1
        // Predicated region
        $region13: #{tpu_custom_call.1} parent=11 // pred_check
          %p183 = pneg %p69
        $region14: #{tpu_custom_call.1} parent=11 // pred_check_branch
          %185 = sbr.rel (%p183) target = $region16
        $region15: #{tpu_custom_call.1} parent=11 // pred_region
          %s187 = ssub.s32 3072, 3072
          %188 = vsyncadd [#allocation6], %s187
          %s189 = sshll.u32 [#allocation5], 4
          %s190 = int_to_ptr.vmem [resolvable:$true] %s189
          %195 = dma.hbm_to_vmem [thread:$0]  %s1, 3072, %s190, [#allocation6], 192, 192, 12
        $region16: #{tpu_custom_call.1} parent=11 // pred_fallthru
          _
        // Predicated region
        $region17: #{tpu_custom_call.1} parent=11 // pred_check
          %p196 = pneg %p90
        $region18: #{tpu_custom_call.1} parent=11 // pred_check_branch
          %198 = sbr.rel (%p196) target = $region20
        $region19: #{tpu_custom_call.1} parent=11 // pred_region
          _
        $region20: #{tpu_custom_call.1} parent=11 // pred_fallthru
          _
      $region12: #{tpu_custom_call.1} parent=5 // pred_fallthru
        _
      %p199 = scmp.lt.s32.totalorder %s22, 4
      // Predicated region
      $region21: #{tpu_custom_call.1} parent=5 // pred_check
        %p200 = pneg %p199
      $region22: #{tpu_custom_call.1} parent=5 // pred_check_branch
        %202 = sbr.rel (%p200) target = $region24
      $region23: #{tpu_custom_call.1} parent=5 // pred_region
        // Predicated region
        $region25: #{tpu_custom_call.1} parent=23 // pred_check
          %p203 = pneg %p42
        $region26: #{tpu_custom_call.1} parent=23 // pred_check_branch
          %205 = sbr.rel (%p203) target = $region28
        $region27: #{tpu_custom_call.1} parent=23 // pred_region
          %s206 = sand.u32 %s32, 1
          %s207 = scalar_lea.sflag [#allocation3], %s206
          %s208 = sand.u32 %s32, 1
          %s209 = smul.addr %s208, 128
          %s210 = scalar_lea.vmem [#allocation2], %s209
          %s211 = smul.u32 16, %s22
          %s213 = ssub.s32 2048, 2048
          %214 = vsyncadd %s207, %s213
          %s215 = smul.addr %s211, 128
          %s216 = scalar_lea.hbm %s0, %s215
          %s217 = sshll.u32 %s210, 4
          %s218 = int_to_ptr.vmem [resolvable:$true] %s217
          %223 = dma.hbm_to_vmem [thread:$0]  %s216, 2048, %s218, %s207, 128, 128, 8
        $region28: #{tpu_custom_call.1} parent=23 // pred_fallthru
          _
      $region24: #{tpu_custom_call.1} parent=5 // pred_fallthru
        _
      %p224 = scmp.le.s32.totalorder 1, %s22
      %p225 = scmp.lt.s32.totalorder %s22, 5
      %p226 = pnand %p224, %p225
      %p227 = pneg %p226
      // Predicated region
      $region29: #{tpu_custom_call.1} parent=5 // pred_check
        _
      $region30: #{tpu_custom_call.1} parent=5 // pred_check_branch
        %229 = sbr.rel (%p226) target = $region32
      $region31: #{tpu_custom_call.1} parent=5 // pred_region
        %s230 = ssub.s32 %s22, 1
        %s231 = sand.u32 %s35, 1
        %s232 = scalar_lea.sflag [#allocation3], %s231
        %s233 = sand.u32 %s35, 1
        %s234 = smul.addr %s233, 128
        %s235 = scalar_lea.vmem [#allocation2], %s234
        // Predicated region
        $region33: #{tpu_custom_call.1} parent=31 // pred_check
          %p236 = pneg %p48
        $region34: #{tpu_custom_call.1} parent=31 // pred_check_branch
          %238 = sbr.rel (%p236) target = $region36
        $region35: #{tpu_custom_call.1} parent=31 // pred_region
          %239 = dma.done %s232, 2048
        $region36: #{tpu_custom_call.1} parent=31 // pred_fallthru
          _
        // Predicated region
        $region37: #{tpu_custom_call.1} parent=31 // pred_check
          %p240 = pneg %p69
        $region38: #{tpu_custom_call.1} parent=31 // pred_check_branch
          %242 = sbr.rel (%p240) target = $region40
        $region39: #{tpu_custom_call.1} parent=31 // pred_region
          %243 = dma.done [#allocation6], 3072
        $region40: #{tpu_custom_call.1} parent=31 // pred_fallthru
          _
        %s244 = sand.u32 %s35, 1
        %s245 = scalar_lea.sflag [#allocation3], %s244
        %s246 = sand.u32 %s35, 1
        %s247 = smul.addr %s246, 128
        %s248 = scalar_lea.vmem [#allocation2], %s247
        %p249 = pneg %p48
        %p250 = pneg %p45
        %p251 = pneg %p69
        %p252 = pneg %p66
        %p253 = pneg %p90
        %p254 = pneg %p87
        %p255 = pneg %p116
        %p256 = pneg %p113
        %s257 = sand.u32 %s103, 1
        %s258 = scalar_lea.sflag [#allocation4], %s257
        %s259 = sand.u32 %s103, 1
        %s260 = smul.addr %s259, 64
        %s261 = scalar_lea.vmem [#allocation7], %s260
        %p262 = pneg %p142
        %p263 = pneg %p139
        %s264 = sand.u32 %s27, 1
        %s265 = scalar_lea.sflag [#allocation9], %s264
        %s266 = sand.u32 %s129, 1
        %s267 = smul.addr %s266, 64
        %s268 = scalar_lea.vmem [#allocation8], %s267
        %p269 = pneg %p168
        %p270 = pneg %p165
        %s271 = sand.u32 %s27, 1
        %s272 = scalar_lea.sflag [#allocation9], %s271
        %s273 = sand.u32 %s155, 1
        %s274 = smul.addr %s273, 64
        %s275 = scalar_lea.vmem [#allocation10], %s274
        %s276 = smul.u32 16, %s27
        %s277 = smul.u32 16, %s27
        %s278 = smul.u32 16, %s27
        %s279 = smul.u32 16, %s27
        %v281 = vld [vmem:[%s235] sm:$0xff]
        %v282 = vld [vmem:[%s235 + $0x8] sm:$0xff]
        %v283 = vld [vmem:[%s235 + $0x10] sm:$0xff]
        %v284 = vld [vmem:[%s235 + $0x18] sm:$0xff]
        %v285 = vld [vmem:[%s235 + $0x20] sm:$0xff]
        %v286 = vld [vmem:[%s235 + $0x28] sm:$0xff]
        %v287 = vld [vmem:[%s235 + $0x30] sm:$0xff]
        %v288 = vld [vmem:[%s235 + $0x38] sm:$0xff]
        %v289 = vld [vmem:[%s235 + $0x40] sm:$0xff]
        %v290 = vld [vmem:[%s235 + $0x48] sm:$0xff]
        %v291 = vld [vmem:[%s235 + $0x50] sm:$0xff]
        %v292 = vld [vmem:[%s235 + $0x58] sm:$0xff]
        %v293 = vld [vmem:[%s235 + $0x60] sm:$0xff]
        %v294 = vld [vmem:[%s235 + $0x68] sm:$0xff]
        %v295 = vld [vmem:[%s235 + $0x70] sm:$0xff]
        %v296 = vld [vmem:[%s235 + $0x78] sm:$0xff]
        %v297 = vpack.c.bf16 %v282, %v281
        %v298 = vpack.c.bf16 %v284, %v283
        %v299 = vpack.c.bf16 %v286, %v285
        %v300 = vpack.c.bf16 %v288, %v287
        %v301 = vpack.c.bf16 %v290, %v289
        %v302 = vpack.c.bf16 %v292, %v291
        %v303 = vpack.c.bf16 %v294, %v293
        %v304 = vpack.c.bf16 %v296, %v295
        %v305 = vld [vmem:[#allocation5] sm:$0xff]
        %v306 = vld [vmem:[#allocation5 + $0x8] sm:$0xf]
        %v307 = vld [vmem:[#allocation5 + $0xc] sm:$0xff]
        %v308 = vld [vmem:[#allocation5 + $0x14] sm:$0xf]
        %v309 = vld [vmem:[#allocation5 + $0x18] sm:$0xff]
        %v310 = vld [vmem:[#allocation5 + $0x20] sm:$0xf]
        %v311 = vld [vmem:[#allocation5 + $0x24] sm:$0xff]
        %v312 = vld [vmem:[#allocation5 + $0x2c] sm:$0xf]
        %v313 = vld [vmem:[#allocation5 + $0x30] sm:$0xff]
        %v314 = vld [vmem:[#allocation5 + $0x38] sm:$0xf]
        %v315 = vld [vmem:[#allocation5 + $0x3c] sm:$0xff]
        %v316 = vld [vmem:[#allocation5 + $0x44] sm:$0xf]
        %v317 = vld [vmem:[#allocation5 + $0x48] sm:$0xff]
        %v318 = vld [vmem:[#allocation5 + $0x50] sm:$0xf]
        %v319 = vld [vmem:[#allocation5 + $0x54] sm:$0xff]
        %v320 = vld [vmem:[#allocation5 + $0x5c] sm:$0xf]
        %v321 = vld [vmem:[#allocation5 + $0x60] sm:$0xff]
        %v322 = vld [vmem:[#allocation5 + $0x68] sm:$0xf]
        %v323 = vld [vmem:[#allocation5 + $0x6c] sm:$0xff]
        %v324 = vld [vmem:[#allocation5 + $0x74] sm:$0xf]
        %v325 = vld [vmem:[#allocation5 + $0x78] sm:$0xff]
        %v326 = vld [vmem:[#allocation5 + $0x80] sm:$0xf]
        %v327 = vld [vmem:[#allocation5 + $0x84] sm:$0xff]
        %v328 = vld [vmem:[#allocation5 + $0x8c] sm:$0xf]
        %v329 = vld [vmem:[#allocation5 + $0x90] sm:$0xff]
        %v330 = vld [vmem:[#allocation5 + $0x98] sm:$0xf]
        %v331 = vld [vmem:[#allocation5 + $0x9c] sm:$0xff]
        %v332 = vld [vmem:[#allocation5 + $0xa4] sm:$0xf]
        %v333 = vld [vmem:[#allocation5 + $0xa8] sm:$0xff]
        %v334 = vld [vmem:[#allocation5 + $0xb0] sm:$0xf]
        %v335 = vld [vmem:[#allocation5 + $0xb4] sm:$0xff]
        %v336 = vld [vmem:[#allocation5 + $0xbc] sm:$0xf]
        %v337 = vld [vmem:[%s2] sm:$0x7]
        %v339 = vlaneseq
        %v340 = vshrl.u32 %v339, 7
        %v341 = vsub.s32 0, %v340
        %v342 = vrot.slane %v337, %v341
        %v343 = vlaneseq
        %v344 = vshrl.u32 %v343, 7
        %v345 = vsub.s32 1, %v344
        %v346 = vrot.slane %v337, %v345
        %v347 = vlaneseq
        %v348 = vshrl.u32 %v347, 7
        %v349 = vsub.s32 2, %v348
        %v350 = vrot.slane %v337, %v349
        %v386 = vunpack.c.l.b16 %v305
        %v387 = vunpack.c.h.b16 %v305
        %v388 = vunpack.c.l.b16 %v306
        %v389 = vunpack.c.l.b16 %v307
        %v390 = vunpack.c.h.b16 %v307
        %v391 = vunpack.c.l.b16 %v308
        %v392 = vunpack.c.l.b16 %v309
        %v393 = vunpack.c.h.b16 %v309
        %v394 = vunpack.c.l.b16 %v310
        %v395 = vunpack.c.l.b16 %v311
        %v396 = vunpack.c.h.b16 %v311
        %v397 = vunpack.c.l.b16 %v312
        %v398 = vunpack.c.l.b16 %v313
        %v399 = vunpack.c.h.b16 %v313
        %v400 = vunpack.c.l.b16 %v314
        %v401 = vunpack.c.l.b16 %v315
        %v402 = vunpack.c.h.b16 %v315
        %v403 = vunpack.c.l.b16 %v316
        %v404 = vunpack.c.l.b16 %v317
        %v405 = vunpack.c.h.b16 %v317
        %v406 = vunpack.c.l.b16 %v318
        %v407 = vunpack.c.l.b16 %v319
        %v408 = vunpack.c.h.b16 %v319
        %v409 = vunpack.c.l.b16 %v320
        %v410 = vunpack.c.l.b16 %v321
        %v411 = vunpack.c.h.b16 %v321
        %v412 = vunpack.c.l.b16 %v322
        %v413 = vunpack.c.l.b16 %v323
        %v414 = vunpack.c.h.b16 %v323
        %v415 = vunpack.c.l.b16 %v324
        %v416 = vunpack.c.l.b16 %v325
        %v417 = vunpack.c.h.b16 %v325
        %v418 = vunpack.c.l.b16 %v326
        %v419 = vunpack.c.l.b16 %v327
        %v420 = vunpack.c.h.b16 %v327
        %v421 = vunpack.c.l.b16 %v328
        %v422 = vunpack.c.l.b16 %v329
        %v423 = vunpack.c.h.b16 %v329
        %v424 = vunpack.c.l.b16 %v330
        %v425 = vunpack.c.l.b16 %v331
        %v426 = vunpack.c.h.b16 %v331
        %v427 = vunpack.c.l.b16 %v332
        %v428 = vunpack.c.l.b16 %v333
        %v429 = vunpack.c.h.b16 %v333
        %v430 = vunpack.c.l.b16 %v334
        %v431 = vunpack.c.l.b16 %v335
        %v432 = vunpack.c.h.b16 %v335
        %v433 = vunpack.c.l.b16 %v336
        %v434 = vpack.c.b16 %v389, %v386
        %v435 = vpack.c.b16 %v390, %v387
        %v436 = vpack.c.b16 %v391, %v388
        %v437 = vpack.c.b16 %v395, %v392
        %v438 = vpack.c.b16 %v396, %v393
        %v439 = vpack.c.b16 %v397, %v394
        %v440 = vpack.c.b16 %v401, %v398
        %v441 = vpack.c.b16 %v402, %v399
        %v442 = vpack.c.b16 %v403, %v400
        %v443 = vpack.c.b16 %v407, %v404
        %v444 = vpack.c.b16 %v408, %v405
        %v445 = vpack.c.b16 %v409, %v406
        %v446 = vpack.c.b16 %v413, %v410
        %v447 = vpack.c.b16 %v414, %v411
        %v448 = vpack.c.b16 %v415, %v412
        %v449 = vpack.c.b16 %v419, %v416
        %v450 = vpack.c.b16 %v420, %v417
        %v451 = vpack.c.b16 %v421, %v418
        %v452 = vpack.c.b16 %v425, %v422
        %v453 = vpack.c.b16 %v426, %v423
        %v454 = vpack.c.b16 %v427, %v424
        %v455 = vpack.c.b16 %v431, %v428
        %v456 = vpack.c.b16 %v432, %v429
        %v457 = vpack.c.b16 %v433, %v430
        %482 = vmatprep.subr.bf16.mxu0 %v456
        %483 = vmatpush1.bf16.msra.mxu0 %v455
        %484 = vmatprep.subr.bf16.mxu0 %v453
        %485 = vmatpush1.bf16.msra.mxu0 %v452
        %486 = vmatprep.subr.bf16.mxu0 %v450
        %487 = vmatpush1.bf16.msra.mxu0 %v449
        %488 = vmatprep.subr.bf16.mxu0 %v447
        %489 = vmatpush1.bf16.msra.mxu0 %v446
        %490 = vmatprep.subr.bf16.mxu0 %v444
        %491 = vmatpush1.bf16.msra.mxu0 %v443
        %492 = vmatprep.subr.bf16.mxu0 %v441
        %493 = vmatpush1.bf16.msra.mxu0 %v440
        %494 = vmatprep.subr.bf16.mxu0 %v438
        %495 = vmatpush1.bf16.msra.mxu0 %v437
        %496 = vmatprep.subr.bf16.mxu0 %v435
        %497 = vmatpush1.bf16.msra.mxu0 %v434
        %498 = vmatprep.subr.bf16.mxu0 0
        %499 = vmatpush2.bf16.msra.mxu0 0
        %500 = vmatprep.subr.bf16.mxu0 0
        %501 = vmatpush2.bf16.msra.mxu0 0
        %502 = vmatprep.subr.bf16.mxu0 0
        %503 = vmatpush2.bf16.msra.mxu0 0
        %504 = vmatprep.subr.bf16.mxu0 0
        %505 = vmatpush2.bf16.msra.mxu0 0
        %506 = vmatprep.subr.bf16.mxu0 0
        %507 = vmatpush2.bf16.msra.mxu0 0
        %508 = vmatprep.subr.bf16.mxu0 0
        %509 = vmatpush2.bf16.msra.mxu0 0
        %510 = vmatprep.subr.bf16.mxu0 0
        %511 = vmatpush2.bf16.msra.mxu0 0
        %512 = vmatprep.subr.bf16.mxu0 0
        %513 = vmatpush2.bf16.msra.mxu0 0
        %514 = vmatprep.mubr.bf16.mxu0 0
        %515 = vmatmul.mubr.bf16.gmra.mxu0 %v297
        %v516 = vpop.f32.mrf.mxu0
        %v517 = vadd.f32 %v342, %v516
        %v518 = vpop.f32.mrf.mxu0
        %v519 = vadd.f32 %v346, %v518
        %v520 = vpop.f32.mrf.mxu0
        %v521 = vadd.f32 %v342, %v520
        %v522 = vpop.f32.mrf.mxu0
        %v523 = vadd.f32 %v346, %v522
        %524 = vmatprep.mubr.bf16.mxu0 0
        %525 = vmatmul.mubr.bf16.gmra.mxu0 %v298
        %v526 = vpop.f32.mrf.mxu0
        %v527 = vadd.f32 %v342, %v526
        %v528 = vpop.f32.mrf.mxu0
        %v529 = vadd.f32 %v346, %v528
        %v530 = vpop.f32.mrf.mxu0
        %v531 = vadd.f32 %v342, %v530
        %v532 = vpop.f32.mrf.mxu0
        %v533 = vadd.f32 %v346, %v532
        %534 = vmatprep.mubr.bf16.mxu0 0
        %535 = vmatmul.mubr.bf16.gmra.mxu0 %v299
        %v536 = vpop.f32.mrf.mxu0
        %v537 = vadd.f32 %v342, %v536
        %v538 = vpop.f32.mrf.mxu0
        %v539 = vadd.f32 %v346, %v538
        %v540 = vpop.f32.mrf.mxu0
        %v541 = vadd.f32 %v342, %v540
        %v542 = vpop.f32.mrf.mxu0
        %v543 = vadd.f32 %v346, %v542
        %544 = vmatprep.mubr.bf16.mxu0 0
        %545 = vmatmul.mubr.bf16.gmra.mxu0 %v300
        %v546 = vpop.f32.mrf.mxu0
        %v547 = vadd.f32 %v342, %v546
        %v548 = vpop.f32.mrf.mxu0
        %v549 = vadd.f32 %v346, %v548
        %v550 = vpop.f32.mrf.mxu0
        %v551 = vadd.f32 %v342, %v550
        %v552 = vpop.f32.mrf.mxu0
        %v553 = vadd.f32 %v346, %v552
        %554 = vmatprep.mubr.bf16.mxu0 0
        %555 = vmatmul.mubr.bf16.gmra.mxu0 %v301
        %v556 = vpop.f32.mrf.mxu0
        %v557 = vadd.f32 %v342, %v556
        %v558 = vpop.f32.mrf.mxu0
        %v559 = vadd.f32 %v346, %v558
        %v560 = vpop.f32.mrf.mxu0
        %v561 = vadd.f32 %v342, %v560
        %v562 = vpop.f32.mrf.mxu0
        %v563 = vadd.f32 %v346, %v562
        %564 = vmatprep.mubr.bf16.mxu0 0
        %565 = vmatmul.mubr.bf16.gmra.mxu0 %v302
        %v566 = vpop.f32.mrf.mxu0
        %v567 = vadd.f32 %v342, %v566
        %v568 = vpop.f32.mrf.mxu0
        %v569 = vadd.f32 %v346, %v568
        %v570 = vpop.f32.mrf.mxu0
        %v571 = vadd.f32 %v342, %v570
        %v572 = vpop.f32.mrf.mxu0
        %v573 = vadd.f32 %v346, %v572
        %574 = vmatprep.mubr.bf16.mxu0 0
        %575 = vmatmul.mubr.bf16.gmra.mxu0 %v303
        %v576 = vpop.f32.mrf.mxu0
        %v577 = vadd.f32 %v342, %v576
        %v578 = vpop.f32.mrf.mxu0
        %v579 = vadd.f32 %v346, %v578
        %v580 = vpop.f32.mrf.mxu0
        %v581 = vadd.f32 %v342, %v580
        %v582 = vpop.f32.mrf.mxu0
        %v583 = vadd.f32 %v346, %v582
        %584 = vmatprep.mubr.bf16.mxu0 0
        %585 = vmatmul.mubr.bf16.gmra.mxu0 %v304
        %v586 = vpop.f32.mrf.mxu0
        %v587 = vadd.f32 %v342, %v586
        %v588 = vpop.f32.mrf.mxu0
        %v589 = vadd.f32 %v346, %v588
        %v590 = vpop.f32.mrf.mxu0
        %v591 = vadd.f32 %v342, %v590
        %v592 = vpop.f32.mrf.mxu0
        %v593 = vadd.f32 %v346, %v592
        %594 = vdwg.mxu0
        %595 = vmatprep.subr.bf16.mxu0 0
        %596 = vmatpush1.bf16.msra.mxu0 %v457
        %597 = vmatprep.subr.bf16.mxu0 0
        %598 = vmatpush1.bf16.msra.mxu0 %v454
        %599 = vmatprep.subr.bf16.mxu0 0
        %600 = vmatpush1.bf16.msra.mxu0 %v451
        %601 = vmatprep.subr.bf16.mxu0 0
        %602 = vmatpush1.bf16.msra.mxu0 %v448
        %603 = vmatprep.subr.bf16.mxu0 0
        %604 = vmatpush1.bf16.msra.mxu0 %v445
        %605 = vmatprep.subr.bf16.mxu0 0
        %606 = vmatpush1.bf16.msra.mxu0 %v442
        %607 = vmatprep.subr.bf16.mxu0 0
        %608 = vmatpush1.bf16.msra.mxu0 %v439
        %609 = vmatprep.subr.bf16.mxu0 0
        %610 = vmatpush1.bf16.msra.mxu0 %v436
        %611 = vmatprep.subr.bf16.mxu0 0
        %612 = vmatpush2.bf16.msra.mxu0 0
        %613 = vmatprep.subr.bf16.mxu0 0
        %614 = vmatpush2.bf16.msra.mxu0 0
        %615 = vmatprep.subr.bf16.mxu0 0
        %616 = vmatpush2.bf16.msra.mxu0 0
        %617 = vmatprep.subr.bf16.mxu0 0
        %618 = vmatpush2.bf16.msra.mxu0 0
        %619 = vmatprep.subr.bf16.mxu0 0
        %620 = vmatpush2.bf16.msra.mxu0 0
        %621 = vmatprep.subr.bf16.mxu0 0
        %622 = vmatpush2.bf16.msra.mxu0 0
        %623 = vmatprep.subr.bf16.mxu0 0
        %624 = vmatpush2.bf16.msra.mxu0 0
        %625 = vmatprep.subr.bf16.mxu0 0
        %626 = vmatpush2.bf16.msra.mxu0 0
        %627 = vmatprep.mubr.bf16.mxu0 0
        %628 = vmatmul.mubr.bf16.gmra.mxu0 %v297
        %v629 = vpop.f32.mrf.mxu0
        %v630 = vadd.f32 %v350, %v629
        %v631 = vpop.f32.mrf.mxu0
        %v632 = vpop.f32.mrf.mxu0
        %v633 = vadd.f32 %v350, %v632
        %v634 = vpop.f32.mrf.mxu0
        %635 = vmatprep.mubr.bf16.mxu0 0
        %636 = vmatmul.mubr.bf16.gmra.mxu0 %v298
        %v637 = vpop.f32.mrf.mxu0
        %v638 = vadd.f32 %v350, %v637
        %v639 = vpop.f32.mrf.mxu0
        %v640 = vpop.f32.mrf.mxu0
        %v641 = vadd.f32 %v350, %v640
        %v642 = vpop.f32.mrf.mxu0
        %643 = vmatprep.mubr.bf16.mxu0 0
        %644 = vmatmul.mubr.bf16.gmra.mxu0 %v299
        %v645 = vpop.f32.mrf.mxu0
        %v646 = vadd.f32 %v350, %v645
        %v647 = vpop.f32.mrf.mxu0
        %v648 = vpop.f32.mrf.mxu0
        %v649 = vadd.f32 %v350, %v648
        %v650 = vpop.f32.mrf.mxu0
        %651 = vmatprep.mubr.bf16.mxu0 0
        %652 = vmatmul.mubr.bf16.gmra.mxu0 %v300
        %v653 = vpop.f32.mrf.mxu0
        %v654 = vadd.f32 %v350, %v653
        %v655 = vpop.f32.mrf.mxu0
        %v656 = vpop.f32.mrf.mxu0
        %v657 = vadd.f32 %v350, %v656
        %v658 = vpop.f32.mrf.mxu0
        %659 = vmatprep.mubr.bf16.mxu0 0
        %660 = vmatmul.mubr.bf16.gmra.mxu0 %v301
        %v661 = vpop.f32.mrf.mxu0
        %v662 = vadd.f32 %v350, %v661
        %v663 = vpop.f32.mrf.mxu0
        %v664 = vpop.f32.mrf.mxu0
        %v665 = vadd.f32 %v350, %v664
        %v666 = vpop.f32.mrf.mxu0
        %667 = vmatprep.mubr.bf16.mxu0 0
        %668 = vmatmul.mubr.bf16.gmra.mxu0 %v302
        %v669 = vpop.f32.mrf.mxu0
        %v670 = vadd.f32 %v350, %v669
        %v671 = vpop.f32.mrf.mxu0
        %v672 = vpop.f32.mrf.mxu0
        %v673 = vadd.f32 %v350, %v672
        %v674 = vpop.f32.mrf.mxu0
        %675 = vmatprep.mubr.bf16.mxu0 0
        %676 = vmatmul.mubr.bf16.gmra.mxu0 %v303
        %v677 = vpop.f32.mrf.mxu0
        %v678 = vadd.f32 %v350, %v677
        %v679 = vpop.f32.mrf.mxu0
        %v680 = vpop.f32.mrf.mxu0
        %v681 = vadd.f32 %v350, %v680
        %v682 = vpop.f32.mrf.mxu0
        %683 = vmatprep.mubr.bf16.mxu0 0
        %684 = vmatmul.mubr.bf16.gmra.mxu0 %v304
        %v685 = vpop.f32.mrf.mxu0
        %v686 = vadd.f32 %v350, %v685
        %v687 = vpop.f32.mrf.mxu0
        %v688 = vpop.f32.mrf.mxu0
        %v689 = vadd.f32 %v350, %v688
        %v690 = vpop.f32.mrf.mxu0
        %691 = vdwg.mxu0
        %v692 = vpack.c.bf16 %v521, %v517
        %v693 = vpack.c.bf16 %v523, %v519
        %v694 = vpack.c.bf16 %v633, %v630
        %v695 = vpack.c.bf16 %v531, %v527
        %v696 = vpack.c.bf16 %v533, %v529
        %v697 = vpack.c.bf16 %v641, %v638
        %v698 = vpack.c.bf16 %v541, %v537
        %v699 = vpack.c.bf16 %v543, %v539
        %v700 = vpack.c.bf16 %v649, %v646
        %v701 = vpack.c.bf16 %v551, %v547
        %v702 = vpack.c.bf16 %v553, %v549
        %v703 = vpack.c.bf16 %v657, %v654
        %v704 = vpack.c.bf16 %v561, %v557
        %v705 = vpack.c.bf16 %v563, %v559
        %v706 = vpack.c.bf16 %v665, %v662
        %v707 = vpack.c.bf16 %v571, %v567
        %v708 = vpack.c.bf16 %v573, %v569
        %v709 = vpack.c.bf16 %v673, %v670
        %v710 = vpack.c.bf16 %v581, %v577
        %v711 = vpack.c.bf16 %v583, %v579
        %v712 = vpack.c.bf16 %v681, %v678
        %v713 = vpack.c.bf16 %v591, %v587
        %v714 = vpack.c.bf16 %v593, %v589
        %v715 = vpack.c.bf16 %v689, %v686
        %v724 = vunpack.c.l.b16 %v692
        %v725 = vunpack.c.h.b16 %v692
        %v726 = vunpack.c.l.b16 %v695
        %v727 = vunpack.c.h.b16 %v695
        %v728 = vunpack.c.l.b16 %v698
        %v729 = vunpack.c.h.b16 %v698
        %v730 = vunpack.c.l.b16 %v701
        %v731 = vunpack.c.h.b16 %v701
        %v732 = vunpack.c.l.b16 %v704
        %v733 = vunpack.c.h.b16 %v704
        %v734 = vunpack.c.l.b16 %v707
        %v735 = vunpack.c.h.b16 %v707
        %v736 = vunpack.c.l.b16 %v710
        %v737 = vunpack.c.h.b16 %v710
        %v738 = vunpack.c.l.b16 %v713
        %v739 = vunpack.c.h.b16 %v713
        %v740 = vpack.c.b16 %v724, %v724
        %v741 = vpack.c.b16 %v725, %v725
        %v742 = vpack.c.b16 %v726, %v726
        %v743 = vpack.c.b16 %v727, %v727
        %v744 = vpack.c.b16 %v728, %v728
        %v745 = vpack.c.b16 %v729, %v729
        %v746 = vpack.c.b16 %v730, %v730
        %v747 = vpack.c.b16 %v731, %v731
        %v748 = vpack.c.b16 %v732, %v732
        %v749 = vpack.c.b16 %v733, %v733
        %v750 = vpack.c.b16 %v734, %v734
        %v751 = vpack.c.b16 %v735, %v735
        %v752 = vpack.c.b16 %v736, %v736
        %v753 = vpack.c.b16 %v737, %v737
        %v754 = vpack.c.b16 %v738, %v738
        %v755 = vpack.c.b16 %v739, %v739
        %772 = vst [vmem:[%s261] sm:$0xf] %v740
        %773 = vst [vmem:[%s261 + $0x4] sm:$0xf] %v741
        %774 = vst [vmem:[%s261 + $0x8] sm:$0xf] %v742
        %775 = vst [vmem:[%s261 + $0xc] sm:$0xf] %v743
        %776 = vst [vmem:[%s261 + $0x10] sm:$0xf] %v744
        %777 = vst [vmem:[%s261 + $0x14] sm:$0xf] %v745
        %778 = vst [vmem:[%s261 + $0x18] sm:$0xf] %v746
        %779 = vst [vmem:[%s261 + $0x1c] sm:$0xf] %v747
        %780 = vst [vmem:[%s261 + $0x20] sm:$0xf] %v748
        %781 = vst [vmem:[%s261 + $0x24] sm:$0xf] %v749
        %782 = vst [vmem:[%s261 + $0x28] sm:$0xf] %v750
        %783 = vst [vmem:[%s261 + $0x2c] sm:$0xf] %v751
        %784 = vst [vmem:[%s261 + $0x30] sm:$0xf] %v752
        %785 = vst [vmem:[%s261 + $0x34] sm:$0xf] %v753
        %786 = vst [vmem:[%s261 + $0x38] sm:$0xf] %v754
        %787 = vst [vmem:[%s261 + $0x3c] sm:$0xf] %v755
        %v796 = vunpack.c.l.b16 %v693
        %v797 = vunpack.c.h.b16 %v693
        %v798 = vunpack.c.l.b16 %v696
        %v799 = vunpack.c.h.b16 %v696
        %v800 = vunpack.c.l.b16 %v699
        %v801 = vunpack.c.h.b16 %v699
        %v802 = vunpack.c.l.b16 %v702
        %v803 = vunpack.c.h.b16 %v702
        %v804 = vunpack.c.l.b16 %v705
        %v805 = vunpack.c.h.b16 %v705
        %v806 = vunpack.c.l.b16 %v708
        %v807 = vunpack.c.h.b16 %v708
        %v808 = vunpack.c.l.b16 %v711
        %v809 = vunpack.c.h.b16 %v711
        %v810 = vunpack.c.l.b16 %v714
        %v811 = vunpack.c.h.b16 %v714
        %v812 = vpack.c.b16 %v796, %v796
        %v813 = vpack.c.b16 %v797, %v797
        %v814 = vpack.c.b16 %v798, %v798
        %v815 = vpack.c.b16 %v799, %v799
        %v816 = vpack.c.b16 %v800, %v800
        %v817 = vpack.c.b16 %v801, %v801
        %v818 = vpack.c.b16 %v802, %v802
        %v819 = vpack.c.b16 %v803, %v803
        %v820 = vpack.c.b16 %v804, %v804
        %v821 = vpack.c.b16 %v805, %v805
        %v822 = vpack.c.b16 %v806, %v806
        %v823 = vpack.c.b16 %v807, %v807
        %v824 = vpack.c.b16 %v808, %v808
        %v825 = vpack.c.b16 %v809, %v809
        %v826 = vpack.c.b16 %v810, %v810
        %v827 = vpack.c.b16 %v811, %v811
        %844 = vst [vmem:[%s268] sm:$0xf] %v812
        %845 = vst [vmem:[%s268 + $0x4] sm:$0xf] %v813
        %846 = vst [vmem:[%s268 + $0x8] sm:$0xf] %v814
        %847 = vst [vmem:[%s268 + $0xc] sm:$0xf] %v815
        %848 = vst [vmem:[%s268 + $0x10] sm:$0xf] %v816
        %849 = vst [vmem:[%s268 + $0x14] sm:$0xf] %v817
        %850 = vst [vmem:[%s268 + $0x18] sm:$0xf] %v818
        %851 = vst [vmem:[%s268 + $0x1c] sm:$0xf] %v819
        %852 = vst [vmem:[%s268 + $0x20] sm:$0xf] %v820
        %853 = vst [vmem:[%s268 + $0x24] sm:$0xf] %v821
        %854 = vst [vmem:[%s268 + $0x28] sm:$0xf] %v822
        %855 = vst [vmem:[%s268 + $0x2c] sm:$0xf] %v823
        %856 = vst [vmem:[%s268 + $0x30] sm:$0xf] %v824
        %857 = vst [vmem:[%s268 + $0x34] sm:$0xf] %v825
        %858 = vst [vmem:[%s268 + $0x38] sm:$0xf] %v826
        %859 = vst [vmem:[%s268 + $0x3c] sm:$0xf] %v827
        %v868 = vunpack.c.l.b16 %v694
        %v869 = vunpack.c.h.b16 %v694
        %v870 = vunpack.c.l.b16 %v697
        %v871 = vunpack.c.h.b16 %v697
        %v872 = vunpack.c.l.b16 %v700
        %v873 = vunpack.c.h.b16 %v700
        %v874 = vunpack.c.l.b16 %v703
        %v875 = vunpack.c.h.b16 %v703
        %v876 = vunpack.c.l.b16 %v706
        %v877 = vunpack.c.h.b16 %v706
        %v878 = vunpack.c.l.b16 %v709
        %v879 = vunpack.c.h.b16 %v709
        %v880 = vunpack.c.l.b16 %v712
        %v881 = vunpack.c.h.b16 %v712
        %v882 = vunpack.c.l.b16 %v715
        %v883 = vunpack.c.h.b16 %v715
        %v884 = vpack.c.b16 %v868, %v868
        %v885 = vpack.c.b16 %v869, %v869
        %v886 = vpack.c.b16 %v870, %v870
        %v887 = vpack.c.b16 %v871, %v871
        %v888 = vpack.c.b16 %v872, %v872
        %v889 = vpack.c.b16 %v873, %v873
        %v890 = vpack.c.b16 %v874, %v874
        %v891 = vpack.c.b16 %v875, %v875
        %v892 = vpack.c.b16 %v876, %v876
        %v893 = vpack.c.b16 %v877, %v877
        %v894 = vpack.c.b16 %v878, %v878
        %v895 = vpack.c.b16 %v879, %v879
        %v896 = vpack.c.b16 %v880, %v880
        %v897 = vpack.c.b16 %v881, %v881
        %v898 = vpack.c.b16 %v882, %v882
        %v899 = vpack.c.b16 %v883, %v883
        %916 = vst [vmem:[%s275] sm:$0xf] %v884
        %917 = vst [vmem:[%s275 + $0x4] sm:$0xf] %v885
        %918 = vst [vmem:[%s275 + $0x8] sm:$0xf] %v886
        %919 = vst [vmem:[%s275 + $0xc] sm:$0xf] %v887
        %920 = vst [vmem:[%s275 + $0x10] sm:$0xf] %v888
        %921 = vst [vmem:[%s275 + $0x14] sm:$0xf] %v889
        %922 = vst [vmem:[%s275 + $0x18] sm:$0xf] %v890
        %923 = vst [vmem:[%s275 + $0x1c] sm:$0xf] %v891
        %924 = vst [vmem:[%s275 + $0x20] sm:$0xf] %v892
        %925 = vst [vmem:[%s275 + $0x24] sm:$0xf] %v893
        %926 = vst [vmem:[%s275 + $0x28] sm:$0xf] %v894
        %927 = vst [vmem:[%s275 + $0x2c] sm:$0xf] %v895
        %928 = vst [vmem:[%s275 + $0x30] sm:$0xf] %v896
        %929 = vst [vmem:[%s275 + $0x34] sm:$0xf] %v897
        %930 = vst [vmem:[%s275 + $0x38] sm:$0xf] %v898
        %931 = vst [vmem:[%s275 + $0x3c] sm:$0xf] %v899
        %s932 = sand.u32 %s103, 1
        %s933 = scalar_lea.sflag [#allocation4], %s932
        %s934 = sand.u32 %s103, 1
        %s935 = smul.addr %s934, 64
        %s936 = scalar_lea.vmem [#allocation7], %s935
        %s937 = sand.u32 %s27, 1
        %s938 = scalar_lea.sflag [#allocation9], %s937
        %s939 = sand.u32 %s129, 1
        %s940 = smul.addr %s939, 64
        %s941 = scalar_lea.vmem [#allocation8], %s940
        %s942 = sand.u32 %s27, 1
        %s943 = scalar_lea.sflag [#allocation9], %s942
        %s944 = sand.u32 %s155, 1
        %s945 = smul.addr %s944, 64
        %s946 = scalar_lea.vmem [#allocation10], %s945
        // Predicated region
        $region41: #{tpu_custom_call.1} parent=31 // pred_check
          %p947 = pneg %p113
        $region42: #{tpu_custom_call.1} parent=31 // pred_check_branch
          %949 = sbr.rel (%p947) target = $region44
        $region43: #{tpu_custom_call.1} parent=31 // pred_region
          %s950 = smul.u32 16, %s27
          %s952 = ssub.s32 1024, 1024
          %953 = vsyncadd %s933, %s952
          %s954 = smul.addr %s950, 64
          %s955 = scalar_lea.hbm %s3, %s954
          %s956 = sshll.u32 %s936, 4
          %s957 = int_to_ptr.vmem [resolvable:$true] %s956
          %962 = dma.vmem_to_hbm [thread:$0]  %s957, 1024, %s955, %s933, 64, 64, 4
        $region44: #{tpu_custom_call.1} parent=31 // pred_fallthru
          _
        // Predicated region
        $region45: #{tpu_custom_call.1} parent=31 // pred_check
          %p963 = pneg %p139
        $region46: #{tpu_custom_call.1} parent=31 // pred_check_branch
          %965 = sbr.rel (%p963) target = $region48
        $region47: #{tpu_custom_call.1} parent=31 // pred_region
          %s966 = smul.u32 16, %s27
          %s968 = ssub.s32 1024, 1024
          %969 = vsyncadd %s938, %s968
          %s970 = smul.addr %s966, 64
          %s971 = scalar_lea.hbm %s4, %s970
          %s972 = sshll.u32 %s941, 4
          %s973 = int_to_ptr.vmem [resolvable:$true] %s972
          %978 = dma.vmem_to_hbm [thread:$0]  %s973, 1024, %s971, %s938, 64, 64, 4
        $region48: #{tpu_custom_call.1} parent=31 // pred_fallthru
          _
        // Predicated region
        $region49: #{tpu_custom_call.1} parent=31 // pred_check
          %p979 = pneg %p165
        $region50: #{tpu_custom_call.1} parent=31 // pred_check_branch
          %981 = sbr.rel (%p979) target = $region52
        $region51: #{tpu_custom_call.1} parent=31 // pred_region
          %s982 = smul.u32 16, %s27
          %s984 = ssub.s32 1024, 1024
          %985 = vsyncadd %s943, %s984
          %s986 = smul.addr %s982, 64
          %s987 = scalar_lea.hbm %s5, %s986
          %s988 = sshll.u32 %s946, 4
          %s989 = int_to_ptr.vmem [resolvable:$true] %s988
          %994 = dma.vmem_to_hbm [thread:$0]  %s989, 1024, %s987, %s943, 64, 64, 4
        $region52: #{tpu_custom_call.1} parent=31 // pred_fallthru
          _
      $region32: #{tpu_custom_call.1} parent=5 // pred_fallthru
        _
      %p995 = scmp.le.s32.totalorder 2, %s22
      // Predicated region
      $region53: #{tpu_custom_call.1} parent=5 // pred_check
        %p996 = pneg %p995
      $region54: #{tpu_custom_call.1} parent=5 // pred_check_branch
        %998 = sbr.rel (%p996) target = $region56
      $region55: #{tpu_custom_call.1} parent=5 // pred_region
        %s999 = ssub.s32 %s22, 2
        // Predicated region
        $region57: #{tpu_custom_call.1} parent=55 // pred_check
          %p1000 = pneg %p119
        $region58: #{tpu_custom_call.1} parent=55 // pred_check_branch
          %1002 = sbr.rel (%p1000) target = $region60
        $region59: #{tpu_custom_call.1} parent=55 // pred_region
          %s1003 = sand.u32 %s104, 1
          %s1004 = scalar_lea.sflag [#allocation4], %s1003
          %s1005 = sand.u32 %s104, 1
          %s1006 = smul.addr %s1005, 64
          %s1007 = scalar_lea.vmem [#allocation7], %s1006
          %1008 = dma.done %s1004, 1024
        $region60: #{tpu_custom_call.1} parent=55 // pred_fallthru
          _
        // Predicated region
        $region61: #{tpu_custom_call.1} parent=55 // pred_check
          %p1009 = pneg %p145
        $region62: #{tpu_custom_call.1} parent=55 // pred_check_branch
          %1011 = sbr.rel (%p1009) target = $region64
        $region63: #{tpu_custom_call.1} parent=55 // pred_region
          %s1012 = sand.u32 %s28, 1
          %s1013 = scalar_lea.sflag [#allocation9], %s1012
          %s1014 = sand.u32 %s130, 1
          %s1015 = smul.addr %s1014, 64
          %s1016 = scalar_lea.vmem [#allocation8], %s1015
          %1017 = dma.done %s1013, 1024
        $region64: #{tpu_custom_call.1} parent=55 // pred_fallthru
          _
        // Predicated region
        $region65: #{tpu_custom_call.1} parent=55 // pred_check
          %p1018 = pneg %p171
        $region66: #{tpu_custom_call.1} parent=55 // pred_check_branch
          %1020 = sbr.rel (%p1018) target = $region68
        $region67: #{tpu_custom_call.1} parent=55 // pred_region
          %s1021 = sand.u32 %s28, 1
          %s1022 = scalar_lea.sflag [#allocation9], %s1021
          %s1023 = sand.u32 %s156, 1
          %s1024 = smul.addr %s1023, 64
          %s1025 = scalar_lea.vmem [#allocation10], %s1024
          %1026 = dma.done %s1022, 1024
        $region68: #{tpu_custom_call.1} parent=55 // pred_fallthru
          _
      $region56: #{tpu_custom_call.1} parent=5 // pred_fallthru
        _
    $region6: #{tpu_custom_call.1} parent=1 // loop_footer
      %s26 = sadd.s32 1, %s22
    $region7: #{tpu_custom_call.1} parent=1 // loop_footer_branch
      %21 = sbr.rel target = $region3
    $region8: #{tpu_custom_call.1} parent=1 // loop_exit
      _
    %1027 = vsyncpa [#allocation3], 1
    %s1028 = scalar_lea.sflag [#allocation3], 1
    %1029 = vsyncpa %s1028, 1
    %1030 = vsyncpa [#allocation6], 1
    %1031 = vsyncpa [#allocation4], 1
    %s1032 = scalar_lea.sflag [#allocation4], 1
    %1033 = vsyncpa %s1032, 1
    %1034 = vsyncpa [#allocation9], 1
    %s1035 = scalar_lea.sflag [#allocation9], 1
    %1036 = vsyncpa %s1035, 1

// kernel: tpu_custom_call.1
$region0: #{tpu_custom_call.1}
  #allocation0 [shape = 'u32[]', space=smem, size = 0x4, offset = 0x4, fixed_abs, tag = 'smem constant byte address 0x4 - core index']
  #allocation1 [shape = 'u32[144,128]{1,0:T(1,128)}', space=vmem, size = 0x12000, scoped, tag = 'internal scratch']
  %s0 = inlined_call_operand.hbm [shape: f32[512,128], index: 0, kind: input, shape index: {}]
  %s1 = inlined_call_operand.hbm [shape: bf16[128,384], index: 1, kind: input, shape index: {}]
  %s2 = inlined_call_operand.vmem [shape: f32[1,384], index: 2, kind: input, shape index: {}]
  %s3 = inlined_call_operand.hbm [shape: bf16[512,128], index: 3, kind: output, shape index: {0}]
  %s4 = inlined_call_operand.hbm [shape: bf16[512,128], index: 4, kind: output, shape index: {1}]
  %s5 = inlined_call_operand.hbm [shape: bf16[512,128], index: 5, kind: output, shape index: {2}]
  %6 = xla_tuple %s3, %s4, %s5
  %s7 = sld [smem:[#allocation0]]
  $region69: #{tpu_custom_call.1} parent=0
    _
  %s9 = ssub.s32 1, %s7
  %s10 = scalar_select 0, %s9, %s7
  $region1: #{tpu_custom_call.1} parent=0
    #allocation2 [shape = 'u8[131072]{0}', space=vmem, size = 0x20000, scoped, tag = 'input window, operand 0']
    #allocation3 [shape = 's32[2]{0}', space=sflag, size = 0x8, scoped, tag = 'scoped memory for tpu_custom_call.1']
    #allocation4 [shape = 's32[2]{0}', space=sflag, size = 0x8, scoped, tag = 'scoped memory for tpu_custom_call.1']
    #allocation5 [shape = 'u8[98304]{0}', space=vmem, size = 0x18000, scoped, tag = 'input window, operand 1, single buffered']
    #allocation6 [shape = 's32[1]{0}', space=sflag, size = 0x4, scoped, tag = 'scoped memory for tpu_custom_call.1']
    #allocation7 [shape = 'u8[65536]{0}', space=vmem, size = 0x10000, scoped, tag = 'output window, operand 0']
    #allocation8 [shape = 'u8[65536]{0}', space=vmem, size = 0x10000, scoped, tag = 'output window, operand 1']
    #allocation9 [shape = 's32[2]{0}', space=sflag, size = 0x8, scoped, tag = 'scoped memory for tpu_custom_call.1']
    #allocation10 [shape = 'u8[65536]{0}', space=vmem, size = 0x10000, scoped, tag = 'output window, operand 2']
    %11 = vsyncpa [#allocation3], 0
    %s12 = scalar_lea.sflag [#allocation3], 1
    %13 = vsyncpa %s12, 0
    %14 = vsyncpa [#allocation6], 0
    %15 = vsyncpa [#allocation4], 0
    %s16 = scalar_lea.sflag [#allocation4], 1
    %17 = vsyncpa %s16, 0
    %18 = vsyncpa [#allocation9], 0
    %s19 = scalar_lea.sflag [#allocation9], 1
    %20 = vsyncpa %s19, 0
    loop: start=0, step=1, limit=6
    $region2: #{tpu_custom_call.1} parent=1 // loop_pre_header
      _
    $region3: #{tpu_custom_call.1} parent=1 // loop_header
      %s22 = sphi 0, %s26
      %p23 = scmp.ge.s32.totalorder %s22, 6
      %s32 = sphi 0, %s34
      %s35 = sphi 0, %s32
      %s36 = sphi 0, %s35
      %s52 = sphi 0, %s36
      %s56 = sphi 0, %s56
      %s58 = sphi 0, %s56
      %s59 = sphi 0, %s58
      %s73 = sphi 0, %s59
      %s77 = sphi 0, %s77
      %s79 = sphi 0, %s77
      %s80 = sphi 0, %s79
      %s94 = sphi 0, %s80
      %s100 = sphi 0, %s102
      %s103 = sphi 0, %s100
      %s104 = sphi 0, %s103
      %s120 = sphi 0, %s104
      %s126 = sphi 0, %s128
      %s129 = sphi 0, %s126
      %s130 = sphi 0, %s129
      %s146 = sphi 0, %s130
      %s152 = sphi 0, %s154
      %s155 = sphi 0, %s152
      %s156 = sphi 0, %s155
      %s172 = sphi 0, %s156
    $region4: #{tpu_custom_call.1} parent=1 // loop_header_branch
      %25 = sbr.rel (%p23) target = $region8
    $region5: #{tpu_custom_call.1} parent=1 // loop_body
      %s27 = ssub.s32 %s22, 1
      %s28 = ssub.s32 %s22, 2
      %s29 = sadd.s32 %s22, 1
      %s30 = ssub.s32 %s22, %s29
      %p31 = scmp.eq.s32.totalorder %s30, 0
      %s33 = sadd.s32 %s32, 1
      %s34 = scalar_select %p31, %s32, %s33
      %p37 = pneg %p31
      %p38 = scmp.eq.s32.totalorder %s22, 3
      %p39 = por %p37, %p38
      %p40 = scmp.ne.s32.totalorder %s32, %s35
      %p41 = scmp.eq.s32.totalorder %s22, 0
      %p42 = por %p40, %p41
      %p43 = scmp.ne.s32.totalorder %s32, %s35
      %p44 = scmp.eq.s32.totalorder %s27, 3
      %p45 = por %p43, %p44
      %p46 = scmp.ne.s32.totalorder %s35, %s36
      %p47 = scmp.eq.s32.totalorder %s27, 0
      %p48 = por %p46, %p47
      %p49 = scmp.ne.s32.totalorder %s35, %s36
      %p50 = scmp.eq.s32.totalorder %s28, 3
      %p51 = por %p49, %p50
      %p53 = scmp.ne.s32.totalorder %s36, %s52
      %p54 = scmp.eq.s32.totalorder %s28, 0
      %p55 = por %p53, %p54
      %s57 = sadd.s32 %s56, 1
      %p60 = scmp.eq.s32.totalorder %s22, 3
      %p61 = scmp.ne.s32.totalorder %s56, %s58
      %p62 = scmp.eq.s32.totalorder %s22, 0
      %p63 = por %p61, %p62
      %p64 = scmp.ne.s32.totalorder %s56, %s58
      %p65 = scmp.eq.s32.totalorder %s27, 3
      %p66 = por %p64, %p65
      %p67 = scmp.ne.s32.totalorder %s58, %s59
      %p68 = scmp.eq.s32.totalorder %s27, 0
      %p69 = por %p67, %p68
      %p70 = scmp.ne.s32.totalorder %s58, %s59
      %p71 = scmp.eq.s32.totalorder %s28, 3
      %p72 = por %p70, %p71
      %p74 = scmp.ne.s32.totalorder %s59, %s73
      %p75 = scmp.eq.s32.totalorder %s28, 0
      %p76 = por %p74, %p75
      %s78 = sadd.s32 %s77, 1
      %p81 = scmp.eq.s32.totalorder %s22, 3
      %p82 = scmp.ne.s32.totalorder %s77, %s79
      %p83 = scmp.eq.s32.totalorder %s22, 0
      %p84 = por %p82, %p83
      %p85 = scmp.ne.s32.totalorder %s77, %s79
      %p86 = scmp.eq.s32.totalorder %s27, 3
      %p87 = por %p85, %p86
      %p88 = scmp.ne.s32.totalorder %s79, %s80
      %p89 = scmp.eq.s32.totalorder %s27, 0
      %p90 = por %p88, %p89
      %p91 = scmp.ne.s32.totalorder %s79, %s80
      %p92 = scmp.eq.s32.totalorder %s28, 3
      %p93 = por %p91, %p92
      %p95 = scmp.ne.s32.totalorder %s80, %s94
      %p96 = scmp.eq.s32.totalorder %s28, 0
      %p97 = por %p95, %p96
      %s98 = ssub.s32 %s22, %s29
      %p99 = scmp.eq.s32.totalorder %s98, 0
      %s101 = sadd.s32 %s100, 1
      %s102 = scalar_select %p99, %s100, %s101
      %p105 = pneg %p99
      %p106 = scmp.eq.s32.totalorder %s22, 3
      %p107 = por %p105, %p106
      %p108 = scmp.ne.s32.totalorder %s100, %s103
      %p109 = scmp.eq.s32.totalorder %s22, 0
      %p110 = por %p108, %p109
      %p111 = scmp.ne.s32.totalorder %s100, %s103
      %p112 = scmp.eq.s32.totalorder %s27, 3
      %p113 = por %p111, %p112
      %p114 = scmp.ne.s32.totalorder %s103, %s104
      %p115 = scmp.eq.s32.totalorder %s27, 0
      %p116 = por %p114, %p115
      %p117 = scmp.ne.s32.totalorder %s103, %s104
      %p118 = scmp.eq.s32.totalorder %s28, 3
      %p119 = por %p117, %p118
      %p121 = scmp.ne.s32.totalorder %s104, %s120
      %p122 = scmp.eq.s32.totalorder %s28, 0
      %p123 = por %p121, %p122
      %s124 = ssub.s32 %s22, %s29
      %p125 = scmp.eq.s32.totalorder %s124, 0
      %s127 = sadd.s32 %s126, 1
      %s128 = scalar_select %p125, %s126, %s127
      %p131 = pneg %p125
      %p132 = scmp.eq.s32.totalorder %s22, 3
      %p133 = por %p131, %p132
      %p134 = scmp.ne.s32.totalorder %s126, %s129
      %p135 = scmp.eq.s32.totalorder %s22, 0
      %p136 = por %p134, %p135
      %p137 = scmp.ne.s32.totalorder %s126, %s129
      %p138 = scmp.eq.s32.totalorder %s27, 3
      %p139 = por %p137, %p138
      %p140 = scmp.ne.s32.totalorder %s129, %s130
      %p141 = scmp.eq.s32.totalorder %s27, 0
      %p142 = por %p140, %p141
      %p143 = scmp.ne.s32.totalorder %s129, %s130
      %p144 = scmp.eq.s32.totalorder %s28, 3
      %p145 = por %p143, %p144
      %p147 = scmp.ne.s32.totalorder %s130, %s146
      %p148 = scmp.eq.s32.totalorder %s28, 0
      %p149 = por %p147, %p148
      %s150 = ssub.s32 %s22, %s29
      %p151 = scmp.eq.s32.totalorder %s150, 0
      %s153 = sadd.s32 %s152, 1
      %s154 = scalar_select %p151, %s152, %s153
      %p157 = pneg %p151
      %p158 = scmp.eq.s32.totalorder %s22, 3
      %p159 = por %p157, %p158
      %p160 = scmp.ne.s32.totalorder %s152, %s155
      %p161 = scmp.eq.s32.totalorder %s22, 0
      %p162 = por %p160, %p161
      %p163 = scmp.ne.s32.totalorder %s152, %s155
      %p164 = scmp.eq.s32.totalorder %s27, 3
      %p165 = por %p163, %p164
      %p166 = scmp.ne.s32.totalorder %s155, %s156
      %p167 = scmp.eq.s32.totalorder %s27, 0
      %p168 = por %p166, %p167
      %p169 = scmp.ne.s32.totalorder %s155, %s156
      %p170 = scmp.eq.s32.totalorder %s28, 3
      %p171 = por %p169, %p170
      %p173 = scmp.ne.s32.totalorder %s156, %s172
      %p174 = scmp.eq.s32.totalorder %s28, 0
      %p175 = por %p173, %p174
      %p176 = scmp.le.s32.totalorder 1, %s22
      %p177 = scmp.lt.s32.totalorder %s22, 5
      %p178 = pnand %p176, %p177
      %p179 = pneg %p178
      // Predicated region
      $region9: #{tpu_custom_call.1} parent=5 // pred_check
        _
      $region10: #{tpu_custom_call.1} parent=5 // pred_check_branch
        %181 = sbr.rel (%p178) target = $region12
      $region11: #{tpu_custom_call.1} parent=5 // pred_region
        %s182 = ssub.s32 %s22, 1
        // Predicated region
        $region13: #{tpu_custom_call.1} parent=11 // pred_check
          %p183 = pneg %p69
        $region14: #{tpu_custom_call.1} parent=11 // pred_check_branch
          %185 = sbr.rel (%p183) target = $region16
        $region15: #{tpu_custom_call.1} parent=11 // pred_region
          %s187 = ssub.s32 3072, 3072
          %188 = vsyncadd [#allocation6], %s187
          %s189 = sshll.u32 [#allocation5], 4
          %s190 = int_to_ptr.vmem [resolvable:$true] %s189
          %195 = dma.hbm_to_vmem [thread:$0]  %s1, 3072, %s190, [#allocation6], 192, 192, 12
        $region16: #{tpu_custom_call.1} parent=11 // pred_fallthru
          _
        // Predicated region
        $region17: #{tpu_custom_call.1} parent=11 // pred_check
          %p196 = pneg %p90
        $region18: #{tpu_custom_call.1} parent=11 // pred_check_branch
          %198 = sbr.rel (%p196) target = $region20
        $region19: #{tpu_custom_call.1} parent=11 // pred_region
          _
        $region20: #{tpu_custom_call.1} parent=11 // pred_fallthru
          _
      $region12: #{tpu_custom_call.1} parent=5 // pred_fallthru
        _
      %p199 = scmp.lt.s32.totalorder %s22, 4
      // Predicated region
      $region21: #{tpu_custom_call.1} parent=5 // pred_check
        %p200 = pneg %p199
      $region22: #{tpu_custom_call.1} parent=5 // pred_check_branch
        %202 = sbr.rel (%p200) target = $region24
      $region23: #{tpu_custom_call.1} parent=5 // pred_region
        // Predicated region
        $region25: #{tpu_custom_call.1} parent=23 // pred_check
          %p203 = pneg %p42
        $region26: #{tpu_custom_call.1} parent=23 // pred_check_branch
          %205 = sbr.rel (%p203) target = $region28
        $region27: #{tpu_custom_call.1} parent=23 // pred_region
          %s206 = sand.u32 %s32, 1
          %s207 = scalar_lea.sflag [#allocation3], %s206
          %s208 = sand.u32 %s32, 1
          %s209 = smul.addr %s208, 128
          %s210 = scalar_lea.vmem [#allocation2], %s209
          %s211 = smul.u32 16, %s22
          %s213 = ssub.s32 2048, 2048
          %214 = vsyncadd %s207, %s213
          %s215 = smul.addr %s211, 128
          %s216 = scalar_lea.hbm %s0, %s215
          %s217 = sshll.u32 %s210, 4
          %s218 = int_to_ptr.vmem [resolvable:$true] %s217
          %223 = dma.hbm_to_vmem [thread:$0]  %s216, 2048, %s218, %s207, 128, 128, 8
        $region28: #{tpu_custom_call.1} parent=23 // pred_fallthru
          _
      $region24: #{tpu_custom_call.1} parent=5 // pred_fallthru
        _
      %p224 = scmp.le.s32.totalorder 1, %s22
      %p225 = scmp.lt.s32.totalorder %s22, 5
      %p226 = pnand %p224, %p225
      %p227 = pneg %p226
      // Predicated region
      $region29: #{tpu_custom_call.1} parent=5 // pred_check
        _
      $region30: #{tpu_custom_call.1} parent=5 // pred_check_branch
        %229 = sbr.rel (%p226) target = $region32
      $region31: #{tpu_custom_call.1} parent=5 // pred_region
        %s230 = ssub.s32 %s22, 1
        %s231 = sand.u32 %s35, 1
        %s232 = scalar_lea.sflag [#allocation3], %s231
        %s233 = sand.u32 %s35, 1
        %s234 = smul.addr %s233, 128
        %s235 = scalar_lea.vmem [#allocation2], %s234
        // Predicated region
        $region33: #{tpu_custom_call.1} parent=31 // pred_check
          %p236 = pneg %p48
        $region34: #{tpu_custom_call.1} parent=31 // pred_check_branch
          %238 = sbr.rel (%p236) target = $region36
        $region35: #{tpu_custom_call.1} parent=31 // pred_region
          %239 = dma.done %s232, 2048
        $region36: #{tpu_custom_call.1} parent=31 // pred_fallthru
          _
        // Predicated region
        $region37: #{tpu_custom_call.1} parent=31 // pred_check
          %p240 = pneg %p69
        $region38: #{tpu_custom_call.1} parent=31 // pred_check_branch
          %242 = sbr.rel (%p240) target = $region40
        $region39: #{tpu_custom_call.1} parent=31 // pred_region
          %243 = dma.done [#allocation6], 3072
        $region40: #{tpu_custom_call.1} parent=31 // pred_fallthru
          _
        %s244 = sand.u32 %s35, 1
        %s245 = scalar_lea.sflag [#allocation3], %s244
        %s246 = sand.u32 %s35, 1
        %s247 = smul.addr %s246, 128
        %s248 = scalar_lea.vmem [#allocation2], %s247
        %p249 = pneg %p48
        %p250 = pneg %p45
        %p251 = pneg %p69
        %p252 = pneg %p66
        %p253 = pneg %p90
        %p254 = pneg %p87
        %p255 = pneg %p116
        %p256 = pneg %p113
        %s257 = sand.u32 %s103, 1
        %s258 = scalar_lea.sflag [#allocation4], %s257
        %s259 = sand.u32 %s103, 1
        %s260 = smul.addr %s259, 64
        %s261 = scalar_lea.vmem [#allocation7], %s260
        %p262 = pneg %p142
        %p263 = pneg %p139
        %s264 = sand.u32 %s27, 1
        %s265 = scalar_lea.sflag [#allocation9], %s264
        %s266 = sand.u32 %s129, 1
        %s267 = smul.addr %s266, 64
        %s268 = scalar_lea.vmem [#allocation8], %s267
        %p269 = pneg %p168
        %p270 = pneg %p165
        %s271 = sand.u32 %s27, 1
        %s272 = scalar_lea.sflag [#allocation9], %s271
        %s273 = sand.u32 %s155, 1
        %s274 = smul.addr %s273, 64
        %s275 = scalar_lea.vmem [#allocation10], %s274
        %s276 = smul.u32 16, %s27
        %s277 = smul.u32 16, %s27
        %s278 = smul.u32 16, %s27
        %s279 = smul.u32 16, %s27
        %v281 = vld [vmem:[%s235] sm:$0xff]
        %v282 = vld [vmem:[%s235 + $0x8] sm:$0xff]
        %v283 = vld [vmem:[%s235 + $0x10] sm:$0xff]
        %v284 = vld [vmem:[%s235 + $0x18] sm:$0xff]
        %v285 = vld [vmem:[%s235 + $0x20] sm:$0xff]
        %v286 = vld [vmem:[%s235 + $0x28] sm:$0xff]
        %v287 = vld [vmem:[%s235 + $0x30] sm:$0xff]
        %v288 = vld [vmem:[%s235 + $0x38] sm:$0xff]
        %v289 = vld [vmem:[%s235 + $0x40] sm:$0xff]
        %v290 = vld [vmem:[%s235 + $0x48] sm:$0xff]
        %v291 = vld [vmem:[%s235 + $0x50] sm:$0xff]
        %v292 = vld [vmem:[%s235 + $0x58] sm:$0xff]
        %v293 = vld [vmem:[%s235 + $0x60] sm:$0xff]
        %v294 = vld [vmem:[%s235 + $0x68] sm:$0xff]
        %v295 = vld [vmem:[%s235 + $0x70] sm:$0xff]
        %v296 = vld [vmem:[%s235 + $0x78] sm:$0xff]
        %v297 = vpack.c.bf16 %v282, %v281
        %v298 = vpack.c.bf16 %v284, %v283
        %v299 = vpack.c.bf16 %v286, %v285
        %v300 = vpack.c.bf16 %v288, %v287
        %v301 = vpack.c.bf16 %v290, %v289
        %v302 = vpack.c.bf16 %v292, %v291
        %v303 = vpack.c.bf16 %v294, %v293
        %v304 = vpack.c.bf16 %v296, %v295
        %v305 = vld [vmem:[#allocation5] sm:$0xff]
        %v306 = vld [vmem:[#allocation5 + $0x8] sm:$0xf]
        %v307 = vld [vmem:[#allocation5 + $0xc] sm:$0xff]
        %v308 = vld [vmem:[#allocation5 + $0x14] sm:$0xf]
        %v309 = vld [vmem:[#allocation5 + $0x18] sm:$0xff]
        %v310 = vld [vmem:[#allocation5 + $0x20] sm:$0xf]
        %v311 = vld [vmem:[#allocation5 + $0x24] sm:$0xff]
        %v312 = vld [vmem:[#allocation5 + $0x2c] sm:$0xf]
        %v313 = vld [vmem:[#allocation5 + $0x30] sm:$0xff]
        %v314 = vld [vmem:[#allocation5 + $0x38] sm:$0xf]
        %v315 = vld [vmem:[#allocation5 + $0x3c] sm:$0xff]
        %v316 = vld [vmem:[#allocation5 + $0x44] sm:$0xf]
        %v317 = vld [vmem:[#allocation5 + $0x48] sm:$0xff]
        %v318 = vld [vmem:[#allocation5 + $0x50] sm:$0xf]
        %v319 = vld [vmem:[#allocation5 + $0x54] sm:$0xff]
        %v320 = vld [vmem:[#allocation5 + $0x5c] sm:$0xf]
        %v321 = vld [vmem:[#allocation5 + $0x60] sm:$0xff]
        %v322 = vld [vmem:[#allocation5 + $0x68] sm:$0xf]
        %v323 = vld [vmem:[#allocation5 + $0x6c] sm:$0xff]
        %v324 = vld [vmem:[#allocation5 + $0x74] sm:$0xf]
        %v325 = vld [vmem:[#allocation5 + $0x78] sm:$0xff]
        %v326 = vld [vmem:[#allocation5 + $0x80] sm:$0xf]
        %v327 = vld [vmem:[#allocation5 + $0x84] sm:$0xff]
        %v328 = vld [vmem:[#allocation5 + $0x8c] sm:$0xf]
        %v329 = vld [vmem:[#allocation5 + $0x90] sm:$0xff]
        %v330 = vld [vmem:[#allocation5 + $0x98] sm:$0xf]
        %v331 = vld [vmem:[#allocation5 + $0x9c] sm:$0xff]
        %v332 = vld [vmem:[#allocation5 + $0xa4] sm:$0xf]
        %v333 = vld [vmem:[#allocation5 + $0xa8] sm:$0xff]
        %v334 = vld [vmem:[#allocation5 + $0xb0] sm:$0xf]
        %v335 = vld [vmem:[#allocation5 + $0xb4] sm:$0xff]
        %v336 = vld [vmem:[#allocation5 + $0xbc] sm:$0xf]
        %v337 = vld [vmem:[%s2] sm:$0x7]
        %v339 = vlaneseq
        %v340 = vshrl.u32 %v339, 7
        %v341 = vsub.s32 0, %v340
        %v342 = vrot.slane %v337, %v341
        %v343 = vlaneseq
        %v344 = vshrl.u32 %v343, 7
        %v345 = vsub.s32 1, %v344
        %v346 = vrot.slane %v337, %v345
        %v347 = vlaneseq
        %v348 = vshrl.u32 %v347, 7
        %v349 = vsub.s32 2, %v348
        %v350 = vrot.slane %v337, %v349
        %v386 = vunpack.c.l.b16 %v305
        %v387 = vunpack.c.h.b16 %v305
        %v388 = vunpack.c.l.b16 %v306
        %v389 = vunpack.c.l.b16 %v307
        %v390 = vunpack.c.h.b16 %v307
        %v391 = vunpack.c.l.b16 %v308
        %v392 = vunpack.c.l.b16 %v309
        %v393 = vunpack.c.h.b16 %v309
        %v394 = vunpack.c.l.b16 %v310
        %v395 = vunpack.c.l.b16 %v311
        %v396 = vunpack.c.h.b16 %v311
        %v397 = vunpack.c.l.b16 %v312
        %v398 = vunpack.c.l.b16 %v313
        %v399 = vunpack.c.h.b16 %v313
        %v400 = vunpack.c.l.b16 %v314
        %v401 = vunpack.c.l.b16 %v315
        %v402 = vunpack.c.h.b16 %v315
        %v403 = vunpack.c.l.b16 %v316
        %v404 = vunpack.c.l.b16 %v317
        %v405 = vunpack.c.h.b16 %v317
        %v406 = vunpack.c.l.b16 %v318
        %v407 = vunpack.c.l.b16 %v319
        %v408 = vunpack.c.h.b16 %v319
        %v409 = vunpack.c.l.b16 %v320
        %v410 = vunpack.c.l.b16 %v321
        %v411 = vunpack.c.h.b16 %v321
        %v412 = vunpack.c.l.b16 %v322
        %v413 = vunpack.c.l.b16 %v323
        %v414 = vunpack.c.h.b16 %v323
        %v415 = vunpack.c.l.b16 %v324
        %v416 = vunpack.c.l.b16 %v325
        %v417 = vunpack.c.h.b16 %v325
        %v418 = vunpack.c.l.b16 %v326
        %v419 = vunpack.c.l.b16 %v327
        %v420 = vunpack.c.h.b16 %v327
        %v421 = vunpack.c.l.b16 %v328
        %v422 = vunpack.c.l.b16 %v329
        %v423 = vunpack.c.h.b16 %v329
        %v424 = vunpack.c.l.b16 %v330
        %v425 = vunpack.c.l.b16 %v331
        %v426 = vunpack.c.h.b16 %v331
        %v427 = vunpack.c.l.b16 %v332
        %v428 = vunpack.c.l.b16 %v333
        %v429 = vunpack.c.h.b16 %v333
        %v430 = vunpack.c.l.b16 %v334
        %v431 = vunpack.c.l.b16 %v335
        %v432 = vunpack.c.h.b16 %v335
        %v433 = vunpack.c.l.b16 %v336
        %v434 = vpack.c.b16 %v389, %v386
        %v435 = vpack.c.b16 %v390, %v387
        %v436 = vpack.c.b16 %v391, %v388
        %v437 = vpack.c.b16 %v395, %v392
        %v438 = vpack.c.b16 %v396, %v393
        %v439 = vpack.c.b16 %v397, %v394
        %v440 = vpack.c.b16 %v401, %v398
        %v441 = vpack.c.b16 %v402, %v399
        %v442 = vpack.c.b16 %v403, %v400
        %v443 = vpack.c.b16 %v407, %v404
        %v444 = vpack.c.b16 %v408, %v405
        %v445 = vpack.c.b16 %v409, %v406
        %v446 = vpack.c.b16 %v413, %v410
        %v447 = vpack.c.b16 %v414, %v411
        %v448 = vpack.c.b16 %v415, %v412
        %v449 = vpack.c.b16 %v419, %v416
        %v450 = vpack.c.b16 %v420, %v417
        %v451 = vpack.c.b16 %v421, %v418
        %v452 = vpack.c.b16 %v425, %v422
        %v453 = vpack.c.b16 %v426, %v423
        %v454 = vpack.c.b16 %v427, %v424
        %v455 = vpack.c.b16 %v431, %v428
        %v456 = vpack.c.b16 %v432, %v429
        %v457 = vpack.c.b16 %v433, %v430
        %482 = vmatprep.subr.bf16.mxu0 %v456
        %483 = vmatpush1.bf16.msra.mxu0 %v455
        %484 = vmatprep.subr.bf16.mxu0 %v453
        %485 = vmatpush1.bf16.msra.mxu0 %v452
        %486 = vmatprep.subr.bf16.mxu0 %v450
        %487 = vmatpush1.bf16.msra.mxu0 %v449
        %488 = vmatprep.subr.bf16.mxu0 %v447
        %489 = vmatpush1.bf16.msra.mxu0 %v446
        %490 = vmatprep.subr.bf16.mxu0 %v444
        %491 = vmatpush1.bf16.msra.mxu0 %v443
        %492 = vmatprep.subr.bf16.mxu0 %v441
        %493 = vmatpush1.bf16.msra.mxu0 %v440
        %494 = vmatprep.subr.bf16.mxu0 %v438
        %495 = vmatpush1.bf16.msra.mxu0 %v437
        %496 = vmatprep.subr.bf16.mxu0 %v435
        %497 = vmatpush1.bf16.msra.mxu0 %v434
        %498 = vmatprep.subr.bf16.mxu0 0
        %499 = vmatpush2.bf16.msra.mxu0 0
        %500 = vmatprep.subr.bf16.mxu0 0
        %501 = vmatpush2.bf16.msra.mxu0 0
        %502 = vmatprep.subr.bf16.mxu0 0
        %503 = vmatpush2.bf16.msra.mxu0 0
        %504 = vmatprep.subr.bf16.mxu0 0
        %505 = vmatpush2.bf16.msra.mxu0 0
        %506 = vmatprep.subr.bf16.mxu0 0
        %507 = vmatpush2.bf16.msra.mxu0 0
        %508 = vmatprep.subr.bf16.mxu0 0
        %509 = vmatpush2.bf16.msra.mxu0 0
        %510 = vmatprep.subr.bf16.mxu0 0
        %511 = vmatpush2.bf16.msra.mxu0 0
        %512 = vmatprep.subr.bf16.mxu0 0
        %513 = vmatpush2.bf16.msra.mxu0 0
        %514 = vmatprep.mubr.bf16.mxu0 0
        %515 = vmatmul.mubr.bf16.gmra.mxu0 %v297
        %v516 = vpop.f32.mrf.mxu0
        %v517 = vadd.f32 %v342, %v516
        %v518 = vpop.f32.mrf.mxu0
        %v519 = vadd.f32 %v346, %v518
        %v520 = vpop.f32.mrf.mxu0
        %v521 = vadd.f32 %v342, %v520
        %v522 = vpop.f32.mrf.mxu0
        %v523 = vadd.f32 %v346, %v522
        %524 = vmatprep.mubr.bf16.mxu0 0
        %525 = vmatmul.mubr.bf16.gmra.mxu0 %v298
        %v526 = vpop.f32.mrf.mxu0
        %v527 = vadd.f32 %v342, %v526
        %v528 = vpop.f32.mrf.mxu0
        %v529 = vadd.f32 %v346, %v528
        %v530 = vpop.f32.mrf.mxu0
        %v531 = vadd.f32 %v342, %v530
        %v532 = vpop.f32.mrf.mxu0
        %v533 = vadd.f32 %v346, %v532
        %534 = vmatprep.mubr.bf16.mxu0 0
        %535 = vmatmul.mubr.bf16.gmra.mxu0 %v299
        %v536 = vpop.f32.mrf.mxu0
        %v537 = vadd.f32 %v342, %v536
        %v538 = vpop.f32.mrf.mxu0
        %v539 = vadd.f32 %v346, %v538
        %v540 = vpop.f32.mrf.mxu0
        %v541 = vadd.f32 %v342, %v540
        %v542 = vpop.f32.mrf.mxu0
        %v543 = vadd.f32 %v346, %v542
        %544 = vmatprep.mubr.bf16.mxu0 0
        %545 = vmatmul.mubr.bf16.gmra.mxu0 %v300
        %v546 = vpop.f32.mrf.mxu0
        %v547 = vadd.f32 %v342, %v546
        %v548 = vpop.f32.mrf.mxu0
        %v549 = vadd.f32 %v346, %v548
        %v550 = vpop.f32.mrf.mxu0
        %v551 = vadd.f32 %v342, %v550
        %v552 = vpop.f32.mrf.mxu0
        %v553 = vadd.f32 %v346, %v552
        %554 = vmatprep.mubr.bf16.mxu0 0
        %555 = vmatmul.mubr.bf16.gmra.mxu0 %v301
        %v556 = vpop.f32.mrf.mxu0
        %v557 = vadd.f32 %v342, %v556
        %v558 = vpop.f32.mrf.mxu0
        %v559 = vadd.f32 %v346, %v558
        %v560 = vpop.f32.mrf.mxu0
        %v561 = vadd.f32 %v342, %v560
        %v562 = vpop.f32.mrf.mxu0
        %v563 = vadd.f32 %v346, %v562
        %564 = vmatprep.mubr.bf16.mxu0 0
        %565 = vmatmul.mubr.bf16.gmra.mxu0 %v302
        %v566 = vpop.f32.mrf.mxu0
        %v567 = vadd.f32 %v342, %v566
        %v568 = vpop.f32.mrf.mxu0
        %v569 = vadd.f32 %v346, %v568
        %v570 = vpop.f32.mrf.mxu0
        %v571 = vadd.f32 %v342, %v570
        %v572 = vpop.f32.mrf.mxu0
        %v573 = vadd.f32 %v346, %v572
        %574 = vmatprep.mubr.bf16.mxu0 0
        %575 = vmatmul.mubr.bf16.gmra.mxu0 %v303
        %v576 = vpop.f32.mrf.mxu0
        %v577 = vadd.f32 %v342, %v576
        %v578 = vpop.f32.mrf.mxu0
        %v579 = vadd.f32 %v346, %v578
        %v580 = vpop.f32.mrf.mxu0
        %v581 = vadd.f32 %v342, %v580
        %v582 = vpop.f32.mrf.mxu0
        %v583 = vadd.f32 %v346, %v582
        %584 = vmatprep.mubr.bf16.mxu0 0
        %585 = vmatmul.mubr.bf16.gmra.mxu0 %v304
        %v586 = vpop.f32.mrf.mxu0
        %v587 = vadd.f32 %v342, %v586
        %v588 = vpop.f32.mrf.mxu0
        %v589 = vadd.f32 %v346, %v588
        %v590 = vpop.f32.mrf.mxu0
        %v591 = vadd.f32 %v342, %v590
        %v592 = vpop.f32.mrf.mxu0
        %v593 = vadd.f32 %v346, %v592
        %594 = vdwg.mxu0
        %595 = vmatprep.subr.bf16.mxu0 0
        %596 = vmatpush1.bf16.msra.mxu0 %v457
        %597 = vmatprep.subr.bf16.mxu0 0
        %598 = vmatpush1.bf16.msra.mxu0 %v454
        %599 = vmatprep.subr.bf16.mxu0 0
        %600 = vmatpush1.bf16.msra.mxu0 %v451
        %601 = vmatprep.subr.bf16.mxu0 0
        %602 = vmatpush1.bf16.msra.mxu0 %v448
        %603 = vmatprep.subr.bf16.mxu0 0
        %604 = vmatpush1.bf16.msra.mxu0 %v445
        %605 = vmatprep.subr.bf16.mxu0 0
        %606 = vmatpush1.bf16.msra.mxu0 %v442
        %607 = vmatprep.subr.bf16.mxu0 0
        %608 = vmatpush1.bf16.msra.mxu0 %v439
        %609 = vmatprep.subr.bf16.mxu0 0
        %610 = vmatpush1.bf16.msra.mxu0 %v436
        %611 = vmatprep.subr.bf16.mxu0 0
        %612 = vmatpush2.bf16.msra.mxu0 0
        %613 = vmatprep.subr.bf16.mxu0 0
        %614 = vmatpush2.bf16.msra.mxu0 0
        %615 = vmatprep.subr.bf16.mxu0 0
        %616 = vmatpush2.bf16.msra.mxu0 0
        %617 = vmatprep.subr.bf16.mxu0 0
        %618 = vmatpush2.bf16.msra.mxu0 0
        %619 = vmatprep.subr.bf16.mxu0 0
        %620 = vmatpush2.bf16.msra.mxu0 0
        %621 = vmatprep.subr.bf16.mxu0 0
        %622 = vmatpush2.bf16.msra.mxu0 0
        %623 = vmatprep.subr.bf16.mxu0 0
        %624 = vmatpush2.bf16.msra.mxu0 0
        %625 = vmatprep.subr.bf16.mxu0 0
        %626 = vmatpush2.bf16.msra.mxu0 0
        %627 = vmatprep.mubr.bf16.mxu0 0
        %628 = vmatmul.mubr.bf16.gmra.mxu0 %v297
        %v629 = vpop.f32.mrf.mxu0
        %v630 = vadd.f32 %v350, %v629
        %v631 = vpop.f32.mrf.mxu0
        %v632 = vpop.f32.mrf.mxu0
        %v633 = vadd.f32 %v350, %v632
        %v634 = vpop.f32.mrf.mxu0
        %635 = vmatprep.mubr.bf16.mxu0 0
        %636 = vmatmul.mubr.bf16.gmra.mxu0 %v298
        %v637 = vpop.f32.mrf.mxu0
        %v638 = vadd.f32 %v350, %v637
        %v639 = vpop.f32.mrf.mxu0
        %v640 = vpop.f32.mrf.mxu0
        %v641 = vadd.f32 %v350, %v640
        %v642 = vpop.f32.mrf.mxu0
        %643 = vmatprep.mubr.bf16.mxu0 0
        %644 = vmatmul.mubr.bf16.gmra.mxu0 %v299
        %v645 = vpop.f32.mrf.mxu0
        %v646 = vadd.f32 %v350, %v645
        %v647 = vpop.f32.mrf.mxu0
        %v648 = vpop.f32.mrf.mxu0
        %v649 = vadd.f32 %v350, %v648
        %v650 = vpop.f32.mrf.mxu0
        %651 = vmatprep.mubr.bf16.mxu0 0
        %652 = vmatmul.mubr.bf16.gmra.mxu0 %v300
        %v653 = vpop.f32.mrf.mxu0
        %v654 = vadd.f32 %v350, %v653
        %v655 = vpop.f32.mrf.mxu0
        %v656 = vpop.f32.mrf.mxu0
        %v657 = vadd.f32 %v350, %v656
        %v658 = vpop.f32.mrf.mxu0
        %659 = vmatprep.mubr.bf16.mxu0 0
        %660 = vmatmul.mubr.bf16.gmra.mxu0 %v301
        %v661 = vpop.f32.mrf.mxu0
        %v662 = vadd.f32 %v350, %v661
        %v663 = vpop.f32.mrf.mxu0
        %v664 = vpop.f32.mrf.mxu0
        %v665 = vadd.f32 %v350, %v664
        %v666 = vpop.f32.mrf.mxu0
        %667 = vmatprep.mubr.bf16.mxu0 0
        %668 = vmatmul.mubr.bf16.gmra.mxu0 %v302
        %v669 = vpop.f32.mrf.mxu0
        %v670 = vadd.f32 %v350, %v669
        %v671 = vpop.f32.mrf.mxu0
        %v672 = vpop.f32.mrf.mxu0
        %v673 = vadd.f32 %v350, %v672
        %v674 = vpop.f32.mrf.mxu0
        %675 = vmatprep.mubr.bf16.mxu0 0
        %676 = vmatmul.mubr.bf16.gmra.mxu0 %v303
        %v677 = vpop.f32.mrf.mxu0
        %v678 = vadd.f32 %v350, %v677
        %v679 = vpop.f32.mrf.mxu0
        %v680 = vpop.f32.mrf.mxu0
        %v681 = vadd.f32 %v350, %v680
        %v682 = vpop.f32.mrf.mxu0
        %683 = vmatprep.mubr.bf16.mxu0 0
        %684 = vmatmul.mubr.bf16.gmra.mxu0 %v304
        %v685 = vpop.f32.mrf.mxu0
        %v686 = vadd.f32 %v350, %v685
        %v687 = vpop.f32.mrf.mxu0
        %v688 = vpop.f32.mrf.mxu0
        %v689 = vadd.f32 %v350, %v688
        %v690 = vpop.f32.mrf.mxu0
        %691 = vdwg.mxu0
        %v692 = vpack.c.bf16 %v521, %v517
        %v693 = vpack.c.bf16 %v523, %v519
        %v694 = vpack.c.bf16 %v633, %v630
        %v695 = vpack.c.bf16 %v531, %v527
        %v696 = vpack.c.bf16 %v533, %v529
        %v697 = vpack.c.bf16 %v641, %v638
        %v698 = vpack.c.bf16 %v541, %v537
        %v699 = vpack.c.bf16 %v543, %v539
        %v700 = vpack.c.bf16 %v649, %v646
        %v701 = vpack.c.bf16 %v551, %v547
        %v702 = vpack.c.bf16 %v553, %v549
        %v703 = vpack.c.bf16 %v657, %v654
        %v704 = vpack.c.bf16 %v561, %v557
        %v705 = vpack.c.bf16 %v563, %v559
        %v706 = vpack.c.bf16 %v665, %v662
        %v707 = vpack.c.bf16 %v571, %v567
        %v708 = vpack.c.bf16 %v573, %v569
        %v709 = vpack.c.bf16 %v673, %v670
        %v710 = vpack.c.bf16 %v581, %v577
        %v711 = vpack.c.bf16 %v583, %v579
        %v712 = vpack.c.bf16 %v681, %v678
        %v713 = vpack.c.bf16 %v591, %v587
        %v714 = vpack.c.bf16 %v593, %v589
        %v715 = vpack.c.bf16 %v689, %v686
        %v724 = vunpack.c.l.b16 %v692
        %v725 = vunpack.c.h.b16 %v692
        %v726 = vunpack.c.l.b16 %v695
        %v727 = vunpack.c.h.b16 %v695
        %v728 = vunpack.c.l.b16 %v698
        %v729 = vunpack.c.h.b16 %v698
        %v730 = vunpack.c.l.b16 %v701
        %v731 = vunpack.c.h.b16 %v701
        %v732 = vunpack.c.l.b16 %v704
        %v733 = vunpack.c.h.b16 %v704
        %v734 = vunpack.c.l.b16 %v707
        %v735 = vunpack.c.h.b16 %v707
        %v736 = vunpack.c.l.b16 %v710
        %v737 = vunpack.c.h.b16 %v710
        %v738 = vunpack.c.l.b16 %v713
        %v739 = vunpack.c.h.b16 %v713
        %v740 = vpack.c.b16 %v724, %v724
        %v741 = vpack.c.b16 %v725, %v725
        %v742 = vpack.c.b16 %v726, %v726
        %v743 = vpack.c.b16 %v727, %v727
        %v744 = vpack.c.b16 %v728, %v728
        %v745 = vpack.c.b16 %v729, %v729
        %v746 = vpack.c.b16 %v730, %v730
        %v747 = vpack.c.b16 %v731, %v731
        %v748 = vpack.c.b16 %v732, %v732
        %v749 = vpack.c.b16 %v733, %v733
        %v750 = vpack.c.b16 %v734, %v734
        %v751 = vpack.c.b16 %v735, %v735
        %v752 = vpack.c.b16 %v736, %v736
        %v753 = vpack.c.b16 %v737, %v737
        %v754 = vpack.c.b16 %v738, %v738
        %v755 = vpack.c.b16 %v739, %v739
        %772 = vst [vmem:[%s261] sm:$0xf] %v740
        %773 = vst [vmem:[%s261 + $0x4] sm:$0xf] %v741
        %774 = vst [vmem:[%s261 + $0x8] sm:$0xf] %v742
        %775 = vst [vmem:[%s261 + $0xc] sm:$0xf] %v743
        %776 = vst [vmem:[%s261 + $0x10] sm:$0xf] %v744
        %777 = vst [vmem:[%s261 + $0x14] sm:$0xf] %v745
        %778 = vst [vmem:[%s261 + $0x18] sm:$0xf] %v746
        %779 = vst [vmem:[%s261 + $0x1c] sm:$0xf] %v747
        %780 = vst [vmem:[%s261 + $0x20] sm:$0xf] %v748
        %781 = vst [vmem:[%s261 + $0x24] sm:$0xf] %v749
        %782 = vst [vmem:[%s261 + $0x28] sm:$0xf] %v750
        %783 = vst [vmem:[%s261 + $0x2c] sm:$0xf] %v751
        %784 = vst [vmem:[%s261 + $0x30] sm:$0xf] %v752
        %785 = vst [vmem:[%s261 + $0x34] sm:$0xf] %v753
        %786 = vst [vmem:[%s261 + $0x38] sm:$0xf] %v754
        %787 = vst [vmem:[%s261 + $0x3c] sm:$0xf] %v755
        %v796 = vunpack.c.l.b16 %v693
        %v797 = vunpack.c.h.b16 %v693
        %v798 = vunpack.c.l.b16 %v696
        %v799 = vunpack.c.h.b16 %v696
        %v800 = vunpack.c.l.b16 %v699
        %v801 = vunpack.c.h.b16 %v699
        %v802 = vunpack.c.l.b16 %v702
        %v803 = vunpack.c.h.b16 %v702
        %v804 = vunpack.c.l.b16 %v705
        %v805 = vunpack.c.h.b16 %v705
        %v806 = vunpack.c.l.b16 %v708
        %v807 = vunpack.c.h.b16 %v708
        %v808 = vunpack.c.l.b16 %v711
        %v809 = vunpack.c.h.b16 %v711
        %v810 = vunpack.c.l.b16 %v714
        %v811 = vunpack.c.h.b16 %v714
        %v812 = vpack.c.b16 %v796, %v796
        %v813 = vpack.c.b16 %v797, %v797
        %v814 = vpack.c.b16 %v798, %v798
        %v815 = vpack.c.b16 %v799, %v799
        %v816 = vpack.c.b16 %v800, %v800
        %v817 = vpack.c.b16 %v801, %v801
        %v818 = vpack.c.b16 %v802, %v802
        %v819 = vpack.c.b16 %v803, %v803
        %v820 = vpack.c.b16 %v804, %v804
        %v821 = vpack.c.b16 %v805, %v805
        %v822 = vpack.c.b16 %v806, %v806
        %v823 = vpack.c.b16 %v807, %v807
        %v824 = vpack.c.b16 %v808, %v808
        %v825 = vpack.c.b16 %v809, %v809
        %v826 = vpack.c.b16 %v810, %v810
        %v827 = vpack.c.b16 %v811, %v811
        %844 = vst [vmem:[%s268] sm:$0xf] %v812
        %845 = vst [vmem:[%s268 + $0x4] sm:$0xf] %v813
        %846 = vst [vmem:[%s268 + $0x8] sm:$0xf] %v814
        %847 = vst [vmem:[%s268 + $0xc] sm:$0xf] %v815
        %848 = vst [vmem:[%s268 + $0x10] sm:$0xf] %v816
        %849 = vst [vmem:[%s268 + $0x14] sm:$0xf] %v817
        %850 = vst [vmem:[%s268 + $0x18] sm:$0xf] %v818
        %851 = vst [vmem:[%s268 + $0x1c] sm:$0xf] %v819
        %852 = vst [vmem:[%s268 + $0x20] sm:$0xf] %v820
        %853 = vst [vmem:[%s268 + $0x24] sm:$0xf] %v821
        %854 = vst [vmem:[%s268 + $0x28] sm:$0xf] %v822
        %855 = vst [vmem:[%s268 + $0x2c] sm:$0xf] %v823
        %856 = vst [vmem:[%s268 + $0x30] sm:$0xf] %v824
        %857 = vst [vmem:[%s268 + $0x34] sm:$0xf] %v825
        %858 = vst [vmem:[%s268 + $0x38] sm:$0xf] %v826
        %859 = vst [vmem:[%s268 + $0x3c] sm:$0xf] %v827
        %v868 = vunpack.c.l.b16 %v694
        %v869 = vunpack.c.h.b16 %v694
        %v870 = vunpack.c.l.b16 %v697
        %v871 = vunpack.c.h.b16 %v697
        %v872 = vunpack.c.l.b16 %v700
        %v873 = vunpack.c.h.b16 %v700
        %v874 = vunpack.c.l.b16 %v703
        %v875 = vunpack.c.h.b16 %v703
        %v876 = vunpack.c.l.b16 %v706
        %v877 = vunpack.c.h.b16 %v706
        %v878 = vunpack.c.l.b16 %v709
        %v879 = vunpack.c.h.b16 %v709
        %v880 = vunpack.c.l.b16 %v712
        %v881 = vunpack.c.h.b16 %v712
        %v882 = vunpack.c.l.b16 %v715
        %v883 = vunpack.c.h.b16 %v715
        %v884 = vpack.c.b16 %v868, %v868
        %v885 = vpack.c.b16 %v869, %v869
        %v886 = vpack.c.b16 %v870, %v870
        %v887 = vpack.c.b16 %v871, %v871
        %v888 = vpack.c.b16 %v872, %v872
        %v889 = vpack.c.b16 %v873, %v873
        %v890 = vpack.c.b16 %v874, %v874
        %v891 = vpack.c.b16 %v875, %v875
        %v892 = vpack.c.b16 %v876, %v876
        %v893 = vpack.c.b16 %v877, %v877
        %v894 = vpack.c.b16 %v878, %v878
        %v895 = vpack.c.b16 %v879, %v879
        %v896 = vpack.c.b16 %v880, %v880
        %v897 = vpack.c.b16 %v881, %v881
        %v898 = vpack.c.b16 %v882, %v882
        %v899 = vpack.c.b16 %v883, %v883
        %916 = vst [vmem:[%s275] sm:$0xf] %v884
        %917 = vst [vmem:[%s275 + $0x4] sm:$0xf] %v885
        %918 = vst [vmem:[%s275 + $0x8] sm:$0xf] %v886
        %919 = vst [vmem:[%s275 + $0xc] sm:$0xf] %v887
        %920 = vst [vmem:[%s275 + $0x10] sm:$0xf] %v888
        %921 = vst [vmem:[%s275 + $0x14] sm:$0xf] %v889
        %922 = vst [vmem:[%s275 + $0x18] sm:$0xf] %v890
        %923 = vst [vmem:[%s275 + $0x1c] sm:$0xf] %v891
        %924 = vst [vmem:[%s275 + $0x20] sm:$0xf] %v892
        %925 = vst [vmem:[%s275 + $0x24] sm:$0xf] %v893
        %926 = vst [vmem:[%s275 + $0x28] sm:$0xf] %v894
        %927 = vst [vmem:[%s275 + $0x2c] sm:$0xf] %v895
        %928 = vst [vmem:[%s275 + $0x30] sm:$0xf] %v896
        %929 = vst [vmem:[%s275 + $0x34] sm:$0xf] %v897
        %930 = vst [vmem:[%s275 + $0x38] sm:$0xf] %v898
        %931 = vst [vmem:[%s275 + $0x3c] sm:$0xf] %v899
        %s932 = sand.u32 %s103, 1
        %s933 = scalar_lea.sflag [#allocation4], %s932
        %s934 = sand.u32 %s103, 1
        %s935 = smul.addr %s934, 64
        %s936 = scalar_lea.vmem [#allocation7], %s935
        %s937 = sand.u32 %s27, 1
        %s938 = scalar_lea.sflag [#allocation9], %s937
        %s939 = sand.u32 %s129, 1
        %s940 = smul.addr %s939, 64
        %s941 = scalar_lea.vmem [#allocation8], %s940
        %s942 = sand.u32 %s27, 1
        %s943 = scalar_lea.sflag [#allocation9], %s942
        %s944 = sand.u32 %s155, 1
        %s945 = smul.addr %s944, 64
        %s946 = scalar_lea.vmem [#allocation10], %s945
        // Predicated region
        $region41: #{tpu_custom_call.1} parent=31 // pred_check
          %p947 = pneg %p113
        $region42: #{tpu_custom_call.1} parent=31 // pred_check_branch
          %949 = sbr.rel (%p947) target = $region44
        $region43: #{tpu_custom_call.1} parent=31 // pred_region
          %s950 = smul.u32 16, %s27
          %s952 = ssub.s32 1024, 1024
          %953 = vsyncadd %s933, %s952
          %s954 = smul.addr %s950, 64
          %s955 = scalar_lea.hbm %s3, %s954
          %s956 = sshll.u32 %s936, 4
          %s957 = int_to_ptr.vmem [resolvable:$true] %s956
          %962 = dma.vmem_to_hbm [thread:$0]  %s957, 1024, %s955, %s933, 64, 64, 4
        $region44: #{tpu_custom_call.1} parent=31 // pred_fallthru
          _
        // Predicated region
        $region45: #{tpu_custom_call.1} parent=31 // pred_check
          %p963 = pneg %p139
        $region46: #{tpu_custom_call.1} parent=31 // pred_check_branch
          %965 = sbr.rel (%p963) target = $region48
        $region47: #{tpu_custom_call.1} parent=31 // pred_region
          %s966 = smul.u32 16, %s27
          %s968 = ssub.s32 1024, 1024
          %969 = vsyncadd %s938, %s968
          %s970 = smul.addr %s966, 64
          %s971 = scalar_lea.hbm %s4, %s970
          %s972 = sshll.u32 %s941, 4
          %s973 = int_to_ptr.vmem [resolvable:$true] %s972
          %978 = dma.vmem_to_hbm [thread:$0]  %s973, 1024, %s971, %s938, 64, 64, 4
        $region48: #{tpu_custom_call.1} parent=31 // pred_fallthru
          _
        // Predicated region
        $region49: #{tpu_custom_call.1} parent=31 // pred_check
          %p979 = pneg %p165
        $region50: #{tpu_custom_call.1} parent=31 // pred_check_branch
          %981 = sbr.rel (%p979) target = $region52
        $region51: #{tpu_custom_call.1} parent=31 // pred_region
          %s982 = smul.u32 16, %s27
          %s984 = ssub.s32 1024, 1024
          %985 = vsyncadd %s943, %s984
          %s986 = smul.addr %s982, 64
          %s987 = scalar_lea.hbm %s5, %s986
          %s988 = sshll.u32 %s946, 4
          %s989 = int_to_ptr.vmem [resolvable:$true] %s988
          %994 = dma.vmem_to_hbm [thread:$0]  %s989, 1024, %s987, %s943, 64, 64, 4
        $region52: #{tpu_custom_call.1} parent=31 // pred_fallthru
          _
      $region32: #{tpu_custom_call.1} parent=5 // pred_fallthru
        _
      %p995 = scmp.le.s32.totalorder 2, %s22
      // Predicated region
      $region53: #{tpu_custom_call.1} parent=5 // pred_check
        %p996 = pneg %p995
      $region54: #{tpu_custom_call.1} parent=5 // pred_check_branch
        %998 = sbr.rel (%p996) target = $region56
      $region55: #{tpu_custom_call.1} parent=5 // pred_region
        %s999 = ssub.s32 %s22, 2
        // Predicated region
        $region57: #{tpu_custom_call.1} parent=55 // pred_check
          %p1000 = pneg %p119
        $region58: #{tpu_custom_call.1} parent=55 // pred_check_branch
          %1002 = sbr.rel (%p1000) target = $region60
        $region59: #{tpu_custom_call.1} parent=55 // pred_region
          %s1003 = sand.u32 %s104, 1
          %s1004 = scalar_lea.sflag [#allocation4], %s1003
          %s1005 = sand.u32 %s104, 1
          %s1006 = smul.addr %s1005, 64
          %s1007 = scalar_lea.vmem [#allocation7], %s1006
          %1008 = dma.done %s1004, 1024
        $region60: #{tpu_custom_call.1} parent=55 // pred_fallthru
          _
        // Predicated region
        $region61: #{tpu_custom_call.1} parent=55 // pred_check
          %p1009 = pneg %p145
        $region62: #{tpu_custom_call.1} parent=55 // pred_check_branch
          %1011 = sbr.rel (%p1009) target = $region64
        $region63: #{tpu_custom_call.1} parent=55 // pred_region
          %s1012 = sand.u32 %s28, 1
          %s1013 = scalar_lea.sflag [#allocation9], %s1012
          %s1014 = sand.u32 %s130, 1
          %s1015 = smul.addr %s1014, 64
          %s1016 = scalar_lea.vmem [#allocation8], %s1015
          %1017 = dma.done %s1013, 1024
        $region64: #{tpu_custom_call.1} parent=55 // pred_fallthru
          _
        // Predicated region
        $region65: #{tpu_custom_call.1} parent=55 // pred_check
          %p1018 = pneg %p171
        $region66: #{tpu_custom_call.1} parent=55 // pred_check_branch
          %1020 = sbr.rel (%p1018) target = $region68
        $region67: #{tpu_custom_call.1} parent=55 // pred_region
          %s1021 = sand.u32 %s28, 1
          %s1022 = scalar_lea.sflag [#allocation9], %s1021
          %s1023 = sand.u32 %s156, 1
          %s1024 = smul.addr %s1023, 64
          %s1025 = scalar_lea.vmem [#allocation10], %s1024
          %1026 = dma.done %s1022, 1024
        $region68: #{tpu_custom_call.1} parent=55 // pred_fallthru
          _
      $region56: #{tpu_custom_call.1} parent=5 // pred_fallthru
        _
    $region6: #{tpu_custom_call.1} parent=1 // loop_footer
      %s26 = sadd.s32 1, %s22
    $region7: #{tpu_custom_call.1} parent=1 // loop_footer_branch
      %21 = sbr.rel target = $region3
    $region8: #{tpu_custom_call.1} parent=1 // loop_exit
      _
    %1027 = vsyncpa [#allocation3], 1
    %s1028 = scalar_lea.sflag [#allocation3], 1
    %1029 = vsyncpa %s1028, 1
    %1030 = vsyncpa [#allocation6], 1
    %1031 = vsyncpa [#allocation4], 1
    %s1032 = scalar_lea.sflag [#allocation4], 1
    %1033 = vsyncpa %s1032, 1
    %1034 = vsyncpa [#allocation9], 1
    %s1035 = scalar_lea.sflag [#allocation9], 1
    %1036 = vsyncpa %s1035, 1

// kernel: tpu_custom_call.1
$region0: #{tpu_custom_call.1}
  #allocation0 [shape = 'u32[]', space=smem, size = 0x4, offset = 0x4, fixed_abs, tag = 'smem constant byte address 0x4 - core index']
  #allocation1 [shape = 'u32[144,128]{1,0:T(1,128)}', space=vmem, size = 0x12000, scoped, tag = 'internal scratch']
  %s0 = inlined_call_operand.hbm [shape: f32[512,128], index: 0, kind: input, shape index: {}]
  %s1 = inlined_call_operand.hbm [shape: bf16[128,384], index: 1, kind: input, shape index: {}]
  %s2 = inlined_call_operand.vmem [shape: f32[1,384], index: 2, kind: input, shape index: {}]
  %s3 = inlined_call_operand.hbm [shape: bf16[512,128], index: 3, kind: output, shape index: {0}]
  %s4 = inlined_call_operand.hbm [shape: bf16[512,128], index: 4, kind: output, shape index: {1}]
  %s5 = inlined_call_operand.hbm [shape: bf16[512,128], index: 5, kind: output, shape index: {2}]
  %6 = xla_tuple %s3, %s4, %s5
  %s7 = sld [smem:[#allocation0]]
  $region69: #{tpu_custom_call.1} parent=0
    _
  %s9 = ssub.s32 1, %s7
  %s10 = scalar_select 0, %s9, %s7
  $region1: #{tpu_custom_call.1} parent=0
    #allocation2 [shape = 'u8[131072]{0}', space=vmem, size = 0x20000, scoped, tag = 'input window, operand 0']
    #allocation3 [shape = 's32[2]{0}', space=sflag, size = 0x8, scoped, tag = 'scoped memory for tpu_custom_call.1']
    #allocation4 [shape = 's32[2]{0}', space=sflag, size = 0x8, scoped, tag = 'scoped memory for tpu_custom_call.1']
    #allocation5 [shape = 'u8[98304]{0}', space=vmem, size = 0x18000, scoped, tag = 'input window, operand 1, single buffered']
    #allocation6 [shape = 's32[1]{0}', space=sflag, size = 0x4, scoped, tag = 'scoped memory for tpu_custom_call.1']
    #allocation7 [shape = 'u8[65536]{0}', space=vmem, size = 0x10000, scoped, tag = 'output window, operand 0']
    #allocation8 [shape = 'u8[65536]{0}', space=vmem, size = 0x10000, scoped, tag = 'output window, operand 1']
    #allocation9 [shape = 's32[2]{0}', space=sflag, size = 0x8, scoped, tag = 'scoped memory for tpu_custom_call.1']
    #allocation10 [shape = 'u8[65536]{0}', space=vmem, size = 0x10000, scoped, tag = 'output window, operand 2']
    %11 = vsyncpa [#allocation3], 0
    %s12 = scalar_lea.sflag [#allocation3], 1
    %13 = vsyncpa %s12, 0
    %14 = vsyncpa [#allocation6], 0
    %15 = vsyncpa [#allocation4], 0
    %s16 = scalar_lea.sflag [#allocation4], 1
    %17 = vsyncpa %s16, 0
    %18 = vsyncpa [#allocation9], 0
    %s19 = scalar_lea.sflag [#allocation9], 1
    %20 = vsyncpa %s19, 0
    loop: start=0, step=1, limit=6
    $region2: #{tpu_custom_call.1} parent=1 // loop_pre_header
      _
    $region3: #{tpu_custom_call.1} parent=1 // loop_header
      %s22 = sphi 0, %s26
      %p23 = scmp.ge.s32.totalorder %s22, 6
      %s32 = sphi 0, %s34
      %s35 = sphi 0, %s32
      %s36 = sphi 0, %s35
      %s52 = sphi 0, %s36
      %s56 = sphi 0, %s56
      %s58 = sphi 0, %s56
      %s59 = sphi 0, %s58
      %s73 = sphi 0, %s59
      %s77 = sphi 0, %s77
      %s79 = sphi 0, %s77
      %s80 = sphi 0, %s79
      %s94 = sphi 0, %s80
      %s100 = sphi 0, %s102
      %s103 = sphi 0, %s100
      %s104 = sphi 0, %s103
      %s120 = sphi 0, %s104
      %s126 = sphi 0, %s128
      %s129 = sphi 0, %s126
      %s130 = sphi 0, %s129
      %s146 = sphi 0, %s130
      %s152 = sphi 0, %s154
      %s155 = sphi 0, %s152
      %s156 = sphi 0, %s155
      %s172 = sphi 0, %s156
    $region4: #{tpu_custom_call.1} parent=1 // loop_header_branch
      %25 = sbr.rel (%p23) target = $region8
    $region5: #{tpu_custom_call.1} parent=1 // loop_body
      %s27 = ssub.s32 %s22, 1
      %s28 = ssub.s32 %s22, 2
      %s29 = sadd.s32 %s22, 1
      %s30 = ssub.s32 %s22, %s29
      %p31 = scmp.eq.s32.totalorder %s30, 0
      %s33 = sadd.s32 %s32, 1
      %s34 = scalar_select %p31, %s32, %s33
      %p37 = pneg %p31
      %p38 = scmp.eq.s32.totalorder %s22, 3
      %p39 = por %p37, %p38
      %p40 = scmp.ne.s32.totalorder %s32, %s35
      %p41 = scmp.eq.s32.totalorder %s22, 0
      %p42 = por %p40, %p41
      %p43 = scmp.ne.s32.totalorder %s32, %s35
      %p44 = scmp.eq.s32.totalorder %s27, 3
      %p45 = por %p43, %p44
      %p46 = scmp.ne.s32.totalorder %s35, %s36
      %p47 = scmp.eq.s32.totalorder %s27, 0
      %p48 = por %p46, %p47
      %p49 = scmp.ne.s32.totalorder %s35, %s36
      %p50 = scmp.eq.s32.totalorder %s28, 3
      %p51 = por %p49, %p50
      %p53 = scmp.ne.s32.totalorder %s36, %s52
      %p54 = scmp.eq.s32.totalorder %s28, 0
      %p55 = por %p53, %p54
      %s57 = sadd.s32 %s56, 1
      %p60 = scmp.eq.s32.totalorder %s22, 3
      %p61 = scmp.ne.s32.totalorder %s56, %s58
      %p62 = scmp.eq.s32.totalorder %s22, 0
      %p63 = por %p61, %p62
      %p64 = scmp.ne.s32.totalorder %s56, %s58
      %p65 = scmp.eq.s32.totalorder %s27, 3
      %p66 = por %p64, %p65
      %p67 = scmp.ne.s32.totalorder %s58, %s59
      %p68 = scmp.eq.s32.totalorder %s27, 0
      %p69 = por %p67, %p68
      %p70 = scmp.ne.s32.totalorder %s58, %s59
      %p71 = scmp.eq.s32.totalorder %s28, 3
      %p72 = por %p70, %p71
      %p74 = scmp.ne.s32.totalorder %s59, %s73
      %p75 = scmp.eq.s32.totalorder %s28, 0
      %p76 = por %p74, %p75
      %s78 = sadd.s32 %s77, 1
      %p81 = scmp.eq.s32.totalorder %s22, 3
      %p82 = scmp.ne.s32.totalorder %s77, %s79
      %p83 = scmp.eq.s32.totalorder %s22, 0
      %p84 = por %p82, %p83
      %p85 = scmp.ne.s32.totalorder %s77, %s79
      %p86 = scmp.eq.s32.totalorder %s27, 3
      %p87 = por %p85, %p86
      %p88 = scmp.ne.s32.totalorder %s79, %s80
      %p89 = scmp.eq.s32.totalorder %s27, 0
      %p90 = por %p88, %p89
      %p91 = scmp.ne.s32.totalorder %s79, %s80
      %p92 = scmp.eq.s32.totalorder %s28, 3
      %p93 = por %p91, %p92
      %p95 = scmp.ne.s32.totalorder %s80, %s94
      %p96 = scmp.eq.s32.totalorder %s28, 0
      %p97 = por %p95, %p96
      %s98 = ssub.s32 %s22, %s29
      %p99 = scmp.eq.s32.totalorder %s98, 0
      %s101 = sadd.s32 %s100, 1
      %s102 = scalar_select %p99, %s100, %s101
      %p105 = pneg %p99
      %p106 = scmp.eq.s32.totalorder %s22, 3
      %p107 = por %p105, %p106
      %p108 = scmp.ne.s32.totalorder %s100, %s103
      %p109 = scmp.eq.s32.totalorder %s22, 0
      %p110 = por %p108, %p109
      %p111 = scmp.ne.s32.totalorder %s100, %s103
      %p112 = scmp.eq.s32.totalorder %s27, 3
      %p113 = por %p111, %p112
      %p114 = scmp.ne.s32.totalorder %s103, %s104
      %p115 = scmp.eq.s32.totalorder %s27, 0
      %p116 = por %p114, %p115
      %p117 = scmp.ne.s32.totalorder %s103, %s104
      %p118 = scmp.eq.s32.totalorder %s28, 3
      %p119 = por %p117, %p118
      %p121 = scmp.ne.s32.totalorder %s104, %s120
      %p122 = scmp.eq.s32.totalorder %s28, 0
      %p123 = por %p121, %p122
      %s124 = ssub.s32 %s22, %s29
      %p125 = scmp.eq.s32.totalorder %s124, 0
      %s127 = sadd.s32 %s126, 1
      %s128 = scalar_select %p125, %s126, %s127
      %p131 = pneg %p125
      %p132 = scmp.eq.s32.totalorder %s22, 3
      %p133 = por %p131, %p132
      %p134 = scmp.ne.s32.totalorder %s126, %s129
      %p135 = scmp.eq.s32.totalorder %s22, 0
      %p136 = por %p134, %p135
      %p137 = scmp.ne.s32.totalorder %s126, %s129
      %p138 = scmp.eq.s32.totalorder %s27, 3
      %p139 = por %p137, %p138
      %p140 = scmp.ne.s32.totalorder %s129, %s130
      %p141 = scmp.eq.s32.totalorder %s27, 0
      %p142 = por %p140, %p141
      %p143 = scmp.ne.s32.totalorder %s129, %s130
      %p144 = scmp.eq.s32.totalorder %s28, 3
      %p145 = por %p143, %p144
      %p147 = scmp.ne.s32.totalorder %s130, %s146
      %p148 = scmp.eq.s32.totalorder %s28, 0
      %p149 = por %p147, %p148
      %s150 = ssub.s32 %s22, %s29
      %p151 = scmp.eq.s32.totalorder %s150, 0
      %s153 = sadd.s32 %s152, 1
      %s154 = scalar_select %p151, %s152, %s153
      %p157 = pneg %p151
      %p158 = scmp.eq.s32.totalorder %s22, 3
      %p159 = por %p157, %p158
      %p160 = scmp.ne.s32.totalorder %s152, %s155
      %p161 = scmp.eq.s32.totalorder %s22, 0
      %p162 = por %p160, %p161
      %p163 = scmp.ne.s32.totalorder %s152, %s155
      %p164 = scmp.eq.s32.totalorder %s27, 3
      %p165 = por %p163, %p164
      %p166 = scmp.ne.s32.totalorder %s155, %s156
      %p167 = scmp.eq.s32.totalorder %s27, 0
      %p168 = por %p166, %p167
      %p169 = scmp.ne.s32.totalorder %s155, %s156
      %p170 = scmp.eq.s32.totalorder %s28, 3
      %p171 = por %p169, %p170
      %p173 = scmp.ne.s32.totalorder %s156, %s172
      %p174 = scmp.eq.s32.totalorder %s28, 0
      %p175 = por %p173, %p174
      %p176 = scmp.le.s32.totalorder 1, %s22
      %p177 = scmp.lt.s32.totalorder %s22, 5
      %p178 = pnand %p176, %p177
      %p179 = pneg %p178
      // Predicated region
      $region9: #{tpu_custom_call.1} parent=5 // pred_check
        _
      $region10: #{tpu_custom_call.1} parent=5 // pred_check_branch
        %181 = sbr.rel (%p178) target = $region12
      $region11: #{tpu_custom_call.1} parent=5 // pred_region
        %s182 = ssub.s32 %s22, 1
        // Predicated region
        $region13: #{tpu_custom_call.1} parent=11 // pred_check
          %p183 = pneg %p69
        $region14: #{tpu_custom_call.1} parent=11 // pred_check_branch
          %185 = sbr.rel (%p183) target = $region16
        $region15: #{tpu_custom_call.1} parent=11 // pred_region
          %s187 = ssub.s32 3072, 3072
          %188 = vsyncadd [#allocation6], %s187
          %s189 = sshll.u32 [#allocation5], 4
          %s190 = int_to_ptr.vmem [resolvable:$true] %s189
          %195 = dma.hbm_to_vmem [thread:$0]  %s1, 3072, %s190, [#allocation6], 192, 192, 12
        $region16: #{tpu_custom_call.1} parent=11 // pred_fallthru
          _
        // Predicated region
        $region17: #{tpu_custom_call.1} parent=11 // pred_check
          %p196 = pneg %p90
        $region18: #{tpu_custom_call.1} parent=11 // pred_check_branch
          %198 = sbr.rel (%p196) target = $region20
        $region19: #{tpu_custom_call.1} parent=11 // pred_region
          _
        $region20: #{tpu_custom_call.1} parent=11 // pred_fallthru
          _
      $region12: #{tpu_custom_call.1} parent=5 // pred_fallthru
        _
      %p199 = scmp.lt.s32.totalorder %s22, 4
      // Predicated region
      $region21: #{tpu_custom_call.1} parent=5 // pred_check
        %p200 = pneg %p199
      $region22: #{tpu_custom_call.1} parent=5 // pred_check_branch
        %202 = sbr.rel (%p200) target = $region24
      $region23: #{tpu_custom_call.1} parent=5 // pred_region
        // Predicated region
        $region25: #{tpu_custom_call.1} parent=23 // pred_check
          %p203 = pneg %p42
        $region26: #{tpu_custom_call.1} parent=23 // pred_check_branch
          %205 = sbr.rel (%p203) target = $region28
        $region27: #{tpu_custom_call.1} parent=23 // pred_region
          %s206 = sand.u32 %s32, 1
          %s207 = scalar_lea.sflag [#allocation3], %s206
          %s208 = sand.u32 %s32, 1
          %s209 = smul.addr %s208, 128
          %s210 = scalar_lea.vmem [#allocation2], %s209
          %s211 = smul.u32 16, %s22
          %s213 = ssub.s32 2048, 2048
          %214 = vsyncadd %s207, %s213
          %s215 = smul.addr %s211, 128
          %s216 = scalar_lea.hbm %s0, %s215
          %s217 = sshll.u32 %s210, 4
          %s218 = int_to_ptr.vmem [resolvable:$true] %s217
          %223 = dma.hbm_to_vmem [thread:$0]  %s216, 2048, %s218, %s207, 128, 128, 8
        $region28: #{tpu_custom_call.1} parent=23 // pred_fallthru
          _
      $region24: #{tpu_custom_call.1} parent=5 // pred_fallthru
        _
      %p224 = scmp.le.s32.totalorder 1, %s22
      %p225 = scmp.lt.s32.totalorder %s22, 5
      %p226 = pnand %p224, %p225
      %p227 = pneg %p226
      // Predicated region
      $region29: #{tpu_custom_call.1} parent=5 // pred_check
        _
      $region30: #{tpu_custom_call.1} parent=5 // pred_check_branch
        %229 = sbr.rel (%p226) target = $region32
      $region31: #{tpu_custom_call.1} parent=5 // pred_region
        %s230 = ssub.s32 %s22, 1
        %s231 = sand.u32 %s35, 1
        %s232 = scalar_lea.sflag [#allocation3], %s231
        %s233 = sand.u32 %s35, 1
        %s234 = smul.addr %s233, 128
        %s235 = scalar_lea.vmem [#allocation2], %s234
        // Predicated region
        $region33: #{tpu_custom_call.1} parent=31 // pred_check
          %p236 = pneg %p48
        $region34: #{tpu_custom_call.1} parent=31 // pred_check_branch
          %238 = sbr.rel (%p236) target = $region36
        $region35: #{tpu_custom_call.1} parent=31 // pred_region
          %239 = dma.done %s232, 2048
        $region36: #{tpu_custom_call.1} parent=31 // pred_fallthru
          _
        // Predicated region
        $region37: #{tpu_custom_call.1} parent=31 // pred_check
          %p240 = pneg %p69
        $region38: #{tpu_custom_call.1} parent=31 // pred_check_branch
          %242 = sbr.rel (%p240) target = $region40
        $region39: #{tpu_custom_call.1} parent=31 // pred_region
          %243 = dma.done [#allocation6], 3072
        $region40: #{tpu_custom_call.1} parent=31 // pred_fallthru
          _
        %s244 = sand.u32 %s35, 1
        %s245 = scalar_lea.sflag [#allocation3], %s244
        %s246 = sand.u32 %s35, 1
        %s247 = smul.addr %s246, 128
        %s248 = scalar_lea.vmem [#allocation2], %s247
        %p249 = pneg %p48
        %p250 = pneg %p45
        %p251 = pneg %p69
        %p252 = pneg %p66
        %p253 = pneg %p90
        %p254 = pneg %p87
        %p255 = pneg %p116
        %p256 = pneg %p113
        %s257 = sand.u32 %s103, 1
        %s258 = scalar_lea.sflag [#allocation4], %s257
        %s259 = sand.u32 %s103, 1
        %s260 = smul.addr %s259, 64
        %s261 = scalar_lea.vmem [#allocation7], %s260
        %p262 = pneg %p142
        %p263 = pneg %p139
        %s264 = sand.u32 %s27, 1
        %s265 = scalar_lea.sflag [#allocation9], %s264
        %s266 = sand.u32 %s129, 1
        %s267 = smul.addr %s266, 64
        %s268 = scalar_lea.vmem [#allocation8], %s267
        %p269 = pneg %p168
        %p270 = pneg %p165
        %s271 = sand.u32 %s27, 1
        %s272 = scalar_lea.sflag [#allocation9], %s271
        %s273 = sand.u32 %s155, 1
        %s274 = smul.addr %s273, 64
        %s275 = scalar_lea.vmem [#allocation10], %s274
        %s276 = smul.u32 16, %s27
        %s277 = smul.u32 16, %s27
        %s278 = smul.u32 16, %s27
        %s279 = smul.u32 16, %s27
        %v281 = vld [vmem:[%s235] sm:$0xff]
        %v282 = vld [vmem:[%s235 + $0x8] sm:$0xff]
        %v283 = vld [vmem:[%s235 + $0x10] sm:$0xff]
        %v284 = vld [vmem:[%s235 + $0x18] sm:$0xff]
        %v285 = vld [vmem:[%s235 + $0x20] sm:$0xff]
        %v286 = vld [vmem:[%s235 + $0x28] sm:$0xff]
        %v287 = vld [vmem:[%s235 + $0x30] sm:$0xff]
        %v288 = vld [vmem:[%s235 + $0x38] sm:$0xff]
        %v289 = vld [vmem:[%s235 + $0x40] sm:$0xff]
        %v290 = vld [vmem:[%s235 + $0x48] sm:$0xff]
        %v291 = vld [vmem:[%s235 + $0x50] sm:$0xff]
        %v292 = vld [vmem:[%s235 + $0x58] sm:$0xff]
        %v293 = vld [vmem:[%s235 + $0x60] sm:$0xff]
        %v294 = vld [vmem:[%s235 + $0x68] sm:$0xff]
        %v295 = vld [vmem:[%s235 + $0x70] sm:$0xff]
        %v296 = vld [vmem:[%s235 + $0x78] sm:$0xff]
        %v297 = vpack.c.bf16 %v282, %v281
        %v298 = vpack.c.bf16 %v284, %v283
        %v299 = vpack.c.bf16 %v286, %v285
        %v300 = vpack.c.bf16 %v288, %v287
        %v301 = vpack.c.bf16 %v290, %v289
        %v302 = vpack.c.bf16 %v292, %v291
        %v303 = vpack.c.bf16 %v294, %v293
        %v304 = vpack.c.bf16 %v296, %v295
        %v305 = vld [vmem:[#allocation5] sm:$0xff]
        %v306 = vld [vmem:[#allocation5 + $0x8] sm:$0xf]
        %v307 = vld [vmem:[#allocation5 + $0xc] sm:$0xff]
        %v308 = vld [vmem:[#allocation5 + $0x14] sm:$0xf]
        %v309 = vld [vmem:[#allocation5 + $0x18] sm:$0xff]
        %v310 = vld [vmem:[#allocation5 + $0x20] sm:$0xf]
        %v311 = vld [vmem:[#allocation5 + $0x24] sm:$0xff]
        %v312 = vld [vmem:[#allocation5 + $0x2c] sm:$0xf]
        %v313 = vld [vmem:[#allocation5 + $0x30] sm:$0xff]
        %v314 = vld [vmem:[#allocation5 + $0x38] sm:$0xf]
        %v315 = vld [vmem:[#allocation5 + $0x3c] sm:$0xff]
        %v316 = vld [vmem:[#allocation5 + $0x44] sm:$0xf]
        %v317 = vld [vmem:[#allocation5 + $0x48] sm:$0xff]
        %v318 = vld [vmem:[#allocation5 + $0x50] sm:$0xf]
        %v319 = vld [vmem:[#allocation5 + $0x54] sm:$0xff]
        %v320 = vld [vmem:[#allocation5 + $0x5c] sm:$0xf]
        %v321 = vld [vmem:[#allocation5 + $0x60] sm:$0xff]
        %v322 = vld [vmem:[#allocation5 + $0x68] sm:$0xf]
        %v323 = vld [vmem:[#allocation5 + $0x6c] sm:$0xff]
        %v324 = vld [vmem:[#allocation5 + $0x74] sm:$0xf]
        %v325 = vld [vmem:[#allocation5 + $0x78] sm:$0xff]
        %v326 = vld [vmem:[#allocation5 + $0x80] sm:$0xf]
        %v327 = vld [vmem:[#allocation5 + $0x84] sm:$0xff]
        %v328 = vld [vmem:[#allocation5 + $0x8c] sm:$0xf]
        %v329 = vld [vmem:[#allocation5 + $0x90] sm:$0xff]
        %v330 = vld [vmem:[#allocation5 + $0x98] sm:$0xf]
        %v331 = vld [vmem:[#allocation5 + $0x9c] sm:$0xff]
        %v332 = vld [vmem:[#allocation5 + $0xa4] sm:$0xf]
        %v333 = vld [vmem:[#allocation5 + $0xa8] sm:$0xff]
        %v334 = vld [vmem:[#allocation5 + $0xb0] sm:$0xf]
        %v335 = vld [vmem:[#allocation5 + $0xb4] sm:$0xff]
        %v336 = vld [vmem:[#allocation5 + $0xbc] sm:$0xf]
        %v337 = vld [vmem:[%s2] sm:$0x7]
        %v339 = vlaneseq
        %v340 = vshrl.u32 %v339, 7
        %v341 = vsub.s32 0, %v340
        %v342 = vrot.slane %v337, %v341
        %v343 = vlaneseq
        %v344 = vshrl.u32 %v343, 7
        %v345 = vsub.s32 1, %v344
        %v346 = vrot.slane %v337, %v345
        %v347 = vlaneseq
        %v348 = vshrl.u32 %v347, 7
        %v349 = vsub.s32 2, %v348
        %v350 = vrot.slane %v337, %v349
        %v386 = vunpack.c.l.b16 %v305
        %v387 = vunpack.c.h.b16 %v305
        %v388 = vunpack.c.l.b16 %v306
        %v389 = vunpack.c.l.b16 %v307
        %v390 = vunpack.c.h.b16 %v307
        %v391 = vunpack.c.l.b16 %v308
        %v392 = vunpack.c.l.b16 %v309
        %v393 = vunpack.c.h.b16 %v309
        %v394 = vunpack.c.l.b16 %v310
        %v395 = vunpack.c.l.b16 %v311
        %v396 = vunpack.c.h.b16 %v311
        %v397 = vunpack.c.l.b16 %v312
        %v398 = vunpack.c.l.b16 %v313
        %v399 = vunpack.c.h.b16 %v313
        %v400 = vunpack.c.l.b16 %v314
        %v401 = vunpack.c.l.b16 %v315
        %v402 = vunpack.c.h.b16 %v315
        %v403 = vunpack.c.l.b16 %v316
        %v404 = vunpack.c.l.b16 %v317
        %v405 = vunpack.c.h.b16 %v317
        %v406 = vunpack.c.l.b16 %v318
        %v407 = vunpack.c.l.b16 %v319
        %v408 = vunpack.c.h.b16 %v319
        %v409 = vunpack.c.l.b16 %v320
        %v410 = vunpack.c.l.b16 %v321
        %v411 = vunpack.c.h.b16 %v321
        %v412 = vunpack.c.l.b16 %v322
        %v413 = vunpack.c.l.b16 %v323
        %v414 = vunpack.c.h.b16 %v323
        %v415 = vunpack.c.l.b16 %v324
        %v416 = vunpack.c.l.b16 %v325
        %v417 = vunpack.c.h.b16 %v325
        %v418 = vunpack.c.l.b16 %v326
        %v419 = vunpack.c.l.b16 %v327
        %v420 = vunpack.c.h.b16 %v327
        %v421 = vunpack.c.l.b16 %v328
        %v422 = vunpack.c.l.b16 %v329
        %v423 = vunpack.c.h.b16 %v329
        %v424 = vunpack.c.l.b16 %v330
        %v425 = vunpack.c.l.b16 %v331
        %v426 = vunpack.c.h.b16 %v331
        %v427 = vunpack.c.l.b16 %v332
        %v428 = vunpack.c.l.b16 %v333
        %v429 = vunpack.c.h.b16 %v333
        %v430 = vunpack.c.l.b16 %v334
        %v431 = vunpack.c.l.b16 %v335
        %v432 = vunpack.c.h.b16 %v335
        %v433 = vunpack.c.l.b16 %v336
        %v434 = vpack.c.b16 %v389, %v386
        %v435 = vpack.c.b16 %v390, %v387
        %v436 = vpack.c.b16 %v391, %v388
        %v437 = vpack.c.b16 %v395, %v392
        %v438 = vpack.c.b16 %v396, %v393
        %v439 = vpack.c.b16 %v397, %v394
        %v440 = vpack.c.b16 %v401, %v398
        %v441 = vpack.c.b16 %v402, %v399
        %v442 = vpack.c.b16 %v403, %v400
        %v443 = vpack.c.b16 %v407, %v404
        %v444 = vpack.c.b16 %v408, %v405
        %v445 = vpack.c.b16 %v409, %v406
        %v446 = vpack.c.b16 %v413, %v410
        %v447 = vpack.c.b16 %v414, %v411
        %v448 = vpack.c.b16 %v415, %v412
        %v449 = vpack.c.b16 %v419, %v416
        %v450 = vpack.c.b16 %v420, %v417
        %v451 = vpack.c.b16 %v421, %v418
        %v452 = vpack.c.b16 %v425, %v422
        %v453 = vpack.c.b16 %v426, %v423
        %v454 = vpack.c.b16 %v427, %v424
        %v455 = vpack.c.b16 %v431, %v428
        %v456 = vpack.c.b16 %v432, %v429
        %v457 = vpack.c.b16 %v433, %v430
        %482 = vmatprep.subr.bf16.mxu0 %v456
        %483 = vmatpush1.bf16.msra.mxu0 %v455
        %484 = vmatprep.subr.bf16.mxu0 %v453
        %485 = vmatpush1.bf16.msra.mxu0 %v452
        %486 = vmatprep.subr.bf16.mxu0 %v450
        %487 = vmatpush1.bf16.msra.mxu0 %v449
        %488 = vmatprep.subr.bf16.mxu0 %v447
        %489 = vmatpush1.bf16.msra.mxu0 %v446
        %490 = vmatprep.subr.bf16.mxu0 %v444
        %491 = vmatpush1.bf16.msra.mxu0 %v443
        %492 = vmatprep.subr.bf16.mxu0 %v441
        %493 = vmatpush1.bf16.msra.mxu0 %v440
        %494 = vmatprep.subr.bf16.mxu0 %v438
        %495 = vmatpush1.bf16.msra.mxu0 %v437
        %496 = vmatprep.subr.bf16.mxu0 %v435
        %497 = vmatpush1.bf16.msra.mxu0 %v434
        %498 = vmatprep.subr.bf16.mxu0 0
        %499 = vmatpush2.bf16.msra.mxu0 0
        %500 = vmatprep.subr.bf16.mxu0 0
        %501 = vmatpush2.bf16.msra.mxu0 0
        %502 = vmatprep.subr.bf16.mxu0 0
        %503 = vmatpush2.bf16.msra.mxu0 0
        %504 = vmatprep.subr.bf16.mxu0 0
        %505 = vmatpush2.bf16.msra.mxu0 0
        %506 = vmatprep.subr.bf16.mxu0 0
        %507 = vmatpush2.bf16.msra.mxu0 0
        %508 = vmatprep.subr.bf16.mxu0 0
        %509 = vmatpush2.bf16.msra.mxu0 0
        %510 = vmatprep.subr.bf16.mxu0 0
        %511 = vmatpush2.bf16.msra.mxu0 0
        %512 = vmatprep.subr.bf16.mxu0 0
        %513 = vmatpush2.bf16.msra.mxu0 0
        %514 = vmatprep.mubr.bf16.mxu0 0
        %515 = vmatmul.mubr.bf16.gmra.mxu0 %v297
        %v516 = vpop.f32.mrf.mxu0
        %v517 = vadd.f32 %v342, %v516
        %v518 = vpop.f32.mrf.mxu0
        %v519 = vadd.f32 %v346, %v518
        %v520 = vpop.f32.mrf.mxu0
        %v521 = vadd.f32 %v342, %v520
        %v522 = vpop.f32.mrf.mxu0
        %v523 = vadd.f32 %v346, %v522
        %524 = vmatprep.mubr.bf16.mxu0 0
        %525 = vmatmul.mubr.bf16.gmra.mxu0 %v298
        %v526 = vpop.f32.mrf.mxu0
        %v527 = vadd.f32 %v342, %v526
        %v528 = vpop.f32.mrf.mxu0
        %v529 = vadd.f32 %v346, %v528
        %v530 = vpop.f32.mrf.mxu0
        %v531 = vadd.f32 %v342, %v530
        %v532 = vpop.f32.mrf.mxu0
        %v533 = vadd.f32 %v346, %v532
        %534 = vmatprep.mubr.bf16.mxu0 0
        %535 = vmatmul.mubr.bf16.gmra.mxu0 %v299
        %v536 = vpop.f32.mrf.mxu0
        %v537 = vadd.f32 %v342, %v536
        %v538 = vpop.f32.mrf.mxu0
        %v539 = vadd.f32 %v346, %v538
        %v540 = vpop.f32.mrf.mxu0
        %v541 = vadd.f32 %v342, %v540
        %v542 = vpop.f32.mrf.mxu0
        %v543 = vadd.f32 %v346, %v542
        %544 = vmatprep.mubr.bf16.mxu0 0
        %545 = vmatmul.mubr.bf16.gmra.mxu0 %v300
        %v546 = vpop.f32.mrf.mxu0
        %v547 = vadd.f32 %v342, %v546
        %v548 = vpop.f32.mrf.mxu0
        %v549 = vadd.f32 %v346, %v548
        %v550 = vpop.f32.mrf.mxu0
        %v551 = vadd.f32 %v342, %v550
        %v552 = vpop.f32.mrf.mxu0
        %v553 = vadd.f32 %v346, %v552
        %554 = vmatprep.mubr.bf16.mxu0 0
        %555 = vmatmul.mubr.bf16.gmra.mxu0 %v301
        %v556 = vpop.f32.mrf.mxu0
        %v557 = vadd.f32 %v342, %v556
        %v558 = vpop.f32.mrf.mxu0
        %v559 = vadd.f32 %v346, %v558
        %v560 = vpop.f32.mrf.mxu0
        %v561 = vadd.f32 %v342, %v560
        %v562 = vpop.f32.mrf.mxu0
        %v563 = vadd.f32 %v346, %v562
        %564 = vmatprep.mubr.bf16.mxu0 0
        %565 = vmatmul.mubr.bf16.gmra.mxu0 %v302
        %v566 = vpop.f32.mrf.mxu0
        %v567 = vadd.f32 %v342, %v566
        %v568 = vpop.f32.mrf.mxu0
        %v569 = vadd.f32 %v346, %v568
        %v570 = vpop.f32.mrf.mxu0
        %v571 = vadd.f32 %v342, %v570
        %v572 = vpop.f32.mrf.mxu0
        %v573 = vadd.f32 %v346, %v572
        %574 = vmatprep.mubr.bf16.mxu0 0
        %575 = vmatmul.mubr.bf16.gmra.mxu0 %v303
        %v576 = vpop.f32.mrf.mxu0
        %v577 = vadd.f32 %v342, %v576
        %v578 = vpop.f32.mrf.mxu0
        %v579 = vadd.f32 %v346, %v578
        %v580 = vpop.f32.mrf.mxu0
        %v581 = vadd.f32 %v342, %v580
        %v582 = vpop.f32.mrf.mxu0
        %v583 = vadd.f32 %v346, %v582
        %584 = vmatprep.mubr.bf16.mxu0 0
        %585 = vmatmul.mubr.bf16.gmra.mxu0 %v304
        %v586 = vpop.f32.mrf.mxu0
        %v587 = vadd.f32 %v342, %v586
        %v588 = vpop.f32.mrf.mxu0
        %v589 = vadd.f32 %v346, %v588
        %v590 = vpop.f32.mrf.mxu0
        %v591 = vadd.f32 %v342, %v590
        %v592 = vpop.f32.mrf.mxu0
        %v593 = vadd.f32 %v346, %v592
        %594 = vdwg.mxu0
        %595 = vmatprep.subr.bf16.mxu0 0
        %596 = vmatpush1.bf16.msra.mxu0 %v457
        %597 = vmatprep.subr.bf16.mxu0 0
        %598 = vmatpush1.bf16.msra.mxu0 %v454
        %599 = vmatprep.subr.bf16.mxu0 0
        %600 = vmatpush1.bf16.msra.mxu0 %v451
        %601 = vmatprep.subr.bf16.mxu0 0
        %602 = vmatpush1.bf16.msra.mxu0 %v448
        %603 = vmatprep.subr.bf16.mxu0 0
        %604 = vmatpush1.bf16.msra.mxu0 %v445
        %605 = vmatprep.subr.bf16.mxu0 0
        %606 = vmatpush1.bf16.msra.mxu0 %v442
        %607 = vmatprep.subr.bf16.mxu0 0
        %608 = vmatpush1.bf16.msra.mxu0 %v439
        %609 = vmatprep.subr.bf16.mxu0 0
        %610 = vmatpush1.bf16.msra.mxu0 %v436
        %611 = vmatprep.subr.bf16.mxu0 0
        %612 = vmatpush2.bf16.msra.mxu0 0
        %613 = vmatprep.subr.bf16.mxu0 0
        %614 = vmatpush2.bf16.msra.mxu0 0
        %615 = vmatprep.subr.bf16.mxu0 0
        %616 = vmatpush2.bf16.msra.mxu0 0
        %617 = vmatprep.subr.bf16.mxu0 0
        %618 = vmatpush2.bf16.msra.mxu0 0
        %619 = vmatprep.subr.bf16.mxu0 0
        %620 = vmatpush2.bf16.msra.mxu0 0
        %621 = vmatprep.subr.bf16.mxu0 0
        %622 = vmatpush2.bf16.msra.mxu0 0
        %623 = vmatprep.subr.bf16.mxu0 0
        %624 = vmatpush2.bf16.msra.mxu0 0
        %625 = vmatprep.subr.bf16.mxu0 0
        %626 = vmatpush2.bf16.msra.mxu0 0
        %627 = vmatprep.mubr.bf16.mxu0 0
        %628 = vmatmul.mubr.bf16.gmra.mxu0 %v297
        %v629 = vpop.f32.mrf.mxu0
        %v630 = vadd.f32 %v350, %v629
        %v631 = vpop.f32.mrf.mxu0
        %v632 = vpop.f32.mrf.mxu0
        %v633 = vadd.f32 %v350, %v632
        %v634 = vpop.f32.mrf.mxu0
        %635 = vmatprep.mubr.bf16.mxu0 0
        %636 = vmatmul.mubr.bf16.gmra.mxu0 %v298
        %v637 = vpop.f32.mrf.mxu0
        %v638 = vadd.f32 %v350, %v637
        %v639 = vpop.f32.mrf.mxu0
        %v640 = vpop.f32.mrf.mxu0
        %v641 = vadd.f32 %v350, %v640
        %v642 = vpop.f32.mrf.mxu0
        %643 = vmatprep.mubr.bf16.mxu0 0
        %644 = vmatmul.mubr.bf16.gmra.mxu0 %v299
        %v645 = vpop.f32.mrf.mxu0
        %v646 = vadd.f32 %v350, %v645
        %v647 = vpop.f32.mrf.mxu0
        %v648 = vpop.f32.mrf.mxu0
        %v649 = vadd.f32 %v350, %v648
        %v650 = vpop.f32.mrf.mxu0
        %651 = vmatprep.mubr.bf16.mxu0 0
        %652 = vmatmul.mubr.bf16.gmra.mxu0 %v300
        %v653 = vpop.f32.mrf.mxu0
        %v654 = vadd.f32 %v350, %v653
        %v655 = vpop.f32.mrf.mxu0
        %v656 = vpop.f32.mrf.mxu0
        %v657 = vadd.f32 %v350, %v656
        %v658 = vpop.f32.mrf.mxu0
        %659 = vmatprep.mubr.bf16.mxu0 0
        %660 = vmatmul.mubr.bf16.gmra.mxu0 %v301
        %v661 = vpop.f32.mrf.mxu0
        %v662 = vadd.f32 %v350, %v661
        %v663 = vpop.f32.mrf.mxu0
        %v664 = vpop.f32.mrf.mxu0
        %v665 = vadd.f32 %v350, %v664
        %v666 = vpop.f32.mrf.mxu0
        %667 = vmatprep.mubr.bf16.mxu0 0
        %668 = vmatmul.mubr.bf16.gmra.mxu0 %v302
        %v669 = vpop.f32.mrf.mxu0
        %v670 = vadd.f32 %v350, %v669
        %v671 = vpop.f32.mrf.mxu0
        %v672 = vpop.f32.mrf.mxu0
        %v673 = vadd.f32 %v350, %v672
        %v674 = vpop.f32.mrf.mxu0
        %675 = vmatprep.mubr.bf16.mxu0 0
        %676 = vmatmul.mubr.bf16.gmra.mxu0 %v303
        %v677 = vpop.f32.mrf.mxu0
        %v678 = vadd.f32 %v350, %v677
        %v679 = vpop.f32.mrf.mxu0
        %v680 = vpop.f32.mrf.mxu0
        %v681 = vadd.f32 %v350, %v680
        %v682 = vpop.f32.mrf.mxu0
        %683 = vmatprep.mubr.bf16.mxu0 0
        %684 = vmatmul.mubr.bf16.gmra.mxu0 %v304
        %v685 = vpop.f32.mrf.mxu0
        %v686 = vadd.f32 %v350, %v685
        %v687 = vpop.f32.mrf.mxu0
        %v688 = vpop.f32.mrf.mxu0
        %v689 = vadd.f32 %v350, %v688
        %v690 = vpop.f32.mrf.mxu0
        %691 = vdwg.mxu0
        %v692 = vpack.c.bf16 %v521, %v517
        %v693 = vpack.c.bf16 %v523, %v519
        %v694 = vpack.c.bf16 %v633, %v630
        %v695 = vpack.c.bf16 %v531, %v527
        %v696 = vpack.c.bf16 %v533, %v529
        %v697 = vpack.c.bf16 %v641, %v638
        %v698 = vpack.c.bf16 %v541, %v537
        %v699 = vpack.c.bf16 %v543, %v539
        %v700 = vpack.c.bf16 %v649, %v646
        %v701 = vpack.c.bf16 %v551, %v547
        %v702 = vpack.c.bf16 %v553, %v549
        %v703 = vpack.c.bf16 %v657, %v654
        %v704 = vpack.c.bf16 %v561, %v557
        %v705 = vpack.c.bf16 %v563, %v559
        %v706 = vpack.c.bf16 %v665, %v662
        %v707 = vpack.c.bf16 %v571, %v567
        %v708 = vpack.c.bf16 %v573, %v569
        %v709 = vpack.c.bf16 %v673, %v670
        %v710 = vpack.c.bf16 %v581, %v577
        %v711 = vpack.c.bf16 %v583, %v579
        %v712 = vpack.c.bf16 %v681, %v678
        %v713 = vpack.c.bf16 %v591, %v587
        %v714 = vpack.c.bf16 %v593, %v589
        %v715 = vpack.c.bf16 %v689, %v686
        %v724 = vunpack.c.l.b16 %v692
        %v725 = vunpack.c.h.b16 %v692
        %v726 = vunpack.c.l.b16 %v695
        %v727 = vunpack.c.h.b16 %v695
        %v728 = vunpack.c.l.b16 %v698
        %v729 = vunpack.c.h.b16 %v698
        %v730 = vunpack.c.l.b16 %v701
        %v731 = vunpack.c.h.b16 %v701
        %v732 = vunpack.c.l.b16 %v704
        %v733 = vunpack.c.h.b16 %v704
        %v734 = vunpack.c.l.b16 %v707
        %v735 = vunpack.c.h.b16 %v707
        %v736 = vunpack.c.l.b16 %v710
        %v737 = vunpack.c.h.b16 %v710
        %v738 = vunpack.c.l.b16 %v713
        %v739 = vunpack.c.h.b16 %v713
        %v740 = vpack.c.b16 %v724, %v724
        %v741 = vpack.c.b16 %v725, %v725
        %v742 = vpack.c.b16 %v726, %v726
        %v743 = vpack.c.b16 %v727, %v727
        %v744 = vpack.c.b16 %v728, %v728
        %v745 = vpack.c.b16 %v729, %v729
        %v746 = vpack.c.b16 %v730, %v730
        %v747 = vpack.c.b16 %v731, %v731
        %v748 = vpack.c.b16 %v732, %v732
        %v749 = vpack.c.b16 %v733, %v733
        %v750 = vpack.c.b16 %v734, %v734
        %v751 = vpack.c.b16 %v735, %v735
        %v752 = vpack.c.b16 %v736, %v736
        %v753 = vpack.c.b16 %v737, %v737
        %v754 = vpack.c.b16 %v738, %v738
        %v755 = vpack.c.b16 %v739, %v739
        %772 = vst [vmem:[%s261] sm:$0xf] %v740
        %773 = vst [vmem:[%s261 + $0x4] sm:$0xf] %v741
        %774 = vst [vmem:[%s261 + $0x8] sm:$0xf] %v742
        %775 = vst [vmem:[%s261 + $0xc] sm:$0xf] %v743
        %776 = vst [vmem:[%s261 + $0x10] sm:$0xf] %v744
        %777 = vst [vmem:[%s261 + $0x14] sm:$0xf] %v745
        %778 = vst [vmem:[%s261 + $0x18] sm:$0xf] %v746
        %779 = vst [vmem:[%s261 + $0x1c] sm:$0xf] %v747
        %780 = vst [vmem:[%s261 + $0x20] sm:$0xf] %v748
        %781 = vst [vmem:[%s261 + $0x24] sm:$0xf] %v749
        %782 = vst [vmem:[%s261 + $0x28] sm:$0xf] %v750
        %783 = vst [vmem:[%s261 + $0x2c] sm:$0xf] %v751
        %784 = vst [vmem:[%s261 + $0x30] sm:$0xf] %v752
        %785 = vst [vmem:[%s261 + $0x34] sm:$0xf] %v753
        %786 = vst [vmem:[%s261 + $0x38] sm:$0xf] %v754
        %787 = vst [vmem:[%s261 + $0x3c] sm:$0xf] %v755
        %v796 = vunpack.c.l.b16 %v693
        %v797 = vunpack.c.h.b16 %v693
        %v798 = vunpack.c.l.b16 %v696
        %v799 = vunpack.c.h.b16 %v696
        %v800 = vunpack.c.l.b16 %v699
        %v801 = vunpack.c.h.b16 %v699
        %v802 = vunpack.c.l.b16 %v702
        %v803 = vunpack.c.h.b16 %v702
        %v804 = vunpack.c.l.b16 %v705
        %v805 = vunpack.c.h.b16 %v705
        %v806 = vunpack.c.l.b16 %v708
        %v807 = vunpack.c.h.b16 %v708
        %v808 = vunpack.c.l.b16 %v711
        %v809 = vunpack.c.h.b16 %v711
        %v810 = vunpack.c.l.b16 %v714
        %v811 = vunpack.c.h.b16 %v714
        %v812 = vpack.c.b16 %v796, %v796
        %v813 = vpack.c.b16 %v797, %v797
        %v814 = vpack.c.b16 %v798, %v798
        %v815 = vpack.c.b16 %v799, %v799
        %v816 = vpack.c.b16 %v800, %v800
        %v817 = vpack.c.b16 %v801, %v801
        %v818 = vpack.c.b16 %v802, %v802
        %v819 = vpack.c.b16 %v803, %v803
        %v820 = vpack.c.b16 %v804, %v804
        %v821 = vpack.c.b16 %v805, %v805
        %v822 = vpack.c.b16 %v806, %v806
        %v823 = vpack.c.b16 %v807, %v807
        %v824 = vpack.c.b16 %v808, %v808
        %v825 = vpack.c.b16 %v809, %v809
        %v826 = vpack.c.b16 %v810, %v810
        %v827 = vpack.c.b16 %v811, %v811
        %844 = vst [vmem:[%s268] sm:$0xf] %v812
        %845 = vst [vmem:[%s268 + $0x4] sm:$0xf] %v813
        %846 = vst [vmem:[%s268 + $0x8] sm:$0xf] %v814
        %847 = vst [vmem:[%s268 + $0xc] sm:$0xf] %v815
        %848 = vst [vmem:[%s268 + $0x10] sm:$0xf] %v816
        %849 = vst [vmem:[%s268 + $0x14] sm:$0xf] %v817
        %850 = vst [vmem:[%s268 + $0x18] sm:$0xf] %v818
        %851 = vst [vmem:[%s268 + $0x1c] sm:$0xf] %v819
        %852 = vst [vmem:[%s268 + $0x20] sm:$0xf] %v820
        %853 = vst [vmem:[%s268 + $0x24] sm:$0xf] %v821
        %854 = vst [vmem:[%s268 + $0x28] sm:$0xf] %v822
        %855 = vst [vmem:[%s268 + $0x2c] sm:$0xf] %v823
        %856 = vst [vmem:[%s268 + $0x30] sm:$0xf] %v824
        %857 = vst [vmem:[%s268 + $0x34] sm:$0xf] %v825
        %858 = vst [vmem:[%s268 + $0x38] sm:$0xf] %v826
        %859 = vst [vmem:[%s268 + $0x3c] sm:$0xf] %v827
        %v868 = vunpack.c.l.b16 %v694
        %v869 = vunpack.c.h.b16 %v694
        %v870 = vunpack.c.l.b16 %v697
        %v871 = vunpack.c.h.b16 %v697
        %v872 = vunpack.c.l.b16 %v700
        %v873 = vunpack.c.h.b16 %v700
        %v874 = vunpack.c.l.b16 %v703
        %v875 = vunpack.c.h.b16 %v703
        %v876 = vunpack.c.l.b16 %v706
        %v877 = vunpack.c.h.b16 %v706
        %v878 = vunpack.c.l.b16 %v709
        %v879 = vunpack.c.h.b16 %v709
        %v880 = vunpack.c.l.b16 %v712
        %v881 = vunpack.c.h.b16 %v712
        %v882 = vunpack.c.l.b16 %v715
        %v883 = vunpack.c.h.b16 %v715
        %v884 = vpack.c.b16 %v868, %v868
        %v885 = vpack.c.b16 %v869, %v869
        %v886 = vpack.c.b16 %v870, %v870
        %v887 = vpack.c.b16 %v871, %v871
        %v888 = vpack.c.b16 %v872, %v872
        %v889 = vpack.c.b16 %v873, %v873
        %v890 = vpack.c.b16 %v874, %v874
        %v891 = vpack.c.b16 %v875, %v875
        %v892 = vpack.c.b16 %v876, %v876
        %v893 = vpack.c.b16 %v877, %v877
        %v894 = vpack.c.b16 %v878, %v878
        %v895 = vpack.c.b16 %v879, %v879
        %v896 = vpack.c.b16 %v880, %v880
        %v897 = vpack.c.b16 %v881, %v881
        %v898 = vpack.c.b16 %v882, %v882
        %v899 = vpack.c.b16 %v883, %v883
        %916 = vst [vmem:[%s275] sm:$0xf] %v884
        %917 = vst [vmem:[%s275 + $0x4] sm:$0xf] %v885
        %918 = vst [vmem:[%s275 + $0x8] sm:$0xf] %v886
        %919 = vst [vmem:[%s275 + $0xc] sm:$0xf] %v887
        %920 = vst [vmem:[%s275 + $0x10] sm:$0xf] %v888
        %921 = vst [vmem:[%s275 + $0x14] sm:$0xf] %v889
        %922 = vst [vmem:[%s275 + $0x18] sm:$0xf] %v890
        %923 = vst [vmem:[%s275 + $0x1c] sm:$0xf] %v891
        %924 = vst [vmem:[%s275 + $0x20] sm:$0xf] %v892
        %925 = vst [vmem:[%s275 + $0x24] sm:$0xf] %v893
        %926 = vst [vmem:[%s275 + $0x28] sm:$0xf] %v894
        %927 = vst [vmem:[%s275 + $0x2c] sm:$0xf] %v895
        %928 = vst [vmem:[%s275 + $0x30] sm:$0xf] %v896
        %929 = vst [vmem:[%s275 + $0x34] sm:$0xf] %v897
        %930 = vst [vmem:[%s275 + $0x38] sm:$0xf] %v898
        %931 = vst [vmem:[%s275 + $0x3c] sm:$0xf] %v899
        %s932 = sand.u32 %s103, 1
        %s933 = scalar_lea.sflag [#allocation4], %s932
        %s934 = sand.u32 %s103, 1
        %s935 = smul.addr %s934, 64
        %s936 = scalar_lea.vmem [#allocation7], %s935
        %s937 = sand.u32 %s27, 1
        %s938 = scalar_lea.sflag [#allocation9], %s937
        %s939 = sand.u32 %s129, 1
        %s940 = smul.addr %s939, 64
        %s941 = scalar_lea.vmem [#allocation8], %s940
        %s942 = sand.u32 %s27, 1
        %s943 = scalar_lea.sflag [#allocation9], %s942
        %s944 = sand.u32 %s155, 1
        %s945 = smul.addr %s944, 64
        %s946 = scalar_lea.vmem [#allocation10], %s945
        // Predicated region
        $region41: #{tpu_custom_call.1} parent=31 // pred_check
          %p947 = pneg %p113
        $region42: #{tpu_custom_call.1} parent=31 // pred_check_branch
          %949 = sbr.rel (%p947) target = $region44
        $region43: #{tpu_custom_call.1} parent=31 // pred_region
          %s950 = smul.u32 16, %s27
          %s952 = ssub.s32 1024, 1024
          %953 = vsyncadd %s933, %s952
          %s954 = smul.addr %s950, 64
          %s955 = scalar_lea.hbm %s3, %s954
          %s956 = sshll.u32 %s936, 4
          %s957 = int_to_ptr.vmem [resolvable:$true] %s956
          %962 = dma.vmem_to_hbm [thread:$0]  %s957, 1024, %s955, %s933, 64, 64, 4
        $region44: #{tpu_custom_call.1} parent=31 // pred_fallthru
          _
        // Predicated region
        $region45: #{tpu_custom_call.1} parent=31 // pred_check
          %p963 = pneg %p139
        $region46: #{tpu_custom_call.1} parent=31 // pred_check_branch
          %965 = sbr.rel (%p963) target = $region48
        $region47: #{tpu_custom_call.1} parent=31 // pred_region
          %s966 = smul.u32 16, %s27
          %s968 = ssub.s32 1024, 1024
          %969 = vsyncadd %s938, %s968
          %s970 = smul.addr %s966, 64
          %s971 = scalar_lea.hbm %s4, %s970
          %s972 = sshll.u32 %s941, 4
          %s973 = int_to_ptr.vmem [resolvable:$true] %s972
          %978 = dma.vmem_to_hbm [thread:$0]  %s973, 1024, %s971, %s938, 64, 64, 4
        $region48: #{tpu_custom_call.1} parent=31 // pred_fallthru
          _
        // Predicated region
        $region49: #{tpu_custom_call.1} parent=31 // pred_check
          %p979 = pneg %p165
        $region50: #{tpu_custom_call.1} parent=31 // pred_check_branch
          %981 = sbr.rel (%p979) target = $region52
        $region51: #{tpu_custom_call.1} parent=31 // pred_region
          %s982 = smul.u32 16, %s27
          %s984 = ssub.s32 1024, 1024
          %985 = vsyncadd %s943, %s984
          %s986 = smul.addr %s982, 64
          %s987 = scalar_lea.hbm %s5, %s986
          %s988 = sshll.u32 %s946, 4
          %s989 = int_to_ptr.vmem [resolvable:$true] %s988
          %994 = dma.vmem_to_hbm [thread:$0]  %s989, 1024, %s987, %s943, 64, 64, 4
        $region52: #{tpu_custom_call.1} parent=31 // pred_fallthru
          _
      $region32: #{tpu_custom_call.1} parent=5 // pred_fallthru
        _
      %p995 = scmp.le.s32.totalorder 2, %s22
      // Predicated region
      $region53: #{tpu_custom_call.1} parent=5 // pred_check
        %p996 = pneg %p995
      $region54: #{tpu_custom_call.1} parent=5 // pred_check_branch
        %998 = sbr.rel (%p996) target = $region56
      $region55: #{tpu_custom_call.1} parent=5 // pred_region
        %s999 = ssub.s32 %s22, 2
        // Predicated region
        $region57: #{tpu_custom_call.1} parent=55 // pred_check
          %p1000 = pneg %p119
        $region58: #{tpu_custom_call.1} parent=55 // pred_check_branch
          %1002 = sbr.rel (%p1000) target = $region60
        $region59: #{tpu_custom_call.1} parent=55 // pred_region
          %s1003 = sand.u32 %s104, 1
          %s1004 = scalar_lea.sflag [#allocation4], %s1003
          %s1005 = sand.u32 %s104, 1
          %s1006 = smul.addr %s1005, 64
          %s1007 = scalar_lea.vmem [#allocation7], %s1006
          %1008 = dma.done %s1004, 1024
        $region60: #{tpu_custom_call.1} parent=55 // pred_fallthru
          _
        // Predicated region
        $region61: #{tpu_custom_call.1} parent=55 // pred_check
          %p1009 = pneg %p145
        $region62: #{tpu_custom_call.1} parent=55 // pred_check_branch
          %1011 = sbr.rel (%p1009) target = $region64
        $region63: #{tpu_custom_call.1} parent=55 // pred_region
          %s1012 = sand.u32 %s28, 1
          %s1013 = scalar_lea.sflag [#allocation9], %s1012
          %s1014 = sand.u32 %s130, 1
          %s1015 = smul.addr %s1014, 64
          %s1016 = scalar_lea.vmem [#allocation8], %s1015
          %1017 = dma.done %s1013, 1024
        $region64: #{tpu_custom_call.1} parent=55 // pred_fallthru
          _
        // Predicated region
        $region65: #{tpu_custom_call.1} parent=55 // pred_check
          %p1018 = pneg %p171
        $region66: #{tpu_custom_call.1} parent=55 // pred_check_branch
          %1020 = sbr.rel (%p1018) target = $region68
        $region67: #{tpu_custom_call.1} parent=55 // pred_region
          %s1021 = sand.u32 %s28, 1
          %s1022 = scalar_lea.sflag [#allocation9], %s1021
          %s1023 = sand.u32 %s156, 1
          %s1024 = smul.addr %s1023, 64
          %s1025 = scalar_lea.vmem [#allocation10], %s1024
          %1026 = dma.done %s1022, 1024
        $region68: #{tpu_custom_call.1} parent=55 // pred_fallthru
          _
      $region56: #{tpu_custom_call.1} parent=5 // pred_fallthru
        _
    $region6: #{tpu_custom_call.1} parent=1 // loop_footer
      %s26 = sadd.s32 1, %s22
    $region7: #{tpu_custom_call.1} parent=1 // loop_footer_branch
      %21 = sbr.rel target = $region3
    $region8: #{tpu_custom_call.1} parent=1 // loop_exit
      _
    %1027 = vsyncpa [#allocation3], 1
    %s1028 = scalar_lea.sflag [#allocation3], 1
    %1029 = vsyncpa %s1028, 1
    %1030 = vsyncpa [#allocation6], 1
    %1031 = vsyncpa [#allocation4], 1
    %s1032 = scalar_lea.sflag [#allocation4], 1
    %1033 = vsyncpa %s1032, 1
    %1034 = vsyncpa [#allocation9], 1
    %s1035 = scalar_lea.sflag [#allocation9], 1
    %1036 = vsyncpa %s1035, 1

// kernel: tpu_custom_call.1
$region0: #{tpu_custom_call.1}
  #allocation0 [shape = 'u32[]', space=smem, size = 0x4, offset = 0x4, fixed_abs, tag = 'smem constant byte address 0x4 - core index']
  #allocation1 [shape = 'u32[144,128]{1,0:T(1,128)}', space=vmem, size = 0x12000, scoped, tag = 'internal scratch']
  %s0 = inlined_call_operand.hbm [shape: f32[512,128], index: 0, kind: input, shape index: {}]
  %s1 = inlined_call_operand.hbm [shape: bf16[128,384], index: 1, kind: input, shape index: {}]
  %s2 = inlined_call_operand.vmem [shape: f32[1,384], index: 2, kind: input, shape index: {}]
  %s3 = inlined_call_operand.hbm [shape: bf16[512,128], index: 3, kind: output, shape index: {0}]
  %s4 = inlined_call_operand.hbm [shape: bf16[512,128], index: 4, kind: output, shape index: {1}]
  %s5 = inlined_call_operand.hbm [shape: bf16[512,128], index: 5, kind: output, shape index: {2}]
  %6 = xla_tuple %s3, %s4, %s5
  %s7 = sld [smem:[#allocation0]]
  $region69: #{tpu_custom_call.1} parent=0
    _
  %s9 = ssub.s32 1, %s7
  %s10 = scalar_select 0, %s9, %s7
  $region1: #{tpu_custom_call.1} parent=0
    #allocation2 [shape = 'u8[131072]{0}', space=vmem, size = 0x20000, scoped, tag = 'input window, operand 0']
    #allocation3 [shape = 's32[2]{0}', space=sflag, size = 0x8, scoped, tag = 'scoped memory for tpu_custom_call.1']
    #allocation4 [shape = 's32[2]{0}', space=sflag, size = 0x8, scoped, tag = 'scoped memory for tpu_custom_call.1']
    #allocation5 [shape = 'u8[98304]{0}', space=vmem, size = 0x18000, scoped, tag = 'input window, operand 1, single buffered']
    #allocation6 [shape = 's32[1]{0}', space=sflag, size = 0x4, scoped, tag = 'scoped memory for tpu_custom_call.1']
    #allocation7 [shape = 'u8[65536]{0}', space=vmem, size = 0x10000, scoped, tag = 'output window, operand 0']
    #allocation8 [shape = 'u8[65536]{0}', space=vmem, size = 0x10000, scoped, tag = 'output window, operand 1']
    #allocation9 [shape = 's32[2]{0}', space=sflag, size = 0x8, scoped, tag = 'scoped memory for tpu_custom_call.1']
    #allocation10 [shape = 'u8[65536]{0}', space=vmem, size = 0x10000, scoped, tag = 'output window, operand 2']
    %11 = vsyncpa [#allocation3], 0
    %s12 = scalar_lea.sflag [#allocation3], 1
    %13 = vsyncpa %s12, 0
    %14 = vsyncpa [#allocation6], 0
    %15 = vsyncpa [#allocation4], 0
    %s16 = scalar_lea.sflag [#allocation4], 1
    %17 = vsyncpa %s16, 0
    %18 = vsyncpa [#allocation9], 0
    %s19 = scalar_lea.sflag [#allocation9], 1
    %20 = vsyncpa %s19, 0
    loop: start=0, step=1, limit=6
    $region2: #{tpu_custom_call.1} parent=1 // loop_pre_header
      _
    $region3: #{tpu_custom_call.1} parent=1 // loop_header
      %s22 = sphi 0, %s26
      %p23 = scmp.ge.s32.totalorder %s22, 6
      %s32 = sphi 0, %s34
      %s35 = sphi 0, %s32
      %s36 = sphi 0, %s35
      %s52 = sphi 0, %s36
      %s56 = sphi 0, %s56
      %s58 = sphi 0, %s56
      %s59 = sphi 0, %s58
      %s73 = sphi 0, %s59
      %s77 = sphi 0, %s77
      %s79 = sphi 0, %s77
      %s80 = sphi 0, %s79
      %s94 = sphi 0, %s80
      %s100 = sphi 0, %s102
      %s103 = sphi 0, %s100
      %s104 = sphi 0, %s103
      %s120 = sphi 0, %s104
      %s126 = sphi 0, %s128
      %s129 = sphi 0, %s126
      %s130 = sphi 0, %s129
      %s146 = sphi 0, %s130
      %s152 = sphi 0, %s154
      %s155 = sphi 0, %s152
      %s156 = sphi 0, %s155
      %s172 = sphi 0, %s156
    $region4: #{tpu_custom_call.1} parent=1 // loop_header_branch
      %25 = sbr.rel (%p23) target = $region8
    $region5: #{tpu_custom_call.1} parent=1 // loop_body
      %s27 = ssub.s32 %s22, 1
      %s28 = ssub.s32 %s22, 2
      %s29 = sadd.s32 %s22, 1
      %s30 = ssub.s32 %s22, %s29
      %p31 = scmp.eq.s32.totalorder %s30, 0
      %s33 = sadd.s32 %s32, 1
      %s34 = scalar_select %p31, %s32, %s33
      %p37 = pneg %p31
      %p38 = scmp.eq.s32.totalorder %s22, 3
      %p39 = por %p37, %p38
      %p40 = scmp.ne.s32.totalorder %s32, %s35
      %p41 = scmp.eq.s32.totalorder %s22, 0
      %p42 = por %p40, %p41
      %p43 = scmp.ne.s32.totalorder %s32, %s35
      %p44 = scmp.eq.s32.totalorder %s27, 3
      %p45 = por %p43, %p44
      %p46 = scmp.ne.s32.totalorder %s35, %s36
      %p47 = scmp.eq.s32.totalorder %s27, 0
      %p48 = por %p46, %p47
      %p49 = scmp.ne.s32.totalorder %s35, %s36
      %p50 = scmp.eq.s32.totalorder %s28, 3
      %p51 = por %p49, %p50
      %p53 = scmp.ne.s32.totalorder %s36, %s52
      %p54 = scmp.eq.s32.totalorder %s28, 0
      %p55 = por %p53, %p54
      %s57 = sadd.s32 %s56, 1
      %p60 = scmp.eq.s32.totalorder %s22, 3
      %p61 = scmp.ne.s32.totalorder %s56, %s58
      %p62 = scmp.eq.s32.totalorder %s22, 0
      %p63 = por %p61, %p62
      %p64 = scmp.ne.s32.totalorder %s56, %s58
      %p65 = scmp.eq.s32.totalorder %s27, 3
      %p66 = por %p64, %p65
      %p67 = scmp.ne.s32.totalorder %s58, %s59
      %p68 = scmp.eq.s32.totalorder %s27, 0
      %p69 = por %p67, %p68
      %p70 = scmp.ne.s32.totalorder %s58, %s59
      %p71 = scmp.eq.s32.totalorder %s28, 3
      %p72 = por %p70, %p71
      %p74 = scmp.ne.s32.totalorder %s59, %s73
      %p75 = scmp.eq.s32.totalorder %s28, 0
      %p76 = por %p74, %p75
      %s78 = sadd.s32 %s77, 1
      %p81 = scmp.eq.s32.totalorder %s22, 3
      %p82 = scmp.ne.s32.totalorder %s77, %s79
      %p83 = scmp.eq.s32.totalorder %s22, 0
      %p84 = por %p82, %p83
      %p85 = scmp.ne.s32.totalorder %s77, %s79
      %p86 = scmp.eq.s32.totalorder %s27, 3
      %p87 = por %p85, %p86
      %p88 = scmp.ne.s32.totalorder %s79, %s80
      %p89 = scmp.eq.s32.totalorder %s27, 0
      %p90 = por %p88, %p89
      %p91 = scmp.ne.s32.totalorder %s79, %s80
      %p92 = scmp.eq.s32.totalorder %s28, 3
      %p93 = por %p91, %p92
      %p95 = scmp.ne.s32.totalorder %s80, %s94
      %p96 = scmp.eq.s32.totalorder %s28, 0
      %p97 = por %p95, %p96
      %s98 = ssub.s32 %s22, %s29
      %p99 = scmp.eq.s32.totalorder %s98, 0
      %s101 = sadd.s32 %s100, 1
      %s102 = scalar_select %p99, %s100, %s101
      %p105 = pneg %p99
      %p106 = scmp.eq.s32.totalorder %s22, 3
      %p107 = por %p105, %p106
      %p108 = scmp.ne.s32.totalorder %s100, %s103
      %p109 = scmp.eq.s32.totalorder %s22, 0
      %p110 = por %p108, %p109
      %p111 = scmp.ne.s32.totalorder %s100, %s103
      %p112 = scmp.eq.s32.totalorder %s27, 3
      %p113 = por %p111, %p112
      %p114 = scmp.ne.s32.totalorder %s103, %s104
      %p115 = scmp.eq.s32.totalorder %s27, 0
      %p116 = por %p114, %p115
      %p117 = scmp.ne.s32.totalorder %s103, %s104
      %p118 = scmp.eq.s32.totalorder %s28, 3
      %p119 = por %p117, %p118
      %p121 = scmp.ne.s32.totalorder %s104, %s120
      %p122 = scmp.eq.s32.totalorder %s28, 0
      %p123 = por %p121, %p122
      %s124 = ssub.s32 %s22, %s29
      %p125 = scmp.eq.s32.totalorder %s124, 0
      %s127 = sadd.s32 %s126, 1
      %s128 = scalar_select %p125, %s126, %s127
      %p131 = pneg %p125
      %p132 = scmp.eq.s32.totalorder %s22, 3
      %p133 = por %p131, %p132
      %p134 = scmp.ne.s32.totalorder %s126, %s129
      %p135 = scmp.eq.s32.totalorder %s22, 0
      %p136 = por %p134, %p135
      %p137 = scmp.ne.s32.totalorder %s126, %s129
      %p138 = scmp.eq.s32.totalorder %s27, 3
      %p139 = por %p137, %p138
      %p140 = scmp.ne.s32.totalorder %s129, %s130
      %p141 = scmp.eq.s32.totalorder %s27, 0
      %p142 = por %p140, %p141
      %p143 = scmp.ne.s32.totalorder %s129, %s130
      %p144 = scmp.eq.s32.totalorder %s28, 3
      %p145 = por %p143, %p144
      %p147 = scmp.ne.s32.totalorder %s130, %s146
      %p148 = scmp.eq.s32.totalorder %s28, 0
      %p149 = por %p147, %p148
      %s150 = ssub.s32 %s22, %s29
      %p151 = scmp.eq.s32.totalorder %s150, 0
      %s153 = sadd.s32 %s152, 1
      %s154 = scalar_select %p151, %s152, %s153
      %p157 = pneg %p151
      %p158 = scmp.eq.s32.totalorder %s22, 3
      %p159 = por %p157, %p158
      %p160 = scmp.ne.s32.totalorder %s152, %s155
      %p161 = scmp.eq.s32.totalorder %s22, 0
      %p162 = por %p160, %p161
      %p163 = scmp.ne.s32.totalorder %s152, %s155
      %p164 = scmp.eq.s32.totalorder %s27, 3
      %p165 = por %p163, %p164
      %p166 = scmp.ne.s32.totalorder %s155, %s156
      %p167 = scmp.eq.s32.totalorder %s27, 0
      %p168 = por %p166, %p167
      %p169 = scmp.ne.s32.totalorder %s155, %s156
      %p170 = scmp.eq.s32.totalorder %s28, 3
      %p171 = por %p169, %p170
      %p173 = scmp.ne.s32.totalorder %s156, %s172
      %p174 = scmp.eq.s32.totalorder %s28, 0
      %p175 = por %p173, %p174
      %p176 = scmp.le.s32.totalorder 1, %s22
      %p177 = scmp.lt.s32.totalorder %s22, 5
      %p178 = pnand %p176, %p177
      %p179 = pneg %p178
      // Predicated region
      $region9: #{tpu_custom_call.1} parent=5 // pred_check
        _
      $region10: #{tpu_custom_call.1} parent=5 // pred_check_branch
        %181 = sbr.rel (%p178) target = $region12
      $region11: #{tpu_custom_call.1} parent=5 // pred_region
        %s182 = ssub.s32 %s22, 1
        // Predicated region
        $region13: #{tpu_custom_call.1} parent=11 // pred_check
          %p183 = pneg %p69
        $region14: #{tpu_custom_call.1} parent=11 // pred_check_branch
          %185 = sbr.rel (%p183) target = $region16
        $region15: #{tpu_custom_call.1} parent=11 // pred_region
          %s187 = ssub.s32 3072, 3072
          %188 = vsyncadd [#allocation6], %s187
          %s189 = sshll.u32 [#allocation5], 4
          %s190 = int_to_ptr.vmem [resolvable:$true] %s189
          %195 = dma.hbm_to_vmem [thread:$0]  %s1, 3072, %s190, [#allocation6], 192, 192, 12
        $region16: #{tpu_custom_call.1} parent=11 // pred_fallthru
          _
        // Predicated region
        $region17: #{tpu_custom_call.1} parent=11 // pred_check
          %p196 = pneg %p90
        $region18: #{tpu_custom_call.1} parent=11 // pred_check_branch
          %198 = sbr.rel (%p196) target = $region20
        $region19: #{tpu_custom_call.1} parent=11 // pred_region
          _
        $region20: #{tpu_custom_call.1} parent=11 // pred_fallthru
          _
      $region12: #{tpu_custom_call.1} parent=5 // pred_fallthru
        _
      %p199 = scmp.lt.s32.totalorder %s22, 4
      // Predicated region
      $region21: #{tpu_custom_call.1} parent=5 // pred_check
        %p200 = pneg %p199
      $region22: #{tpu_custom_call.1} parent=5 // pred_check_branch
        %202 = sbr.rel (%p200) target = $region24
      $region23: #{tpu_custom_call.1} parent=5 // pred_region
        // Predicated region
        $region25: #{tpu_custom_call.1} parent=23 // pred_check
          %p203 = pneg %p42
        $region26: #{tpu_custom_call.1} parent=23 // pred_check_branch
          %205 = sbr.rel (%p203) target = $region28
        $region27: #{tpu_custom_call.1} parent=23 // pred_region
          %s206 = sand.u32 %s32, 1
          %s207 = scalar_lea.sflag [#allocation3], %s206
          %s208 = sand.u32 %s32, 1
          %s209 = smul.addr %s208, 128
          %s210 = scalar_lea.vmem [#allocation2], %s209
          %s211 = smul.u32 16, %s22
          %s213 = ssub.s32 2048, 2048
          %214 = vsyncadd %s207, %s213
          %s215 = smul.addr %s211, 128
          %s216 = scalar_lea.hbm %s0, %s215
          %s217 = sshll.u32 %s210, 4
          %s218 = int_to_ptr.vmem [resolvable:$true] %s217
          %223 = dma.hbm_to_vmem [thread:$0]  %s216, 2048, %s218, %s207, 128, 128, 8
        $region28: #{tpu_custom_call.1} parent=23 // pred_fallthru
          _
      $region24: #{tpu_custom_call.1} parent=5 // pred_fallthru
        _
      %p224 = scmp.le.s32.totalorder 1, %s22
      %p225 = scmp.lt.s32.totalorder %s22, 5
      %p226 = pnand %p224, %p225
      %p227 = pneg %p226
      // Predicated region
      $region29: #{tpu_custom_call.1} parent=5 // pred_check
        _
      $region30: #{tpu_custom_call.1} parent=5 // pred_check_branch
        %229 = sbr.rel (%p226) target = $region32
      $region31: #{tpu_custom_call.1} parent=5 // pred_region
        %s230 = ssub.s32 %s22, 1
        %s231 = sand.u32 %s35, 1
        %s232 = scalar_lea.sflag [#allocation3], %s231
        %s233 = sand.u32 %s35, 1
        %s234 = smul.addr %s233, 128
        %s235 = scalar_lea.vmem [#allocation2], %s234
        // Predicated region
        $region33: #{tpu_custom_call.1} parent=31 // pred_check
          %p236 = pneg %p48
        $region34: #{tpu_custom_call.1} parent=31 // pred_check_branch
          %238 = sbr.rel (%p236) target = $region36
        $region35: #{tpu_custom_call.1} parent=31 // pred_region
          %239 = dma.done %s232, 2048
        $region36: #{tpu_custom_call.1} parent=31 // pred_fallthru
          _
        // Predicated region
        $region37: #{tpu_custom_call.1} parent=31 // pred_check
          %p240 = pneg %p69
        $region38: #{tpu_custom_call.1} parent=31 // pred_check_branch
          %242 = sbr.rel (%p240) target = $region40
        $region39: #{tpu_custom_call.1} parent=31 // pred_region
          %243 = dma.done [#allocation6], 3072
        $region40: #{tpu_custom_call.1} parent=31 // pred_fallthru
          _
        %s244 = sand.u32 %s35, 1
        %s245 = scalar_lea.sflag [#allocation3], %s244
        %s246 = sand.u32 %s35, 1
        %s247 = smul.addr %s246, 128
        %s248 = scalar_lea.vmem [#allocation2], %s247
        %p249 = pneg %p48
        %p250 = pneg %p45
        %p251 = pneg %p69
        %p252 = pneg %p66
        %p253 = pneg %p90
        %p254 = pneg %p87
        %p255 = pneg %p116
        %p256 = pneg %p113
        %s257 = sand.u32 %s103, 1
        %s258 = scalar_lea.sflag [#allocation4], %s257
        %s259 = sand.u32 %s103, 1
        %s260 = smul.addr %s259, 64
        %s261 = scalar_lea.vmem [#allocation7], %s260
        %p262 = pneg %p142
        %p263 = pneg %p139
        %s264 = sand.u32 %s27, 1
        %s265 = scalar_lea.sflag [#allocation9], %s264
        %s266 = sand.u32 %s129, 1
        %s267 = smul.addr %s266, 64
        %s268 = scalar_lea.vmem [#allocation8], %s267
        %p269 = pneg %p168
        %p270 = pneg %p165
        %s271 = sand.u32 %s27, 1
        %s272 = scalar_lea.sflag [#allocation9], %s271
        %s273 = sand.u32 %s155, 1
        %s274 = smul.addr %s273, 64
        %s275 = scalar_lea.vmem [#allocation10], %s274
        %s276 = smul.u32 16, %s27
        %s277 = smul.u32 16, %s27
        %s278 = smul.u32 16, %s27
        %s279 = smul.u32 16, %s27
        %v281 = vld [vmem:[%s235] sm:$0xff]
        %v282 = vld [vmem:[%s235 + $0x8] sm:$0xff]
        %v283 = vld [vmem:[%s235 + $0x10] sm:$0xff]
        %v284 = vld [vmem:[%s235 + $0x18] sm:$0xff]
        %v285 = vld [vmem:[%s235 + $0x20] sm:$0xff]
        %v286 = vld [vmem:[%s235 + $0x28] sm:$0xff]
        %v287 = vld [vmem:[%s235 + $0x30] sm:$0xff]
        %v288 = vld [vmem:[%s235 + $0x38] sm:$0xff]
        %v289 = vld [vmem:[%s235 + $0x40] sm:$0xff]
        %v290 = vld [vmem:[%s235 + $0x48] sm:$0xff]
        %v291 = vld [vmem:[%s235 + $0x50] sm:$0xff]
        %v292 = vld [vmem:[%s235 + $0x58] sm:$0xff]
        %v293 = vld [vmem:[%s235 + $0x60] sm:$0xff]
        %v294 = vld [vmem:[%s235 + $0x68] sm:$0xff]
        %v295 = vld [vmem:[%s235 + $0x70] sm:$0xff]
        %v296 = vld [vmem:[%s235 + $0x78] sm:$0xff]
        %v297 = vpack.c.bf16 %v282, %v281
        %v298 = vpack.c.bf16 %v284, %v283
        %v299 = vpack.c.bf16 %v286, %v285
        %v300 = vpack.c.bf16 %v288, %v287
        %v301 = vpack.c.bf16 %v290, %v289
        %v302 = vpack.c.bf16 %v292, %v291
        %v303 = vpack.c.bf16 %v294, %v293
        %v304 = vpack.c.bf16 %v296, %v295
        %v305 = vld [vmem:[#allocation5] sm:$0xff]
        %v306 = vld [vmem:[#allocation5 + $0x8] sm:$0xf]
        %v307 = vld [vmem:[#allocation5 + $0xc] sm:$0xff]
        %v308 = vld [vmem:[#allocation5 + $0x14] sm:$0xf]
        %v309 = vld [vmem:[#allocation5 + $0x18] sm:$0xff]
        %v310 = vld [vmem:[#allocation5 + $0x20] sm:$0xf]
        %v311 = vld [vmem:[#allocation5 + $0x24] sm:$0xff]
        %v312 = vld [vmem:[#allocation5 + $0x2c] sm:$0xf]
        %v313 = vld [vmem:[#allocation5 + $0x30] sm:$0xff]
        %v314 = vld [vmem:[#allocation5 + $0x38] sm:$0xf]
        %v315 = vld [vmem:[#allocation5 + $0x3c] sm:$0xff]
        %v316 = vld [vmem:[#allocation5 + $0x44] sm:$0xf]
        %v317 = vld [vmem:[#allocation5 + $0x48] sm:$0xff]
        %v318 = vld [vmem:[#allocation5 + $0x50] sm:$0xf]
        %v319 = vld [vmem:[#allocation5 + $0x54] sm:$0xff]
        %v320 = vld [vmem:[#allocation5 + $0x5c] sm:$0xf]
        %v321 = vld [vmem:[#allocation5 + $0x60] sm:$0xff]
        %v322 = vld [vmem:[#allocation5 + $0x68] sm:$0xf]
        %v323 = vld [vmem:[#allocation5 + $0x6c] sm:$0xff]
        %v324 = vld [vmem:[#allocation5 + $0x74] sm:$0xf]
        %v325 = vld [vmem:[#allocation5 + $0x78] sm:$0xff]
        %v326 = vld [vmem:[#allocation5 + $0x80] sm:$0xf]
        %v327 = vld [vmem:[#allocation5 + $0x84] sm:$0xff]
        %v328 = vld [vmem:[#allocation5 + $0x8c] sm:$0xf]
        %v329 = vld [vmem:[#allocation5 + $0x90] sm:$0xff]
        %v330 = vld [vmem:[#allocation5 + $0x98] sm:$0xf]
        %v331 = vld [vmem:[#allocation5 + $0x9c] sm:$0xff]
        %v332 = vld [vmem:[#allocation5 + $0xa4] sm:$0xf]
        %v333 = vld [vmem:[#allocation5 + $0xa8] sm:$0xff]
        %v334 = vld [vmem:[#allocation5 + $0xb0] sm:$0xf]
        %v335 = vld [vmem:[#allocation5 + $0xb4] sm:$0xff]
        %v336 = vld [vmem:[#allocation5 + $0xbc] sm:$0xf]
        %v337 = vld [vmem:[%s2] sm:$0x7]
        %v339 = vlaneseq
        %v340 = vshrl.u32 %v339, 7
        %v341 = vsub.s32 0, %v340
        %v342 = vrot.slane %v337, %v341
        %v343 = vlaneseq
        %v344 = vshrl.u32 %v343, 7
        %v345 = vsub.s32 1, %v344
        %v346 = vrot.slane %v337, %v345
        %v347 = vlaneseq
        %v348 = vshrl.u32 %v347, 7
        %v349 = vsub.s32 2, %v348
        %v350 = vrot.slane %v337, %v349
        %v386 = vunpack.c.l.b16 %v305
        %v387 = vunpack.c.h.b16 %v305
        %v388 = vunpack.c.l.b16 %v306
        %v389 = vunpack.c.l.b16 %v307
        %v390 = vunpack.c.h.b16 %v307
        %v391 = vunpack.c.l.b16 %v308
        %v392 = vunpack.c.l.b16 %v309
        %v393 = vunpack.c.h.b16 %v309
        %v394 = vunpack.c.l.b16 %v310
        %v395 = vunpack.c.l.b16 %v311
        %v396 = vunpack.c.h.b16 %v311
        %v397 = vunpack.c.l.b16 %v312
        %v398 = vunpack.c.l.b16 %v313
        %v399 = vunpack.c.h.b16 %v313
        %v400 = vunpack.c.l.b16 %v314
        %v401 = vunpack.c.l.b16 %v315
        %v402 = vunpack.c.h.b16 %v315
        %v403 = vunpack.c.l.b16 %v316
        %v404 = vunpack.c.l.b16 %v317
        %v405 = vunpack.c.h.b16 %v317
        %v406 = vunpack.c.l.b16 %v318
        %v407 = vunpack.c.l.b16 %v319
        %v408 = vunpack.c.h.b16 %v319
        %v409 = vunpack.c.l.b16 %v320
        %v410 = vunpack.c.l.b16 %v321
        %v411 = vunpack.c.h.b16 %v321
        %v412 = vunpack.c.l.b16 %v322
        %v413 = vunpack.c.l.b16 %v323
        %v414 = vunpack.c.h.b16 %v323
        %v415 = vunpack.c.l.b16 %v324
        %v416 = vunpack.c.l.b16 %v325
        %v417 = vunpack.c.h.b16 %v325
        %v418 = vunpack.c.l.b16 %v326
        %v419 = vunpack.c.l.b16 %v327
        %v420 = vunpack.c.h.b16 %v327
        %v421 = vunpack.c.l.b16 %v328
        %v422 = vunpack.c.l.b16 %v329
        %v423 = vunpack.c.h.b16 %v329
        %v424 = vunpack.c.l.b16 %v330
        %v425 = vunpack.c.l.b16 %v331
        %v426 = vunpack.c.h.b16 %v331
        %v427 = vunpack.c.l.b16 %v332
        %v428 = vunpack.c.l.b16 %v333
        %v429 = vunpack.c.h.b16 %v333
        %v430 = vunpack.c.l.b16 %v334
        %v431 = vunpack.c.l.b16 %v335
        %v432 = vunpack.c.h.b16 %v335
        %v433 = vunpack.c.l.b16 %v336
        %v434 = vpack.c.b16 %v389, %v386
        %v435 = vpack.c.b16 %v390, %v387
        %v436 = vpack.c.b16 %v391, %v388
        %v437 = vpack.c.b16 %v395, %v392
        %v438 = vpack.c.b16 %v396, %v393
        %v439 = vpack.c.b16 %v397, %v394
        %v440 = vpack.c.b16 %v401, %v398
        %v441 = vpack.c.b16 %v402, %v399
        %v442 = vpack.c.b16 %v403, %v400
        %v443 = vpack.c.b16 %v407, %v404
        %v444 = vpack.c.b16 %v408, %v405
        %v445 = vpack.c.b16 %v409, %v406
        %v446 = vpack.c.b16 %v413, %v410
        %v447 = vpack.c.b16 %v414, %v411
        %v448 = vpack.c.b16 %v415, %v412
        %v449 = vpack.c.b16 %v419, %v416
        %v450 = vpack.c.b16 %v420, %v417
        %v451 = vpack.c.b16 %v421, %v418
        %v452 = vpack.c.b16 %v425, %v422
        %v453 = vpack.c.b16 %v426, %v423
        %v454 = vpack.c.b16 %v427, %v424
        %v455 = vpack.c.b16 %v431, %v428
        %v456 = vpack.c.b16 %v432, %v429
        %v457 = vpack.c.b16 %v433, %v430
        %482 = vmatprep.subr.bf16.mxu0 %v456
        %483 = vmatpush1.bf16.msra.mxu0 %v455
        %484 = vmatprep.subr.bf16.mxu0 %v453
        %485 = vmatpush1.bf16.msra.mxu0 %v452
        %486 = vmatprep.subr.bf16.mxu0 %v450
        %487 = vmatpush1.bf16.msra.mxu0 %v449
        %488 = vmatprep.subr.bf16.mxu0 %v447
        %489 = vmatpush1.bf16.msra.mxu0 %v446
        %490 = vmatprep.subr.bf16.mxu0 %v444
        %491 = vmatpush1.bf16.msra.mxu0 %v443
        %492 = vmatprep.subr.bf16.mxu0 %v441
        %493 = vmatpush1.bf16.msra.mxu0 %v440
        %494 = vmatprep.subr.bf16.mxu0 %v438
        %495 = vmatpush1.bf16.msra.mxu0 %v437
        %496 = vmatprep.subr.bf16.mxu0 %v435
        %497 = vmatpush1.bf16.msra.mxu0 %v434
        %498 = vmatprep.subr.bf16.mxu0 0
        %499 = vmatpush2.bf16.msra.mxu0 0
        %500 = vmatprep.subr.bf16.mxu0 0
        %501 = vmatpush2.bf16.msra.mxu0 0
        %502 = vmatprep.subr.bf16.mxu0 0
        %503 = vmatpush2.bf16.msra.mxu0 0
        %504 = vmatprep.subr.bf16.mxu0 0
        %505 = vmatpush2.bf16.msra.mxu0 0
        %506 = vmatprep.subr.bf16.mxu0 0
        %507 = vmatpush2.bf16.msra.mxu0 0
        %508 = vmatprep.subr.bf16.mxu0 0
        %509 = vmatpush2.bf16.msra.mxu0 0
        %510 = vmatprep.subr.bf16.mxu0 0
        %511 = vmatpush2.bf16.msra.mxu0 0
        %512 = vmatprep.subr.bf16.mxu0 0
        %513 = vmatpush2.bf16.msra.mxu0 0
        %514 = vmatprep.mubr.bf16.mxu0 0
        %515 = vmatmul.mubr.bf16.gmra.mxu0 %v297
        %v516 = vpop.f32.mrf.mxu0
        %v517 = vadd.f32 %v342, %v516
        %v518 = vpop.f32.mrf.mxu0
        %v519 = vadd.f32 %v346, %v518
        %v520 = vpop.f32.mrf.mxu0
        %v521 = vadd.f32 %v342, %v520
        %v522 = vpop.f32.mrf.mxu0
        %v523 = vadd.f32 %v346, %v522
        %524 = vmatprep.mubr.bf16.mxu0 0
        %525 = vmatmul.mubr.bf16.gmra.mxu0 %v298
        %v526 = vpop.f32.mrf.mxu0
        %v527 = vadd.f32 %v342, %v526
        %v528 = vpop.f32.mrf.mxu0
        %v529 = vadd.f32 %v346, %v528
        %v530 = vpop.f32.mrf.mxu0
        %v531 = vadd.f32 %v342, %v530
        %v532 = vpop.f32.mrf.mxu0
        %v533 = vadd.f32 %v346, %v532
        %534 = vmatprep.mubr.bf16.mxu0 0
        %535 = vmatmul.mubr.bf16.gmra.mxu0 %v299
        %v536 = vpop.f32.mrf.mxu0
        %v537 = vadd.f32 %v342, %v536
        %v538 = vpop.f32.mrf.mxu0
        %v539 = vadd.f32 %v346, %v538
        %v540 = vpop.f32.mrf.mxu0
        %v541 = vadd.f32 %v342, %v540
        %v542 = vpop.f32.mrf.mxu0
        %v543 = vadd.f32 %v346, %v542
        %544 = vmatprep.mubr.bf16.mxu0 0
        %545 = vmatmul.mubr.bf16.gmra.mxu0 %v300
        %v546 = vpop.f32.mrf.mxu0
        %v547 = vadd.f32 %v342, %v546
        %v548 = vpop.f32.mrf.mxu0
        %v549 = vadd.f32 %v346, %v548
        %v550 = vpop.f32.mrf.mxu0
        %v551 = vadd.f32 %v342, %v550
        %v552 = vpop.f32.mrf.mxu0
        %v553 = vadd.f32 %v346, %v552
        %554 = vmatprep.mubr.bf16.mxu0 0
        %555 = vmatmul.mubr.bf16.gmra.mxu0 %v301
        %v556 = vpop.f32.mrf.mxu0
        %v557 = vadd.f32 %v342, %v556
        %v558 = vpop.f32.mrf.mxu0
        %v559 = vadd.f32 %v346, %v558
        %v560 = vpop.f32.mrf.mxu0
        %v561 = vadd.f32 %v342, %v560
        %v562 = vpop.f32.mrf.mxu0
        %v563 = vadd.f32 %v346, %v562
        %564 = vmatprep.mubr.bf16.mxu0 0
        %565 = vmatmul.mubr.bf16.gmra.mxu0 %v302
        %v566 = vpop.f32.mrf.mxu0
        %v567 = vadd.f32 %v342, %v566
        %v568 = vpop.f32.mrf.mxu0
        %v569 = vadd.f32 %v346, %v568
        %v570 = vpop.f32.mrf.mxu0
        %v571 = vadd.f32 %v342, %v570
        %v572 = vpop.f32.mrf.mxu0
        %v573 = vadd.f32 %v346, %v572
        %574 = vmatprep.mubr.bf16.mxu0 0
        %575 = vmatmul.mubr.bf16.gmra.mxu0 %v303
        %v576 = vpop.f32.mrf.mxu0
        %v577 = vadd.f32 %v342, %v576
        %v578 = vpop.f32.mrf.mxu0
        %v579 = vadd.f32 %v346, %v578
        %v580 = vpop.f32.mrf.mxu0
        %v581 = vadd.f32 %v342, %v580
        %v582 = vpop.f32.mrf.mxu0
        %v583 = vadd.f32 %v346, %v582
        %584 = vmatprep.mubr.bf16.mxu0 0
        %585 = vmatmul.mubr.bf16.gmra.mxu0 %v304
        %v586 = vpop.f32.mrf.mxu0
        %v587 = vadd.f32 %v342, %v586
        %v588 = vpop.f32.mrf.mxu0
        %v589 = vadd.f32 %v346, %v588
        %v590 = vpop.f32.mrf.mxu0
        %v591 = vadd.f32 %v342, %v590
        %v592 = vpop.f32.mrf.mxu0
        %v593 = vadd.f32 %v346, %v592
        %594 = vdwg.mxu0
        %595 = vmatprep.subr.bf16.mxu0 0
        %596 = vmatpush1.bf16.msra.mxu0 %v457
        %597 = vmatprep.subr.bf16.mxu0 0
        %598 = vmatpush1.bf16.msra.mxu0 %v454
        %599 = vmatprep.subr.bf16.mxu0 0
        %600 = vmatpush1.bf16.msra.mxu0 %v451
        %601 = vmatprep.subr.bf16.mxu0 0
        %602 = vmatpush1.bf16.msra.mxu0 %v448
        %603 = vmatprep.subr.bf16.mxu0 0
        %604 = vmatpush1.bf16.msra.mxu0 %v445
        %605 = vmatprep.subr.bf16.mxu0 0
        %606 = vmatpush1.bf16.msra.mxu0 %v442
        %607 = vmatprep.subr.bf16.mxu0 0
        %608 = vmatpush1.bf16.msra.mxu0 %v439
        %609 = vmatprep.subr.bf16.mxu0 0
        %610 = vmatpush1.bf16.msra.mxu0 %v436
        %611 = vmatprep.subr.bf16.mxu0 0
        %612 = vmatpush2.bf16.msra.mxu0 0
        %613 = vmatprep.subr.bf16.mxu0 0
        %614 = vmatpush2.bf16.msra.mxu0 0
        %615 = vmatprep.subr.bf16.mxu0 0
        %616 = vmatpush2.bf16.msra.mxu0 0
        %617 = vmatprep.subr.bf16.mxu0 0
        %618 = vmatpush2.bf16.msra.mxu0 0
        %619 = vmatprep.subr.bf16.mxu0 0
        %620 = vmatpush2.bf16.msra.mxu0 0
        %621 = vmatprep.subr.bf16.mxu0 0
        %622 = vmatpush2.bf16.msra.mxu0 0
        %623 = vmatprep.subr.bf16.mxu0 0
        %624 = vmatpush2.bf16.msra.mxu0 0
        %625 = vmatprep.subr.bf16.mxu0 0
        %626 = vmatpush2.bf16.msra.mxu0 0
        %627 = vmatprep.mubr.bf16.mxu0 0
        %628 = vmatmul.mubr.bf16.gmra.mxu0 %v297
        %v629 = vpop.f32.mrf.mxu0
        %v630 = vadd.f32 %v350, %v629
        %v631 = vpop.f32.mrf.mxu0
        %v632 = vpop.f32.mrf.mxu0
        %v633 = vadd.f32 %v350, %v632
        %v634 = vpop.f32.mrf.mxu0
        %635 = vmatprep.mubr.bf16.mxu0 0
        %636 = vmatmul.mubr.bf16.gmra.mxu0 %v298
        %v637 = vpop.f32.mrf.mxu0
        %v638 = vadd.f32 %v350, %v637
        %v639 = vpop.f32.mrf.mxu0
        %v640 = vpop.f32.mrf.mxu0
        %v641 = vadd.f32 %v350, %v640
        %v642 = vpop.f32.mrf.mxu0
        %643 = vmatprep.mubr.bf16.mxu0 0
        %644 = vmatmul.mubr.bf16.gmra.mxu0 %v299
        %v645 = vpop.f32.mrf.mxu0
        %v646 = vadd.f32 %v350, %v645
        %v647 = vpop.f32.mrf.mxu0
        %v648 = vpop.f32.mrf.mxu0
        %v649 = vadd.f32 %v350, %v648
        %v650 = vpop.f32.mrf.mxu0
        %651 = vmatprep.mubr.bf16.mxu0 0
        %652 = vmatmul.mubr.bf16.gmra.mxu0 %v300
        %v653 = vpop.f32.mrf.mxu0
        %v654 = vadd.f32 %v350, %v653
        %v655 = vpop.f32.mrf.mxu0
        %v656 = vpop.f32.mrf.mxu0
        %v657 = vadd.f32 %v350, %v656
        %v658 = vpop.f32.mrf.mxu0
        %659 = vmatprep.mubr.bf16.mxu0 0
        %660 = vmatmul.mubr.bf16.gmra.mxu0 %v301
        %v661 = vpop.f32.mrf.mxu0
        %v662 = vadd.f32 %v350, %v661
        %v663 = vpop.f32.mrf.mxu0
        %v664 = vpop.f32.mrf.mxu0
        %v665 = vadd.f32 %v350, %v664
        %v666 = vpop.f32.mrf.mxu0
        %667 = vmatprep.mubr.bf16.mxu0 0
        %668 = vmatmul.mubr.bf16.gmra.mxu0 %v302
        %v669 = vpop.f32.mrf.mxu0
        %v670 = vadd.f32 %v350, %v669
        %v671 = vpop.f32.mrf.mxu0
        %v672 = vpop.f32.mrf.mxu0
        %v673 = vadd.f32 %v350, %v672
        %v674 = vpop.f32.mrf.mxu0
        %675 = vmatprep.mubr.bf16.mxu0 0
        %676 = vmatmul.mubr.bf16.gmra.mxu0 %v303
        %v677 = vpop.f32.mrf.mxu0
        %v678 = vadd.f32 %v350, %v677
        %v679 = vpop.f32.mrf.mxu0
        %v680 = vpop.f32.mrf.mxu0
        %v681 = vadd.f32 %v350, %v680
        %v682 = vpop.f32.mrf.mxu0
        %683 = vmatprep.mubr.bf16.mxu0 0
        %684 = vmatmul.mubr.bf16.gmra.mxu0 %v304
        %v685 = vpop.f32.mrf.mxu0
        %v686 = vadd.f32 %v350, %v685
        %v687 = vpop.f32.mrf.mxu0
        %v688 = vpop.f32.mrf.mxu0
        %v689 = vadd.f32 %v350, %v688
        %v690 = vpop.f32.mrf.mxu0
        %691 = vdwg.mxu0
        %v692 = vpack.c.bf16 %v521, %v517
        %v693 = vpack.c.bf16 %v523, %v519
        %v694 = vpack.c.bf16 %v633, %v630
        %v695 = vpack.c.bf16 %v531, %v527
        %v696 = vpack.c.bf16 %v533, %v529
        %v697 = vpack.c.bf16 %v641, %v638
        %v698 = vpack.c.bf16 %v541, %v537
        %v699 = vpack.c.bf16 %v543, %v539
        %v700 = vpack.c.bf16 %v649, %v646
        %v701 = vpack.c.bf16 %v551, %v547
        %v702 = vpack.c.bf16 %v553, %v549
        %v703 = vpack.c.bf16 %v657, %v654
        %v704 = vpack.c.bf16 %v561, %v557
        %v705 = vpack.c.bf16 %v563, %v559
        %v706 = vpack.c.bf16 %v665, %v662
        %v707 = vpack.c.bf16 %v571, %v567
        %v708 = vpack.c.bf16 %v573, %v569
        %v709 = vpack.c.bf16 %v673, %v670
        %v710 = vpack.c.bf16 %v581, %v577
        %v711 = vpack.c.bf16 %v583, %v579
        %v712 = vpack.c.bf16 %v681, %v678
        %v713 = vpack.c.bf16 %v591, %v587
        %v714 = vpack.c.bf16 %v593, %v589
        %v715 = vpack.c.bf16 %v689, %v686
        %v724 = vunpack.c.l.b16 %v692
        %v725 = vunpack.c.h.b16 %v692
        %v726 = vunpack.c.l.b16 %v695
        %v727 = vunpack.c.h.b16 %v695
        %v728 = vunpack.c.l.b16 %v698
        %v729 = vunpack.c.h.b16 %v698
        %v730 = vunpack.c.l.b16 %v701
        %v731 = vunpack.c.h.b16 %v701
        %v732 = vunpack.c.l.b16 %v704
        %v733 = vunpack.c.h.b16 %v704
        %v734 = vunpack.c.l.b16 %v707
        %v735 = vunpack.c.h.b16 %v707
        %v736 = vunpack.c.l.b16 %v710
        %v737 = vunpack.c.h.b16 %v710
        %v738 = vunpack.c.l.b16 %v713
        %v739 = vunpack.c.h.b16 %v713
        %v740 = vpack.c.b16 %v724, %v724
        %v741 = vpack.c.b16 %v725, %v725
        %v742 = vpack.c.b16 %v726, %v726
        %v743 = vpack.c.b16 %v727, %v727
        %v744 = vpack.c.b16 %v728, %v728
        %v745 = vpack.c.b16 %v729, %v729
        %v746 = vpack.c.b16 %v730, %v730
        %v747 = vpack.c.b16 %v731, %v731
        %v748 = vpack.c.b16 %v732, %v732
        %v749 = vpack.c.b16 %v733, %v733
        %v750 = vpack.c.b16 %v734, %v734
        %v751 = vpack.c.b16 %v735, %v735
        %v752 = vpack.c.b16 %v736, %v736
        %v753 = vpack.c.b16 %v737, %v737
        %v754 = vpack.c.b16 %v738, %v738
        %v755 = vpack.c.b16 %v739, %v739
        %772 = vst [vmem:[%s261] sm:$0xf] %v740
        %773 = vst [vmem:[%s261 + $0x4] sm:$0xf] %v741
        %774 = vst [vmem:[%s261 + $0x8] sm:$0xf] %v742
        %775 = vst [vmem:[%s261 + $0xc] sm:$0xf] %v743
        %776 = vst [vmem:[%s261 + $0x10] sm:$0xf] %v744
        %777 = vst [vmem:[%s261 + $0x14] sm:$0xf] %v745
        %778 = vst [vmem:[%s261 + $0x18] sm:$0xf] %v746
        %779 = vst [vmem:[%s261 + $0x1c] sm:$0xf] %v747
        %780 = vst [vmem:[%s261 + $0x20] sm:$0xf] %v748
        %781 = vst [vmem:[%s261 + $0x24] sm:$0xf] %v749
        %782 = vst [vmem:[%s261 + $0x28] sm:$0xf] %v750
        %783 = vst [vmem:[%s261 + $0x2c] sm:$0xf] %v751
        %784 = vst [vmem:[%s261 + $0x30] sm:$0xf] %v752
        %785 = vst [vmem:[%s261 + $0x34] sm:$0xf] %v753
        %786 = vst [vmem:[%s261 + $0x38] sm:$0xf] %v754
        %787 = vst [vmem:[%s261 + $0x3c] sm:$0xf] %v755
        %v796 = vunpack.c.l.b16 %v693
        %v797 = vunpack.c.h.b16 %v693
        %v798 = vunpack.c.l.b16 %v696
        %v799 = vunpack.c.h.b16 %v696
        %v800 = vunpack.c.l.b16 %v699
        %v801 = vunpack.c.h.b16 %v699
        %v802 = vunpack.c.l.b16 %v702
        %v803 = vunpack.c.h.b16 %v702
        %v804 = vunpack.c.l.b16 %v705
        %v805 = vunpack.c.h.b16 %v705
        %v806 = vunpack.c.l.b16 %v708
        %v807 = vunpack.c.h.b16 %v708
        %v808 = vunpack.c.l.b16 %v711
        %v809 = vunpack.c.h.b16 %v711
        %v810 = vunpack.c.l.b16 %v714
        %v811 = vunpack.c.h.b16 %v714
        %v812 = vpack.c.b16 %v796, %v796
        %v813 = vpack.c.b16 %v797, %v797
        %v814 = vpack.c.b16 %v798, %v798
        %v815 = vpack.c.b16 %v799, %v799
        %v816 = vpack.c.b16 %v800, %v800
        %v817 = vpack.c.b16 %v801, %v801
        %v818 = vpack.c.b16 %v802, %v802
        %v819 = vpack.c.b16 %v803, %v803
        %v820 = vpack.c.b16 %v804, %v804
        %v821 = vpack.c.b16 %v805, %v805
        %v822 = vpack.c.b16 %v806, %v806
        %v823 = vpack.c.b16 %v807, %v807
        %v824 = vpack.c.b16 %v808, %v808
        %v825 = vpack.c.b16 %v809, %v809
        %v826 = vpack.c.b16 %v810, %v810
        %v827 = vpack.c.b16 %v811, %v811
        %844 = vst [vmem:[%s268] sm:$0xf] %v812
        %845 = vst [vmem:[%s268 + $0x4] sm:$0xf] %v813
        %846 = vst [vmem:[%s268 + $0x8] sm:$0xf] %v814
        %847 = vst [vmem:[%s268 + $0xc] sm:$0xf] %v815
        %848 = vst [vmem:[%s268 + $0x10] sm:$0xf] %v816
        %849 = vst [vmem:[%s268 + $0x14] sm:$0xf] %v817
        %850 = vst [vmem:[%s268 + $0x18] sm:$0xf] %v818
        %851 = vst [vmem:[%s268 + $0x1c] sm:$0xf] %v819
        %852 = vst [vmem:[%s268 + $0x20] sm:$0xf] %v820
        %853 = vst [vmem:[%s268 + $0x24] sm:$0xf] %v821
        %854 = vst [vmem:[%s268 + $0x28] sm:$0xf] %v822
        %855 = vst [vmem:[%s268 + $0x2c] sm:$0xf] %v823
        %856 = vst [vmem:[%s268 + $0x30] sm:$0xf] %v824
        %857 = vst [vmem:[%s268 + $0x34] sm:$0xf] %v825
        %858 = vst [vmem:[%s268 + $0x38] sm:$0xf] %v826
        %859 = vst [vmem:[%s268 + $0x3c] sm:$0xf] %v827
        %v868 = vunpack.c.l.b16 %v694
        %v869 = vunpack.c.h.b16 %v694
        %v870 = vunpack.c.l.b16 %v697
        %v871 = vunpack.c.h.b16 %v697
        %v872 = vunpack.c.l.b16 %v700
        %v873 = vunpack.c.h.b16 %v700
        %v874 = vunpack.c.l.b16 %v703
        %v875 = vunpack.c.h.b16 %v703
        %v876 = vunpack.c.l.b16 %v706
        %v877 = vunpack.c.h.b16 %v706
        %v878 = vunpack.c.l.b16 %v709
        %v879 = vunpack.c.h.b16 %v709
        %v880 = vunpack.c.l.b16 %v712
        %v881 = vunpack.c.h.b16 %v712
        %v882 = vunpack.c.l.b16 %v715
        %v883 = vunpack.c.h.b16 %v715
        %v884 = vpack.c.b16 %v868, %v868
        %v885 = vpack.c.b16 %v869, %v869
        %v886 = vpack.c.b16 %v870, %v870
        %v887 = vpack.c.b16 %v871, %v871
        %v888 = vpack.c.b16 %v872, %v872
        %v889 = vpack.c.b16 %v873, %v873
        %v890 = vpack.c.b16 %v874, %v874
        %v891 = vpack.c.b16 %v875, %v875
        %v892 = vpack.c.b16 %v876, %v876
        %v893 = vpack.c.b16 %v877, %v877
        %v894 = vpack.c.b16 %v878, %v878
        %v895 = vpack.c.b16 %v879, %v879
        %v896 = vpack.c.b16 %v880, %v880
        %v897 = vpack.c.b16 %v881, %v881
        %v898 = vpack.c.b16 %v882, %v882
        %v899 = vpack.c.b16 %v883, %v883
        %916 = vst [vmem:[%s275] sm:$0xf] %v884
        %917 = vst [vmem:[%s275 + $0x4] sm:$0xf] %v885
        %918 = vst [vmem:[%s275 + $0x8] sm:$0xf] %v886
        %919 = vst [vmem:[%s275 + $0xc] sm:$0xf] %v887
        %920 = vst [vmem:[%s275 + $0x10] sm:$0xf] %v888
        %921 = vst [vmem:[%s275 + $0x14] sm:$0xf] %v889
        %922 = vst [vmem:[%s275 + $0x18] sm:$0xf] %v890
        %923 = vst [vmem:[%s275 + $0x1c] sm:$0xf] %v891
        %924 = vst [vmem:[%s275 + $0x20] sm:$0xf] %v892
        %925 = vst [vmem:[%s275 + $0x24] sm:$0xf] %v893
        %926 = vst [vmem:[%s275 + $0x28] sm:$0xf] %v894
        %927 = vst [vmem:[%s275 + $0x2c] sm:$0xf] %v895
        %928 = vst [vmem:[%s275 + $0x30] sm:$0xf] %v896
        %929 = vst [vmem:[%s275 + $0x34] sm:$0xf] %v897
        %930 = vst [vmem:[%s275 + $0x38] sm:$0xf] %v898
        %931 = vst [vmem:[%s275 + $0x3c] sm:$0xf] %v899
        %s932 = sand.u32 %s103, 1
        %s933 = scalar_lea.sflag [#allocation4], %s932
        %s934 = sand.u32 %s103, 1
        %s935 = smul.addr %s934, 64
        %s936 = scalar_lea.vmem [#allocation7], %s935
        %s937 = sand.u32 %s27, 1
        %s938 = scalar_lea.sflag [#allocation9], %s937
        %s939 = sand.u32 %s129, 1
        %s940 = smul.addr %s939, 64
        %s941 = scalar_lea.vmem [#allocation8], %s940
        %s942 = sand.u32 %s27, 1
        %s943 = scalar_lea.sflag [#allocation9], %s942
        %s944 = sand.u32 %s155, 1
        %s945 = smul.addr %s944, 64
        %s946 = scalar_lea.vmem [#allocation10], %s945
        // Predicated region
        $region41: #{tpu_custom_call.1} parent=31 // pred_check
          %p947 = pneg %p113
        $region42: #{tpu_custom_call.1} parent=31 // pred_check_branch
          %949 = sbr.rel (%p947) target = $region44
        $region43: #{tpu_custom_call.1} parent=31 // pred_region
          %s950 = smul.u32 16, %s27
          %s952 = ssub.s32 1024, 1024
          %953 = vsyncadd %s933, %s952
          %s954 = smul.addr %s950, 64
          %s955 = scalar_lea.hbm %s3, %s954
          %s956 = sshll.u32 %s936, 4
          %s957 = int_to_ptr.vmem [resolvable:$true] %s956
          %962 = dma.vmem_to_hbm [thread:$0]  %s957, 1024, %s955, %s933, 64, 64, 4
        $region44: #{tpu_custom_call.1} parent=31 // pred_fallthru
          _
        // Predicated region
        $region45: #{tpu_custom_call.1} parent=31 // pred_check
          %p963 = pneg %p139
        $region46: #{tpu_custom_call.1} parent=31 // pred_check_branch
          %965 = sbr.rel (%p963) target = $region48
        $region47: #{tpu_custom_call.1} parent=31 // pred_region
          %s966 = smul.u32 16, %s27
          %s968 = ssub.s32 1024, 1024
          %969 = vsyncadd %s938, %s968
          %s970 = smul.addr %s966, 64
          %s971 = scalar_lea.hbm %s4, %s970
          %s972 = sshll.u32 %s941, 4
          %s973 = int_to_ptr.vmem [resolvable:$true] %s972
          %978 = dma.vmem_to_hbm [thread:$0]  %s973, 1024, %s971, %s938, 64, 64, 4
        $region48: #{tpu_custom_call.1} parent=31 // pred_fallthru
          _
        // Predicated region
        $region49: #{tpu_custom_call.1} parent=31 // pred_check
          %p979 = pneg %p165
        $region50: #{tpu_custom_call.1} parent=31 // pred_check_branch
          %981 = sbr.rel (%p979) target = $region52
        $region51: #{tpu_custom_call.1} parent=31 // pred_region
          %s982 = smul.u32 16, %s27
          %s984 = ssub.s32 1024, 1024
          %985 = vsyncadd %s943, %s984
          %s986 = smul.addr %s982, 64
          %s987 = scalar_lea.hbm %s5, %s986
          %s988 = sshll.u32 %s946, 4
          %s989 = int_to_ptr.vmem [resolvable:$true] %s988
          %994 = dma.vmem_to_hbm [thread:$0]  %s989, 1024, %s987, %s943, 64, 64, 4
        $region52: #{tpu_custom_call.1} parent=31 // pred_fallthru
          _
      $region32: #{tpu_custom_call.1} parent=5 // pred_fallthru
        _
      %p995 = scmp.le.s32.totalorder 2, %s22
      // Predicated region
      $region53: #{tpu_custom_call.1} parent=5 // pred_check
        %p996 = pneg %p995
      $region54: #{tpu_custom_call.1} parent=5 // pred_check_branch
        %998 = sbr.rel (%p996) target = $region56
      $region55: #{tpu_custom_call.1} parent=5 // pred_region
        %s999 = ssub.s32 %s22, 2
        // Predicated region
        $region57: #{tpu_custom_call.1} parent=55 // pred_check
          %p1000 = pneg %p119
        $region58: #{tpu_custom_call.1} parent=55 // pred_check_branch
          %1002 = sbr.rel (%p1000) target = $region60
        $region59: #{tpu_custom_call.1} parent=55 // pred_region
          %s1003 = sand.u32 %s104, 1
          %s1004 = scalar_lea.sflag [#allocation4], %s1003
          %s1005 = sand.u32 %s104, 1
          %s1006 = smul.addr %s1005, 64
          %s1007 = scalar_lea.vmem [#allocation7], %s1006
          %1008 = dma.done %s1004, 1024
        $region60: #{tpu_custom_call.1} parent=55 // pred_fallthru
          _
        // Predicated region
        $region61: #{tpu_custom_call.1} parent=55 // pred_check
          %p1009 = pneg %p145
        $region62: #{tpu_custom_call.1} parent=55 // pred_check_branch
          %1011 = sbr.rel (%p1009) target = $region64
        $region63: #{tpu_custom_call.1} parent=55 // pred_region
          %s1012 = sand.u32 %s28, 1
          %s1013 = scalar_lea.sflag [#allocation9], %s1012
          %s1014 = sand.u32 %s130, 1
          %s1015 = smul.addr %s1014, 64
          %s1016 = scalar_lea.vmem [#allocation8], %s1015
          %1017 = dma.done %s1013, 1024
        $region64: #{tpu_custom_call.1} parent=55 // pred_fallthru
          _
        // Predicated region
        $region65: #{tpu_custom_call.1} parent=55 // pred_check
          %p1018 = pneg %p171
        $region66: #{tpu_custom_call.1} parent=55 // pred_check_branch
          %1020 = sbr.rel (%p1018) target = $region68
        $region67: #{tpu_custom_call.1} parent=55 // pred_region
          %s1021 = sand.u32 %s28, 1
          %s1022 = scalar_lea.sflag [#allocation9], %s1021
          %s1023 = sand.u32 %s156, 1
          %s1024 = smul.addr %s1023, 64
          %s1025 = scalar_lea.vmem [#allocation10], %s1024
          %1026 = dma.done %s1022, 1024
        $region68: #{tpu_custom_call.1} parent=55 // pred_fallthru
          _
      $region56: #{tpu_custom_call.1} parent=5 // pred_fallthru
        _
    $region6: #{tpu_custom_call.1} parent=1 // loop_footer
      %s26 = sadd.s32 1, %s22
    $region7: #{tpu_custom_call.1} parent=1 // loop_footer_branch
      %21 = sbr.rel target = $region3
    $region8: #{tpu_custom_call.1} parent=1 // loop_exit
      _
    %1027 = vsyncpa [#allocation3], 1
    %s1028 = scalar_lea.sflag [#allocation3], 1
    %1029 = vsyncpa %s1028, 1
    %1030 = vsyncpa [#allocation6], 1
    %1031 = vsyncpa [#allocation4], 1
    %s1032 = scalar_lea.sflag [#allocation4], 1
    %1033 = vsyncpa %s1032, 1
    %1034 = vsyncpa [#allocation9], 1
    %s1035 = scalar_lea.sflag [#allocation9], 1
    %1036 = vsyncpa %s1035, 1

</llo_original>
